<compile_context>
chip_gen: v7x
topology: tpu7x:2x2x1
jax: 0.10.0
libtpu: 0.0.40
codegen_flags: <defaults>
</compile_context>

<pallas_src>
import numpy as np
import jax
import jax.numpy as jnp
from jax.experimental import pallas as pl
from jax.experimental.pallas import tpu as pltpu

# ----------------------------- config ---------------------------------------
IMG = 32
PATCH = 8
IN_CH = 3
GRID = IMG // PATCH              # 4
NUM_PATCHES = GRID * GRID        # 16
SEQ = NUM_PATCHES + 1            # 17 (cls token + patches)
PDIM = IN_CH * PATCH * PATCH     # 192
DIM = 64
HEADS = 4
HEAD_DIM = DIM // HEADS          # 16
DEPTH = 2
MLP_HIDDEN = 4 * DIM
NUM_CLASSES = 18
HEAD_PAD = 128                   # lane-dense classifier output (sliced to 18 outside)
INIT_VALUES = 1e-5               # layer-scale init
EPS = 1e-6                       # LayerNorm eps (timm beit)
BATCH = 2

# Batch elements folded into the kernel's row dimension per grid step.
# BATCH_TILE = BATCH -> single grid step (best on single-TC v5e/v6e).
# On v7x with larger B, set BATCH_TILE = B // 2 so grid=(2,) "parallel" puts
# one chunk on each TensorCore.
BATCH_TILE = BATCH
NEG_MASK = -1e30                 # additive cross-batch attention mask


# ----------------------------- relative position index ----------------------
def gen_relative_position_index(wh, ww):
    """Mirrors timm's gen_relative_position_index (incl. cls-token rows)."""
    num_rel = (2 * wh - 1) * (2 * ww - 1) + 3
    coords = np.stack(np.meshgrid(np.arange(wh), np.arange(ww), indexing="ij"))
    coords = coords.reshape(2, -1)                                  # 2, P
    rel = coords[:, :, None] - coords[:, None, :]                   # 2, P, P
    rel = rel.transpose(1, 2, 0).astype(np.int64)                   # P, P, 2
    rel[:, :, 0] += wh - 1
    rel[:, :, 1] += ww - 1
    rel[:, :, 0] *= 2 * ww - 1
    idx = np.zeros((wh * ww + 1, wh * ww + 1), dtype=np.int64)
    idx[1:, 1:] = rel.sum(-1)
    idx[0, :] = num_rel - 3
    idx[:, 0] = num_rel - 2
    idx[0, 0] = num_rel - 1
    return idx, num_rel


REL_IDX, NUM_REL = gen_relative_position_index(GRID, GRID)          # (SEQ, SEQ)
REL_IDX_FLAT = REL_IDX.reshape(-1)


# ----------------------------- fused kernel ---------------------------------
def _beit_kernel(
    xp_ref, patch_w_ref, row_bias_ref, vec_ref,
    qkv_w_ref, qkv_b_ref, proj_w_ref,
    fc1_w_ref, fc1_b_ref, fc2_w_ref,
    bias3_ref, qmask_ref, rep_ref, rep_t_ref,
    pool_ref, fcn_ref, head_w_ref, head_b_ref,
    out_ref):
    """Entire BEiT forward for one batch chunk; everything stays in VMEM.

    Rows = BATCH_TILE*SEQ (batch folded into rows).  Attention stacks all heads
    on the sublane axis: one QK^T, one softmax, one PV, one fold, one proj per
    block for the whole chunk.
    """
    f32 = jnp.float32
    bf16 = jnp.bfloat16

    def layernorm(x, g, b):
        mu = jnp.mean(x, axis=-1, keepdims=True)
        var = jnp.mean(jnp.square(x - mu), axis=-1, keepdims=True)
        return (x - mu) * jax.lax.rsqrt(var + EPS) * g + b

    def gelu_exact(x):
        # Exact-erf GELU; erf via Abramowitz&Stegun 7.1.26 (|err| < 1.5e-7),
        # divide moved to the EUP via pl.reciprocal(approx=True).
        # TODO(synk): swap to a native erf lowering if/when Mosaic exposes one.
        z = x * 0.7071067811865476
        az = jnp.abs(z)
        t = pl.reciprocal(1.0 + 0.3275911 * az, approx=True)
        poly = t * (0.254829592 + t * (-0.284496736 + t * (1.421413741
                 + t * (-1.453152027 + t * 1.061405429))))
        erf_abs = 1.0 - poly * jnp.exp(-az * az)
        erf = jnp.where(z >= 0.0, erf_abs, -erf_abs)
        return 0.5 * x * (1.0 + erf)

    qmask = qmask_ref[...]        # (H*ROWS, DIM) f32, head column mask
    rep = rep_ref[...]            # (H*ROWS, ROWS) bf16, sublane replicate selector
    rep_t = rep_t_ref[...]        # (ROWS, H*ROWS) bf16, head-fold selector
    fcn = fcn_ref[...]            # (2, DIM) f32

    # ---- patch embed; per-row bias already carries the cls token ----
    h = jnp.dot(xp_ref[0], patch_w_ref[...],
                preferred_element_type=f32) + row_bias_ref[...]      # (ROWS, DIM)

    # ---- transformer blocks (statically unrolled; DEPTH is small) ----
    for d in range(DEPTH):
        vec = vec_ref[d]          # (6, DIM): n1_g, n1_b, proj_b*g1, n2_g, n2_b, fc2_b*g2

        # attention: LN1 -> fused QKV -> head-stacked attn -> proj (gamma1 folded)
        xn = layernorm(h, vec[0:1], vec[1:2])
        qkv = jnp.dot(xn.astype(bf16), qkv_w_ref[d],
                      preferred_element_type=f32) + qkv_b_ref[d]      # (ROWS, 3*DIM)
        q = qkv[:, :DIM].astype(bf16)            # scale already folded into W_q
        k = qkv[:, DIM:2 * DIM].astype(bf16)
        v = qkv[:, 2 * DIM:].astype(bf16)

        # stack heads on sublanes: Q_stack = (Rep @ Q) * head-mask
        q_s = (jnp.dot(rep, q, preferred_element_type=f32) * qmask).astype(bf16)
        s = jax.lax.dot_general(q_s, k, (((1,), (1,)), ((), ())),
                                preferred_element_type=f32)           # (H*ROWS, ROWS)
        s = s + bias3_ref[d]      # rel-pos bias + (-1e30) cross-batch mask
        m = jnp.max(s, axis=-1, keepdims=True)
        e = jnp.exp(s - m)
        p = e * pl.reciprocal(jnp.sum(e, axis=-1, keepdims=True), approx=True)
        o = jnp.dot(p.astype(bf16), v, preferred_element_type=f32)    # (H*ROWS, DIM)
        o = (o * qmask).astype(bf16)
        o = jnp.dot(rep_t, o, preferred_element_type=f32)             # fold heads -> (ROWS, DIM)
        attn = jnp.dot(o.astype(bf16), proj_w_ref[d],
                       preferred_element_type=f32) + vec[2:3]         # gamma1 folded
        h = h + attn

        # MLP: LN2 -> fc1 -> GELU -> fc2 (gamma2 folded)
        xn2 = layernorm(h, vec[3:4], vec[4:5])
        m1 = jnp.dot(xn2.astype(bf16), fc1_w_ref[d],
                     preferred_element_type=f32) + fc1_b_ref[d]
        m1 = gelu_exact(m1)
        m2 = jnp.dot(m1.astype(bf16), fc2_w_ref[d],
                     preferred_element_type=f32) + vec[5:6]           # gamma2 folded
        h = h + m2

    # ---- head: avg-pool over patch tokens (pool matmul), fc_norm, linear ----
    pooled = jnp.dot(pool_ref[...], h, preferred_element_type=f32)    # (CHUNK, DIM)
    pooled = layernorm(pooled, fcn[0:1], fcn[1:2])
    logits = jnp.dot(pooled, head_w_ref[...],
                     preferred_element_type=f32) + head_b_ref[...]    # (CHUNK, HEAD_PAD)
    out_ref[...] = logits.reshape(out_ref.shape)


# ----------------------------- parameters -----------------------------------
def init_params(key):
    keys = iter(jax.random.split(key, 64))

    def nrm(shape, std=0.02):
        return std * jax.random.normal(next(keys), shape, jnp.float32)

    q_bias = nrm((DEPTH, 1, DIM))
    v_bias = nrm((DEPTH, 1, DIM))
    qkv_b = jnp.concatenate(
        [q_bias, jnp.zeros((DEPTH, 1, DIM), jnp.float32), v_bias], axis=-1)

    return {
        "patch_w": nrm((PDIM, DIM)),                  # Conv2d(3,D,P,P) as matmul
        "patch_b": nrm((1, DIM)),
        "cls_token": nrm((1, DIM)),
        "n1_g": jnp.ones((DEPTH, 1, DIM), jnp.float32),
        "n1_b": jnp.zeros((DEPTH, 1, DIM), jnp.float32),
        "qkv_w": nrm((DEPTH, DIM, 3 * DIM)),
        "qkv_b": qkv_b,                               # zero k-bias, as in timm Beit
        "proj_w": nrm((DEPTH, DIM, DIM)),
        "proj_b": nrm((DEPTH, 1, DIM)),
        "gamma1": INIT_VALUES * jnp.ones((DEPTH, 1, DIM), jnp.float32),
        "n2_g": jnp.ones((DEPTH, 1, DIM), jnp.float32),
        "n2_b": jnp.zeros((DEPTH, 1, DIM), jnp.float32),
        "fc1_w": nrm((DEPTH, DIM, MLP_HIDDEN)),
        "fc1_b": nrm((DEPTH, 1, MLP_HIDDEN)),
        "fc2_w": nrm((DEPTH, MLP_HIDDEN, DIM)),
        "fc2_b": nrm((DEPTH, 1, DIM)),
        "gamma2": INIT_VALUES * jnp.ones((DEPTH, 1, DIM), jnp.float32),
        "rel_table": nrm((DEPTH, NUM_REL, HEADS)),
        "fc_norm_g": jnp.ones((1, DIM), jnp.float32),
        "fc_norm_b": jnp.zeros((1, DIM), jnp.float32),
        "head_w": nrm((DIM, NUM_CLASSES)),
        "head_b": jnp.zeros((1, NUM_CLASSES), jnp.float32),
    }


# ----------------------------- forward --------------------------------------
def beit_forward(params, x):
    """BEiT forward: all compute in a single fused Pallas kernel.

    Batch is folded into the kernel's row dimension (BATCH_TILE elems per grid
    step); grid=(B/BATCH_TILE,) marked "parallel" for megacore sharding.
    """
    B = x.shape[0]
    assert B % BATCH_TILE == 0
    CHUNK = BATCH_TILE
    ROWS = CHUNK * SEQ
    NSTEP = B // CHUNK
    bf16 = jnp.bfloat16
    f32 = jnp.float32

    # Patch extraction: stride-PATCH conv == reshape/transpose + matmul, with the
    # inner (c, dy, dx) order matching Conv2d weight flattening.  Per-element
    # row 0 is left zero (cls slot); streamed in bf16.
    xp = x.reshape(B, IN_CH, GRID, PATCH, GRID, PATCH)
    xp = xp.transpose(0, 2, 4, 1, 3, 5).reshape(B, NUM_PATCHES, PDIM)
    xp = jnp.pad(xp, ((0, 0), (1, 0), (0, 0)))                    # (B, SEQ, PDIM)
    xp = xp.reshape(NSTEP, ROWS, PDIM).astype(bf16)

    # Per-row additive bias after patch embed: patch_b everywhere, cls_token on
    # cls rows (their xp rows are zero, so this realizes the cls prepend).
    is_cls = (np.arange(ROWS) % SEQ) == 0
    row_bias = jnp.where(jnp.asarray(is_cls)[:, None],
                         params["cls_token"], params["patch_b"])   # (ROWS, DIM)

    # Fold the attention scale (HEAD_DIM**-0.5 == 0.25, power of two -> lossless)
    # into the Q third of the fused QKV weight/bias.
    scale = HEAD_DIM ** -0.5
    q_scale = jnp.concatenate([jnp.full((DIM,), scale, f32),
                               jnp.ones((2 * DIM,), f32)])
    qkv_w = params["qkv_w"] * q_scale
    qkv_b = params["qkv_b"] * q_scale

    # Fold layer-scale gammas into proj / fc2 (bias fold stays f32).
    proj_w = params["proj_w"] * params["gamma1"]
    proj_b = params["proj_b"] * params["gamma1"]
    fc2_w = params["fc2_w"] * params["gamma2"]
    fc2_b = params["fc2_b"] * params["gamma2"]

    # Per-depth 64-lane vectors consolidated into one (DEPTH, 6, DIM) array.
    vec64 = jnp.concatenate(
        [params["n1_g"], params["n1_b"], proj_b,
         params["n2_g"], params["n2_b"], fc2_b], axis=1)

    # Relative-position bias: static gather on the tiny tables, laid out as
    # (DEPTH, HEADS*ROWS, ROWS) with -1e30 in cross-batch blocks (additive mask).
    rel_idx = jnp.asarray(REL_IDX_FLAT, jnp.int32)
    rel = jnp.take(params["rel_table"], rel_idx, axis=1)           # (DEPTH, SEQ*SEQ, H)
    rel = rel.reshape(DEPTH, SEQ, SEQ, HEADS).transpose(0, 3, 1, 2)  # (DEPTH, H, SEQ, SEQ)
    same_b = np.eye(CHUNK, dtype=bool)[None, None, :, None, :, None]
    bias3 = jnp.where(jnp.asarray(same_b),
                      rel[:, :, None, :, None, :],
                      jnp.float32(NEG_MASK))
    bias3 = bias3.reshape(DEPTH, HEADS * ROWS, ROWS)

    # Head-stacking constants: head column mask, sublane replicate / fold selectors.
    col_head = np.arange(DIM) // HEAD_DIM
    row_head = np.repeat(np.arange(HEADS), ROWS)
    qmask = jnp.asarray((row_head[:, None] == col_head[None, :]).astype(np.float32))
    rep_np = np.zeros((HEADS * ROWS, ROWS), np.float32)
    rep_np[np.arange(HEADS * ROWS), np.arange(HEADS * ROWS) % ROWS] = 1.0
    rep = jnp.asarray(rep_np, bf16)
    rep_t = jnp.asarray(rep_np.T, bf16)

    # Avg-pool over patch tokens per element, as one tiny f32 matmul.
    pool_np = np.zeros((CHUNK, ROWS), np.float32)
    for b in range(CHUNK):
        pool_np[b, b * SEQ + 1:(b + 1) * SEQ] = 1.0 / NUM_PATCHES
    pool = jnp.asarray(pool_np)

    fcn = jnp.concatenate([params["fc_norm_g"], params["fc_norm_b"]], axis=0)

    # Lane-dense classifier output: pad 18 -> 128 lanes; slice after the call.
    head_w = jnp.pad(params["head_w"], ((0, 0), (0, HEAD_PAD - NUM_CLASSES)))
    head_b = jnp.pad(params["head_b"], ((0, 0), (0, HEAD_PAD - NUM_CLASSES)))

    # bf16 weights feed the MXU (f32 accumulate); biases/LN/softmax/GELU/head in f32.
    inputs = [
        xp,
        params["patch_w"].astype(bf16), row_bias, vec64,
        qkv_w.astype(bf16), qkv_b, proj_w.astype(bf16),
        params["fc1_w"].astype(bf16), params["fc1_b"], fc2_w.astype(bf16),
        bias3, qmask, rep, rep_t, pool, fcn, head_w, head_b,
    ]

    def full_spec(a):
        nd = a.ndim
        return pl.BlockSpec(a.shape, lambda g, _nd=nd: (0,) * _nd)

    in_specs = [pl.BlockSpec((1, ROWS, PDIM), lambda g: (g, 0, 0))]
    in_specs += [full_spec(a) for a in inputs[1:]]

    logits = pl.pallas_call(
        _beit_kernel,
        out_shape=jax.ShapeDtypeStruct((NSTEP, CHUNK, HEAD_PAD), jnp.float32),
        grid=(NSTEP,),
        in_specs=in_specs,
        out_specs=pl.BlockSpec((1, CHUNK, HEAD_PAD), lambda g: (g, 0, 0)),
        compiler_params=pltpu.CompilerParams(
            dimension_semantics=("parallel",)),   # shards chunks over TCs if NSTEP > 1
    )(*inputs)
    return logits.reshape(B, HEAD_PAD)[:, :NUM_CLASSES]


# ----------------------------- main ------------------------------------------
if __name__ == "__main__":
    root = jax.random.PRNGKey(0)
    k_params, k_x = jax.random.split(root)
    params = init_params(k_params)
    x = jax.random.normal(k_x, (BATCH, IN_CH, IMG, IMG), jnp.float32)  # NCHW

    fwd = jax.jit(beit_forward)
    logits = jax.block_until_ready(fwd(params, x))
    assert logits.shape == (BATCH, NUM_CLASSES)
    assert jnp.all(jnp.isfinite(logits))
    print("KERNEL_OK")
</pallas_src>

<mosaic_0001>
module attributes {stable_mosaic.version = 11 : i64} {
  func.func @_beit_kernel(%arg0: i32, %arg1: memref<1x34x192xbf16, #tpu.memory_space<vmem>>, %arg2: memref<192x64xbf16, #tpu.memory_space<vmem>>, %arg3: memref<34x64xf32, #tpu.memory_space<vmem>>, %arg4: memref<2x6x64xf32, #tpu.memory_space<vmem>>, %arg5: memref<2x64x192xbf16, #tpu.memory_space<vmem>>, %arg6: memref<2x1x192xf32, #tpu.memory_space<vmem>>, %arg7: memref<2x64x64xbf16, #tpu.memory_space<vmem>>, %arg8: memref<2x64x256xbf16, #tpu.memory_space<vmem>>, %arg9: memref<2x1x256xf32, #tpu.memory_space<vmem>>, %arg10: memref<2x256x64xbf16, #tpu.memory_space<vmem>>, %arg11: memref<2x136x34xf32, #tpu.memory_space<vmem>>, %arg12: memref<136x64xf32, #tpu.memory_space<vmem>>, %arg13: memref<136x34xbf16, #tpu.memory_space<vmem>>, %arg14: memref<34x136xbf16, #tpu.memory_space<vmem>>, %arg15: memref<2x34xf32, #tpu.memory_space<vmem>>, %arg16: memref<2x64xf32, #tpu.memory_space<vmem>>, %arg17: memref<64x128xf32, #tpu.memory_space<vmem>>, %arg18: memref<1x128xf32, #tpu.memory_space<vmem>>, %arg19: memref<1x2x128xf32, #tpu.memory_space<vmem>>) attributes {dimension_semantics = [#tpu.dimension_semantics<parallel>], iteration_bounds = array<i64: 1>, scalar_prefetch = 0 : i64, scratch_operands = 0 : i64, tpu.core_type = #tpu.core_type<tc>, window_params = [{transform_indices = @transform_0, window_bounds = array<i64: 1, 34, 192>}, {pipeline_mode = #tpu.pipeline_mode<synchronous>, transform_indices = @transform_1, window_bounds = array<i64: 192, 64>}, {pipeline_mode = #tpu.pipeline_mode<synchronous>, transform_indices = @transform_2, window_bounds = array<i64: 34, 64>}, {pipeline_mode = #tpu.pipeline_mode<synchronous>, transform_indices = @transform_3, window_bounds = array<i64: 2, 6, 64>}, {pipeline_mode = #tpu.pipeline_mode<synchronous>, transform_indices = @transform_4, window_bounds = array<i64: 2, 64, 192>}, {pipeline_mode = #tpu.pipeline_mode<synchronous>, transform_indices = @transform_5, window_bounds = array<i64: 2, 1, 192>}, {pipeline_mode = #tpu.pipeline_mode<synchronous>, transform_indices = @transform_6, window_bounds = array<i64: 2, 64, 64>}, {pipeline_mode = #tpu.pipeline_mode<synchronous>, transform_indices = @transform_7, window_bounds = array<i64: 2, 64, 256>}, {pipeline_mode = #tpu.pipeline_mode<synchronous>, transform_indices = @transform_8, window_bounds = array<i64: 2, 1, 256>}, {pipeline_mode = #tpu.pipeline_mode<synchronous>, transform_indices = @transform_9, window_bounds = array<i64: 2, 256, 64>}, {pipeline_mode = #tpu.pipeline_mode<synchronous>, transform_indices = @transform_10, window_bounds = array<i64: 2, 136, 34>}, {pipeline_mode = #tpu.pipeline_mode<synchronous>, transform_indices = @transform_11, window_bounds = array<i64: 136, 64>}, {pipeline_mode = #tpu.pipeline_mode<synchronous>, transform_indices = @transform_12, window_bounds = array<i64: 136, 34>}, {pipeline_mode = #tpu.pipeline_mode<synchronous>, transform_indices = @transform_13, window_bounds = array<i64: 34, 136>}, {pipeline_mode = #tpu.pipeline_mode<synchronous>, transform_indices = @transform_14, window_bounds = array<i64: 2, 34>}, {pipeline_mode = #tpu.pipeline_mode<synchronous>, transform_indices = @transform_15, window_bounds = array<i64: 2, 64>}, {pipeline_mode = #tpu.pipeline_mode<synchronous>, transform_indices = @transform_16, window_bounds = array<i64: 64, 128>}, {pipeline_mode = #tpu.pipeline_mode<synchronous>, transform_indices = @transform_17, window_bounds = array<i64: 1, 128>}, {transform_indices = @transform_18, window_bounds = array<i64: 1, 2, 128>}]} {
    %c0 = arith.constant 0 : index
    %c0_0 = arith.constant 0 : index
    %0 = vector.load %arg12[%c0, %c0_0] : memref<136x64xf32, #tpu.memory_space<vmem>>, vector<136x64xf32>
    %c0_1 = arith.constant 0 : index
    %c0_2 = arith.constant 0 : index
    %1 = vector.load %arg13[%c0_1, %c0_2] : memref<136x34xbf16, #tpu.memory_space<vmem>>, vector<136x34xbf16>
    %c0_3 = arith.constant 0 : index
    %c0_4 = arith.constant 0 : index
    %2 = vector.load %arg14[%c0_3, %c0_4] : memref<34x136xbf16, #tpu.memory_space<vmem>>, vector<34x136xbf16>
    %c0_5 = arith.constant 0 : index
    %c0_6 = arith.constant 0 : index
    %3 = vector.load %arg16[%c0_5, %c0_6] : memref<2x64xf32, #tpu.memory_space<vmem>>, vector<2x64xf32>
    %c0_7 = arith.constant 0 : index
    %c0_8 = arith.constant 0 : index
    %c0_9 = arith.constant 0 : index
    %4 = vector.load %arg1[%c0_7, %c0_8, %c0_9] : memref<1x34x192xbf16, #tpu.memory_space<vmem>>, vector<1x34x192xbf16>
    %5 = vector.shape_cast %4 : vector<1x34x192xbf16> to vector<34x192xbf16>
    %c0_10 = arith.constant 0 : index
    %c0_11 = arith.constant 0 : index
    %6 = vector.load %arg2[%c0_10, %c0_11] : memref<192x64xbf16, #tpu.memory_space<vmem>>, vector<192x64xbf16>
    %cst = arith.constant dense<0.000000e+00> : vector<34x64xf32>
    %7 = tpu.matmul %5, %6, %cst {dimension_numbers = #tpu.dot_dimension_numbers<[1], [0], [0], [1], [0, 0, 1, 1], [], []>} : vector<34x192xbf16>, vector<192x64xbf16>, vector<34x64xf32> -> vector<34x64xf32>
    %c0_12 = arith.constant 0 : index
    %c0_13 = arith.constant 0 : index
    %8 = vector.load %arg3[%c0_12, %c0_13] : memref<34x64xf32, #tpu.memory_space<vmem>>, vector<34x64xf32>
    %9 = arith.addf %7, %8 : vector<34x64xf32>
    %c0_14 = arith.constant 0 : index
    %c0_15 = arith.constant 0 : index
    %c0_16 = arith.constant 0 : index
    %10 = vector.load %arg4[%c0_14, %c0_15, %c0_16] : memref<2x6x64xf32, #tpu.memory_space<vmem>>, vector<1x6x64xf32>
    %11 = vector.shape_cast %10 : vector<1x6x64xf32> to vector<6x64xf32>
    %12 = vector.extract_strided_slice %11 {offsets = [0, 0], sizes = [1, 64], strides = [1, 1]} : vector<6x64xf32> to vector<1x64xf32>
    %13 = vector.extract_strided_slice %11 {offsets = [1, 0], sizes = [1, 64], strides = [1, 1]} : vector<6x64xf32> to vector<1x64xf32>
    %cst_17 = arith.constant dense<0.000000e+00> : vector<34xf32>
    %14 = vector.multi_reduction <add>, %9, %cst_17 [1] : vector<34x64xf32> to vector<34xf32>
    %15 = vector.shape_cast %14 : vector<34xf32> to vector<34x1xf32>
    %cst_18 = arith.constant 6.400000e+01 : f32
    %16 = vector.broadcast %cst_18 : f32 to vector<34x1xf32>
    %17 = arith.divf %15, %16 : vector<34x1xf32>
    %18 = vector.broadcast %17 : vector<34x1xf32> to vector<34x64xf32>
    %19 = arith.subf %9, %18 : vector<34x64xf32>
    %20 = arith.mulf %19, %19 : vector<34x64xf32>
    %cst_19 = arith.constant dense<0.000000e+00> : vector<34xf32>
    %21 = vector.multi_reduction <add>, %20, %cst_19 [1] : vector<34x64xf32> to vector<34xf32>
    %22 = vector.shape_cast %21 : vector<34xf32> to vector<34x1xf32>
    %cst_20 = arith.constant 6.400000e+01 : f32
    %23 = vector.broadcast %cst_20 : f32 to vector<34x1xf32>
    %24 = arith.divf %22, %23 : vector<34x1xf32>
    %25 = vector.broadcast %17 : vector<34x1xf32> to vector<34x64xf32>
    %26 = arith.subf %9, %25 : vector<34x64xf32>
    %cst_21 = arith.constant 9.99999997E-7 : f32
    %27 = vector.broadcast %cst_21 : f32 to vector<34x1xf32>
    %28 = arith.addf %24, %27 : vector<34x1xf32>
    %29 = math.rsqrt %28 : vector<34x1xf32>
    %30 = vector.broadcast %29 : vector<34x1xf32> to vector<34x64xf32>
    %31 = arith.mulf %26, %30 : vector<34x64xf32>
    %32 = vector.broadcast %12 : vector<1x64xf32> to vector<34x64xf32>
    %33 = arith.mulf %31, %32 : vector<34x64xf32>
    %34 = vector.broadcast %13 : vector<1x64xf32> to vector<34x64xf32>
    %35 = arith.addf %33, %34 : vector<34x64xf32>
    %36 = arith.truncf %35 : vector<34x64xf32> to vector<34x64xbf16>
    %c0_22 = arith.constant 0 : index
    %c0_23 = arith.constant 0 : index
    %c0_24 = arith.constant 0 : index
    %37 = vector.load %arg5[%c0_22, %c0_23, %c0_24] : memref<2x64x192xbf16, #tpu.memory_space<vmem>>, vector<1x64x192xbf16>
    %38 = vector.shape_cast %37 : vector<1x64x192xbf16> to vector<64x192xbf16>
    %cst_25 = arith.constant dense<0.000000e+00> : vector<34x192xf32>
    %39 = tpu.matmul %36, %38, %cst_25 {dimension_numbers = #tpu.dot_dimension_numbers<[1], [0], [0], [1], [0, 0, 1, 1], [], []>} : vector<34x64xbf16>, vector<64x192xbf16>, vector<34x192xf32> -> vector<34x192xf32>
    %c0_26 = arith.constant 0 : index
    %c0_27 = arith.constant 0 : index
    %c0_28 = arith.constant 0 : index
    %40 = vector.load %arg6[%c0_26, %c0_27, %c0_28] : memref<2x1x192xf32, #tpu.memory_space<vmem>>, vector<1x1x192xf32>
    %41 = vector.shape_cast %40 : vector<1x1x192xf32> to vector<1x192xf32>
    %42 = vector.broadcast %41 : vector<1x192xf32> to vector<34x192xf32>
    %43 = arith.addf %39, %42 : vector<34x192xf32>
    %44 = vector.extract_strided_slice %43 {offsets = [0, 0], sizes = [34, 64], strides = [1, 1]} : vector<34x192xf32> to vector<34x64xf32>
    %45 = arith.truncf %44 : vector<34x64xf32> to vector<34x64xbf16>
    %46 = vector.extract_strided_slice %43 {offsets = [0, 64], sizes = [34, 64], strides = [1, 1]} : vector<34x192xf32> to vector<34x64xf32>
    %47 = arith.truncf %46 : vector<34x64xf32> to vector<34x64xbf16>
    %48 = vector.extract_strided_slice %43 {offsets = [0, 128], sizes = [34, 64], strides = [1, 1]} : vector<34x192xf32> to vector<34x64xf32>
    %49 = arith.truncf %48 : vector<34x64xf32> to vector<34x64xbf16>
    %cst_29 = arith.constant dense<0.000000e+00> : vector<136x64xf32>
    %50 = tpu.matmul %1, %45, %cst_29 {dimension_numbers = #tpu.dot_dimension_numbers<[1], [0], [0], [1], [0, 0, 1, 1], [], []>} : vector<136x34xbf16>, vector<34x64xbf16>, vector<136x64xf32> -> vector<136x64xf32>
    %51 = arith.mulf %50, %0 : vector<136x64xf32>
    %52 = arith.truncf %51 : vector<136x64xf32> to vector<136x64xbf16>
    %cst_30 = arith.constant dense<0.000000e+00> : vector<136x34xf32>
    %53 = tpu.matmul %52, %47, %cst_30 {dimension_numbers = #tpu.dot_dimension_numbers<[1], [1], [0], [0], [0, 0, 1, 0], [], []>} : vector<136x64xbf16>, vector<34x64xbf16>, vector<136x34xf32> -> vector<136x34xf32>
    %c0_31 = arith.constant 0 : index
    %c0_32 = arith.constant 0 : index
    %c0_33 = arith.constant 0 : index
    %54 = vector.load %arg11[%c0_31, %c0_32, %c0_33] : memref<2x136x34xf32, #tpu.memory_space<vmem>>, vector<1x136x34xf32>
    %55 = vector.shape_cast %54 : vector<1x136x34xf32> to vector<136x34xf32>
    %56 = arith.addf %53, %55 : vector<136x34xf32>
    %cst_34 = arith.constant dense<0xFF800000> : vector<136xf32>
    %57 = vector.multi_reduction <maximumf>, %56, %cst_34 [1] : vector<136x34xf32> to vector<136xf32>
    %58 = vector.shape_cast %57 : vector<136xf32> to vector<136x1xf32>
    %59 = vector.broadcast %58 : vector<136x1xf32> to vector<136x34xf32>
    %60 = arith.subf %56, %59 : vector<136x34xf32>
    %61 = math.exp %60 : vector<136x34xf32>
    %cst_35 = arith.constant dense<0.000000e+00> : vector<136xf32>
    %62 = vector.multi_reduction <add>, %61, %cst_35 [1] : vector<136x34xf32> to vector<136xf32>
    %63 = vector.shape_cast %62 : vector<136xf32> to vector<136x1xf32>
    %64 = tpu.reciprocal %63 {approx = true} : vector<136x1xf32> -> vector<136x1xf32>
    %65 = vector.broadcast %64 : vector<136x1xf32> to vector<136x34xf32>
    %66 = arith.mulf %61, %65 : vector<136x34xf32>
    %67 = arith.truncf %66 : vector<136x34xf32> to vector<136x34xbf16>
    %cst_36 = arith.constant dense<0.000000e+00> : vector<136x64xf32>
    %68 = tpu.matmul %67, %49, %cst_36 {dimension_numbers = #tpu.dot_dimension_numbers<[1], [0], [0], [1], [0, 0, 1, 1], [], []>} : vector<136x34xbf16>, vector<34x64xbf16>, vector<136x64xf32> -> vector<136x64xf32>
    %69 = arith.mulf %68, %0 : vector<136x64xf32>
    %70 = arith.truncf %69 : vector<136x64xf32> to vector<136x64xbf16>
    %cst_37 = arith.constant dense<0.000000e+00> : vector<34x64xf32>
    %71 = tpu.matmul %2, %70, %cst_37 {dimension_numbers = #tpu.dot_dimension_numbers<[1], [0], [0], [1], [0, 0, 1, 1], [], []>} : vector<34x136xbf16>, vector<136x64xbf16>, vector<34x64xf32> -> vector<34x64xf32>
    %72 = arith.truncf %71 : vector<34x64xf32> to vector<34x64xbf16>
    %c0_38 = arith.constant 0 : index
    %c0_39 = arith.constant 0 : index
    %c0_40 = arith.constant 0 : index
    %73 = vector.load %arg7[%c0_38, %c0_39, %c0_40] : memref<2x64x64xbf16, #tpu.memory_space<vmem>>, vector<1x64x64xbf16>
    %74 = vector.shape_cast %73 : vector<1x64x64xbf16> to vector<64x64xbf16>
    %cst_41 = arith.constant dense<0.000000e+00> : vector<34x64xf32>
    %75 = tpu.matmul %72, %74, %cst_41 {dimension_numbers = #tpu.dot_dimension_numbers<[1], [0], [0], [1], [0, 0, 1, 1], [], []>} : vector<34x64xbf16>, vector<64x64xbf16>, vector<34x64xf32> -> vector<34x64xf32>
    %76 = vector.extract_strided_slice %11 {offsets = [2, 0], sizes = [1, 64], strides = [1, 1]} : vector<6x64xf32> to vector<1x64xf32>
    %77 = vector.broadcast %76 : vector<1x64xf32> to vector<34x64xf32>
    %78 = arith.addf %75, %77 : vector<34x64xf32>
    %79 = arith.addf %9, %78 : vector<34x64xf32>
    %80 = vector.extract_strided_slice %11 {offsets = [3, 0], sizes = [1, 64], strides = [1, 1]} : vector<6x64xf32> to vector<1x64xf32>
    %81 = vector.extract_strided_slice %11 {offsets = [4, 0], sizes = [1, 64], strides = [1, 1]} : vector<6x64xf32> to vector<1x64xf32>
    %cst_42 = arith.constant dense<0.000000e+00> : vector<34xf32>
    %82 = vector.multi_reduction <add>, %79, %cst_42 [1] : vector<34x64xf32> to vector<34xf32>
    %83 = vector.shape_cast %82 : vector<34xf32> to vector<34x1xf32>
    %cst_43 = arith.constant 6.400000e+01 : f32
    %84 = vector.broadcast %cst_43 : f32 to vector<34x1xf32>
    %85 = arith.divf %83, %84 : vector<34x1xf32>
    %86 = vector.broadcast %85 : vector<34x1xf32> to vector<34x64xf32>
    %87 = arith.subf %79, %86 : vector<34x64xf32>
    %88 = arith.mulf %87, %87 : vector<34x64xf32>
    %cst_44 = arith.constant dense<0.000000e+00> : vector<34xf32>
    %89 = vector.multi_reduction <add>, %88, %cst_44 [1] : vector<34x64xf32> to vector<34xf32>
    %90 = vector.shape_cast %89 : vector<34xf32> to vector<34x1xf32>
    %cst_45 = arith.constant 6.400000e+01 : f32
    %91 = vector.broadcast %cst_45 : f32 to vector<34x1xf32>
    %92 = arith.divf %90, %91 : vector<34x1xf32>
    %93 = vector.broadcast %85 : vector<34x1xf32> to vector<34x64xf32>
    %94 = arith.subf %79, %93 : vector<34x64xf32>
    %cst_46 = arith.constant 9.99999997E-7 : f32
    %95 = vector.broadcast %cst_46 : f32 to vector<34x1xf32>
    %96 = arith.addf %92, %95 : vector<34x1xf32>
    %97 = math.rsqrt %96 : vector<34x1xf32>
    %98 = vector.broadcast %97 : vector<34x1xf32> to vector<34x64xf32>
    %99 = arith.mulf %94, %98 : vector<34x64xf32>
    %100 = vector.broadcast %80 : vector<1x64xf32> to vector<34x64xf32>
    %101 = arith.mulf %99, %100 : vector<34x64xf32>
    %102 = vector.broadcast %81 : vector<1x64xf32> to vector<34x64xf32>
    %103 = arith.addf %101, %102 : vector<34x64xf32>
    %104 = arith.truncf %103 : vector<34x64xf32> to vector<34x64xbf16>
    %c0_47 = arith.constant 0 : index
    %c0_48 = arith.constant 0 : index
    %c0_49 = arith.constant 0 : index
    %105 = vector.load %arg8[%c0_47, %c0_48, %c0_49] : memref<2x64x256xbf16, #tpu.memory_space<vmem>>, vector<1x64x256xbf16>
    %106 = vector.shape_cast %105 : vector<1x64x256xbf16> to vector<64x256xbf16>
    %cst_50 = arith.constant dense<0.000000e+00> : vector<34x256xf32>
    %107 = tpu.matmul %104, %106, %cst_50 {dimension_numbers = #tpu.dot_dimension_numbers<[1], [0], [0], [1], [0, 0, 1, 1], [], []>} : vector<34x64xbf16>, vector<64x256xbf16>, vector<34x256xf32> -> vector<34x256xf32>
    %c0_51 = arith.constant 0 : index
    %c0_52 = arith.constant 0 : index
    %c0_53 = arith.constant 0 : index
    %108 = vector.load %arg9[%c0_51, %c0_52, %c0_53] : memref<2x1x256xf32, #tpu.memory_space<vmem>>, vector<1x1x256xf32>
    %109 = vector.shape_cast %108 : vector<1x1x256xf32> to vector<1x256xf32>
    %110 = vector.broadcast %109 : vector<1x256xf32> to vector<34x256xf32>
    %111 = arith.addf %107, %110 : vector<34x256xf32>
    %cst_54 = arith.constant 0.707106769 : f32
    %112 = vector.broadcast %cst_54 : f32 to vector<34x256xf32>
    %113 = arith.mulf %111, %112 : vector<34x256xf32>
    %114 = math.absf %113 : vector<34x256xf32>
    %cst_55 = arith.constant 0.327591091 : f32
    %115 = vector.broadcast %cst_55 : f32 to vector<34x256xf32>
    %116 = arith.mulf %115, %114 : vector<34x256xf32>
    %cst_56 = arith.constant 1.000000e+00 : f32
    %117 = vector.broadcast %cst_56 : f32 to vector<34x256xf32>
    %118 = arith.addf %117, %116 : vector<34x256xf32>
    %119 = tpu.reciprocal %118 {approx = true} : vector<34x256xf32> -> vector<34x256xf32>
    %cst_57 = arith.constant 1.06140542 : f32
    %120 = vector.broadcast %cst_57 : f32 to vector<34x256xf32>
    %121 = arith.mulf %119, %120 : vector<34x256xf32>
    %cst_58 = arith.constant -1.45315206 : f32
    %122 = vector.broadcast %cst_58 : f32 to vector<34x256xf32>
    %123 = arith.addf %122, %121 : vector<34x256xf32>
    %124 = arith.mulf %119, %123 : vector<34x256xf32>
    %cst_59 = arith.constant 1.42141378 : f32
    %125 = vector.broadcast %cst_59 : f32 to vector<34x256xf32>
    %126 = arith.addf %125, %124 : vector<34x256xf32>
    %127 = arith.mulf %119, %126 : vector<34x256xf32>
    %cst_60 = arith.constant -0.284496725 : f32
    %128 = vector.broadcast %cst_60 : f32 to vector<34x256xf32>
    %129 = arith.addf %128, %127 : vector<34x256xf32>
    %130 = arith.mulf %119, %129 : vector<34x256xf32>
    %cst_61 = arith.constant 0.254829586 : f32
    %131 = vector.broadcast %cst_61 : f32 to vector<34x256xf32>
    %132 = arith.addf %131, %130 : vector<34x256xf32>
    %133 = arith.mulf %119, %132 : vector<34x256xf32>
    %cst_62 = arith.constant 0.000000e+00 : f32
    %134 = vector.broadcast %cst_62 : f32 to vector<34x256xf32>
    %135 = arith.subf %134, %114 : vector<34x256xf32>
    %136 = arith.mulf %135, %114 : vector<34x256xf32>
    %137 = math.exp %136 : vector<34x256xf32>
    %138 = arith.mulf %133, %137 : vector<34x256xf32>
    %cst_63 = arith.constant 1.000000e+00 : f32
    %139 = vector.broadcast %cst_63 : f32 to vector<34x256xf32>
    %140 = arith.subf %139, %138 : vector<34x256xf32>
    %cst_64 = arith.constant 0.000000e+00 : f32
    %141 = vector.broadcast %cst_64 : f32 to vector<34x256xf32>
    %142 = arith.cmpf oge, %113, %141 : vector<34x256xf32>
    %cst_65 = arith.constant 0.000000e+00 : f32
    %143 = vector.broadcast %cst_65 : f32 to vector<34x256xf32>
    %144 = arith.subf %143, %140 : vector<34x256xf32>
    %145 = arith.select %142, %140, %144 : vector<34x256xi1>, vector<34x256xf32>
    %cst_66 = arith.constant 5.000000e-01 : f32
    %146 = vector.broadcast %cst_66 : f32 to vector<34x256xf32>
    %147 = arith.mulf %146, %111 : vector<34x256xf32>
    %cst_67 = arith.constant 1.000000e+00 : f32
    %148 = vector.broadcast %cst_67 : f32 to vector<34x256xf32>
    %149 = arith.addf %148, %145 : vector<34x256xf32>
    %150 = arith.mulf %147, %149 : vector<34x256xf32>
    %151 = arith.truncf %150 : vector<34x256xf32> to vector<34x256xbf16>
    %c0_68 = arith.constant 0 : index
    %c0_69 = arith.constant 0 : index
    %c0_70 = arith.constant 0 : index
    %152 = vector.load %arg10[%c0_68, %c0_69, %c0_70] : memref<2x256x64xbf16, #tpu.memory_space<vmem>>, vector<1x256x64xbf16>
    %153 = vector.shape_cast %152 : vector<1x256x64xbf16> to vector<256x64xbf16>
    %cst_71 = arith.constant dense<0.000000e+00> : vector<34x64xf32>
    %154 = tpu.matmul %151, %153, %cst_71 {dimension_numbers = #tpu.dot_dimension_numbers<[1], [0], [0], [1], [0, 0, 1, 1], [], []>} : vector<34x256xbf16>, vector<256x64xbf16>, vector<34x64xf32> -> vector<34x64xf32>
    %155 = vector.extract_strided_slice %11 {offsets = [5, 0], sizes = [1, 64], strides = [1, 1]} : vector<6x64xf32> to vector<1x64xf32>
    %156 = vector.broadcast %155 : vector<1x64xf32> to vector<34x64xf32>
    %157 = arith.addf %154, %156 : vector<34x64xf32>
    %158 = arith.addf %79, %157 : vector<34x64xf32>
    %c1 = arith.constant 1 : index
    %c0_72 = arith.constant 0 : index
    %c0_73 = arith.constant 0 : index
    %159 = vector.load %arg4[%c1, %c0_72, %c0_73] : memref<2x6x64xf32, #tpu.memory_space<vmem>>, vector<1x6x64xf32>
    %160 = vector.shape_cast %159 : vector<1x6x64xf32> to vector<6x64xf32>
    %161 = vector.extract_strided_slice %160 {offsets = [0, 0], sizes = [1, 64], strides = [1, 1]} : vector<6x64xf32> to vector<1x64xf32>
    %162 = vector.extract_strided_slice %160 {offsets = [1, 0], sizes = [1, 64], strides = [1, 1]} : vector<6x64xf32> to vector<1x64xf32>
    %cst_74 = arith.constant dense<0.000000e+00> : vector<34xf32>
    %163 = vector.multi_reduction <add>, %158, %cst_74 [1] : vector<34x64xf32> to vector<34xf32>
    %164 = vector.shape_cast %163 : vector<34xf32> to vector<34x1xf32>
    %cst_75 = arith.constant 6.400000e+01 : f32
    %165 = vector.broadcast %cst_75 : f32 to vector<34x1xf32>
    %166 = arith.divf %164, %165 : vector<34x1xf32>
    %167 = vector.broadcast %166 : vector<34x1xf32> to vector<34x64xf32>
    %168 = arith.subf %158, %167 : vector<34x64xf32>
    %169 = arith.mulf %168, %168 : vector<34x64xf32>
    %cst_76 = arith.constant dense<0.000000e+00> : vector<34xf32>
    %170 = vector.multi_reduction <add>, %169, %cst_76 [1] : vector<34x64xf32> to vector<34xf32>
    %171 = vector.shape_cast %170 : vector<34xf32> to vector<34x1xf32>
    %cst_77 = arith.constant 6.400000e+01 : f32
    %172 = vector.broadcast %cst_77 : f32 to vector<34x1xf32>
    %173 = arith.divf %171, %172 : vector<34x1xf32>
    %174 = vector.broadcast %166 : vector<34x1xf32> to vector<34x64xf32>
    %175 = arith.subf %158, %174 : vector<34x64xf32>
    %cst_78 = arith.constant 9.99999997E-7 : f32
    %176 = vector.broadcast %cst_78 : f32 to vector<34x1xf32>
    %177 = arith.addf %173, %176 : vector<34x1xf32>
    %178 = math.rsqrt %177 : vector<34x1xf32>
    %179 = vector.broadcast %178 : vector<34x1xf32> to vector<34x64xf32>
    %180 = arith.mulf %175, %179 : vector<34x64xf32>
    %181 = vector.broadcast %161 : vector<1x64xf32> to vector<34x64xf32>
    %182 = arith.mulf %180, %181 : vector<34x64xf32>
    %183 = vector.broadcast %162 : vector<1x64xf32> to vector<34x64xf32>
    %184 = arith.addf %182, %183 : vector<34x64xf32>
    %185 = arith.truncf %184 : vector<34x64xf32> to vector<34x64xbf16>
    %c1_79 = arith.constant 1 : index
    %c0_80 = arith.constant 0 : index
    %c0_81 = arith.constant 0 : index
    %186 = vector.load %arg5[%c1_79, %c0_80, %c0_81] : memref<2x64x192xbf16, #tpu.memory_space<vmem>>, vector<1x64x192xbf16>
    %187 = vector.shape_cast %186 : vector<1x64x192xbf16> to vector<64x192xbf16>
    %cst_82 = arith.constant dense<0.000000e+00> : vector<34x192xf32>
    %188 = tpu.matmul %185, %187, %cst_82 {dimension_numbers = #tpu.dot_dimension_numbers<[1], [0], [0], [1], [0, 0, 1, 1], [], []>} : vector<34x64xbf16>, vector<64x192xbf16>, vector<34x192xf32> -> vector<34x192xf32>
    %c1_83 = arith.constant 1 : index
    %c0_84 = arith.constant 0 : index
    %c0_85 = arith.constant 0 : index
    %189 = vector.load %arg6[%c1_83, %c0_84, %c0_85] : memref<2x1x192xf32, #tpu.memory_space<vmem>>, vector<1x1x192xf32>
    %190 = vector.shape_cast %189 : vector<1x1x192xf32> to vector<1x192xf32>
    %191 = vector.broadcast %190 : vector<1x192xf32> to vector<34x192xf32>
    %192 = arith.addf %188, %191 : vector<34x192xf32>
    %193 = vector.extract_strided_slice %192 {offsets = [0, 0], sizes = [34, 64], strides = [1, 1]} : vector<34x192xf32> to vector<34x64xf32>
    %194 = arith.truncf %193 : vector<34x64xf32> to vector<34x64xbf16>
    %195 = vector.extract_strided_slice %192 {offsets = [0, 64], sizes = [34, 64], strides = [1, 1]} : vector<34x192xf32> to vector<34x64xf32>
    %196 = arith.truncf %195 : vector<34x64xf32> to vector<34x64xbf16>
    %197 = vector.extract_strided_slice %192 {offsets = [0, 128], sizes = [34, 64], strides = [1, 1]} : vector<34x192xf32> to vector<34x64xf32>
    %198 = arith.truncf %197 : vector<34x64xf32> to vector<34x64xbf16>
    %cst_86 = arith.constant dense<0.000000e+00> : vector<136x64xf32>
    %199 = tpu.matmul %1, %194, %cst_86 {dimension_numbers = #tpu.dot_dimension_numbers<[1], [0], [0], [1], [0, 0, 1, 1], [], []>} : vector<136x34xbf16>, vector<34x64xbf16>, vector<136x64xf32> -> vector<136x64xf32>
    %200 = arith.mulf %199, %0 : vector<136x64xf32>
    %201 = arith.truncf %200 : vector<136x64xf32> to vector<136x64xbf16>
    %cst_87 = arith.constant dense<0.000000e+00> : vector<136x34xf32>
    %202 = tpu.matmul %201, %196, %cst_87 {dimension_numbers = #tpu.dot_dimension_numbers<[1], [1], [0], [0], [0, 0, 1, 0], [], []>} : vector<136x64xbf16>, vector<34x64xbf16>, vector<136x34xf32> -> vector<136x34xf32>
    %c1_88 = arith.constant 1 : index
    %c0_89 = arith.constant 0 : index
    %c0_90 = arith.constant 0 : index
    %203 = vector.load %arg11[%c1_88, %c0_89, %c0_90] : memref<2x136x34xf32, #tpu.memory_space<vmem>>, vector<1x136x34xf32>
    %204 = vector.shape_cast %203 : vector<1x136x34xf32> to vector<136x34xf32>
    %205 = arith.addf %202, %204 : vector<136x34xf32>
    %cst_91 = arith.constant dense<0xFF800000> : vector<136xf32>
    %206 = vector.multi_reduction <maximumf>, %205, %cst_91 [1] : vector<136x34xf32> to vector<136xf32>
    %207 = vector.shape_cast %206 : vector<136xf32> to vector<136x1xf32>
    %208 = vector.broadcast %207 : vector<136x1xf32> to vector<136x34xf32>
    %209 = arith.subf %205, %208 : vector<136x34xf32>
    %210 = math.exp %209 : vector<136x34xf32>
    %cst_92 = arith.constant dense<0.000000e+00> : vector<136xf32>
    %211 = vector.multi_reduction <add>, %210, %cst_92 [1] : vector<136x34xf32> to vector<136xf32>
    %212 = vector.shape_cast %211 : vector<136xf32> to vector<136x1xf32>
    %213 = tpu.reciprocal %212 {approx = true} : vector<136x1xf32> -> vector<136x1xf32>
    %214 = vector.broadcast %213 : vector<136x1xf32> to vector<136x34xf32>
    %215 = arith.mulf %210, %214 : vector<136x34xf32>
    %216 = arith.truncf %215 : vector<136x34xf32> to vector<136x34xbf16>
    %cst_93 = arith.constant dense<0.000000e+00> : vector<136x64xf32>
    %217 = tpu.matmul %216, %198, %cst_93 {dimension_numbers = #tpu.dot_dimension_numbers<[1], [0], [0], [1], [0, 0, 1, 1], [], []>} : vector<136x34xbf16>, vector<34x64xbf16>, vector<136x64xf32> -> vector<136x64xf32>
    %218 = arith.mulf %217, %0 : vector<136x64xf32>
    %219 = arith.truncf %218 : vector<136x64xf32> to vector<136x64xbf16>
    %cst_94 = arith.constant dense<0.000000e+00> : vector<34x64xf32>
    %220 = tpu.matmul %2, %219, %cst_94 {dimension_numbers = #tpu.dot_dimension_numbers<[1], [0], [0], [1], [0, 0, 1, 1], [], []>} : vector<34x136xbf16>, vector<136x64xbf16>, vector<34x64xf32> -> vector<34x64xf32>
    %221 = arith.truncf %220 : vector<34x64xf32> to vector<34x64xbf16>
    %c1_95 = arith.constant 1 : index
    %c0_96 = arith.constant 0 : index
    %c0_97 = arith.constant 0 : index
    %222 = vector.load %arg7[%c1_95, %c0_96, %c0_97] : memref<2x64x64xbf16, #tpu.memory_space<vmem>>, vector<1x64x64xbf16>
    %223 = vector.shape_cast %222 : vector<1x64x64xbf16> to vector<64x64xbf16>
    %cst_98 = arith.constant dense<0.000000e+00> : vector<34x64xf32>
    %224 = tpu.matmul %221, %223, %cst_98 {dimension_numbers = #tpu.dot_dimension_numbers<[1], [0], [0], [1], [0, 0, 1, 1], [], []>} : vector<34x64xbf16>, vector<64x64xbf16>, vector<34x64xf32> -> vector<34x64xf32>
    %225 = vector.extract_strided_slice %160 {offsets = [2, 0], sizes = [1, 64], strides = [1, 1]} : vector<6x64xf32> to vector<1x64xf32>
    %226 = vector.broadcast %225 : vector<1x64xf32> to vector<34x64xf32>
    %227 = arith.addf %224, %226 : vector<34x64xf32>
    %228 = arith.addf %158, %227 : vector<34x64xf32>
    %229 = vector.extract_strided_slice %160 {offsets = [3, 0], sizes = [1, 64], strides = [1, 1]} : vector<6x64xf32> to vector<1x64xf32>
    %230 = vector.extract_strided_slice %160 {offsets = [4, 0], sizes = [1, 64], strides = [1, 1]} : vector<6x64xf32> to vector<1x64xf32>
    %cst_99 = arith.constant dense<0.000000e+00> : vector<34xf32>
    %231 = vector.multi_reduction <add>, %228, %cst_99 [1] : vector<34x64xf32> to vector<34xf32>
    %232 = vector.shape_cast %231 : vector<34xf32> to vector<34x1xf32>
    %cst_100 = arith.constant 6.400000e+01 : f32
    %233 = vector.broadcast %cst_100 : f32 to vector<34x1xf32>
    %234 = arith.divf %232, %233 : vector<34x1xf32>
    %235 = vector.broadcast %234 : vector<34x1xf32> to vector<34x64xf32>
    %236 = arith.subf %228, %235 : vector<34x64xf32>
    %237 = arith.mulf %236, %236 : vector<34x64xf32>
    %cst_101 = arith.constant dense<0.000000e+00> : vector<34xf32>
    %238 = vector.multi_reduction <add>, %237, %cst_101 [1] : vector<34x64xf32> to vector<34xf32>
    %239 = vector.shape_cast %238 : vector<34xf32> to vector<34x1xf32>
    %cst_102 = arith.constant 6.400000e+01 : f32
    %240 = vector.broadcast %cst_102 : f32 to vector<34x1xf32>
    %241 = arith.divf %239, %240 : vector<34x1xf32>
    %242 = vector.broadcast %234 : vector<34x1xf32> to vector<34x64xf32>
    %243 = arith.subf %228, %242 : vector<34x64xf32>
    %cst_103 = arith.constant 9.99999997E-7 : f32
    %244 = vector.broadcast %cst_103 : f32 to vector<34x1xf32>
    %245 = arith.addf %241, %244 : vector<34x1xf32>
    %246 = math.rsqrt %245 : vector<34x1xf32>
    %247 = vector.broadcast %246 : vector<34x1xf32> to vector<34x64xf32>
    %248 = arith.mulf %243, %247 : vector<34x64xf32>
    %249 = vector.broadcast %229 : vector<1x64xf32> to vector<34x64xf32>
    %250 = arith.mulf %248, %249 : vector<34x64xf32>
    %251 = vector.broadcast %230 : vector<1x64xf32> to vector<34x64xf32>
    %252 = arith.addf %250, %251 : vector<34x64xf32>
    %253 = arith.truncf %252 : vector<34x64xf32> to vector<34x64xbf16>
    %c1_104 = arith.constant 1 : index
    %c0_105 = arith.constant 0 : index
    %c0_106 = arith.constant 0 : index
    %254 = vector.load %arg8[%c1_104, %c0_105, %c0_106] : memref<2x64x256xbf16, #tpu.memory_space<vmem>>, vector<1x64x256xbf16>
    %255 = vector.shape_cast %254 : vector<1x64x256xbf16> to vector<64x256xbf16>
    %cst_107 = arith.constant dense<0.000000e+00> : vector<34x256xf32>
    %256 = tpu.matmul %253, %255, %cst_107 {dimension_numbers = #tpu.dot_dimension_numbers<[1], [0], [0], [1], [0, 0, 1, 1], [], []>} : vector<34x64xbf16>, vector<64x256xbf16>, vector<34x256xf32> -> vector<34x256xf32>
    %c1_108 = arith.constant 1 : index
    %c0_109 = arith.constant 0 : index
    %c0_110 = arith.constant 0 : index
    %257 = vector.load %arg9[%c1_108, %c0_109, %c0_110] : memref<2x1x256xf32, #tpu.memory_space<vmem>>, vector<1x1x256xf32>
    %258 = vector.shape_cast %257 : vector<1x1x256xf32> to vector<1x256xf32>
    %259 = vector.broadcast %258 : vector<1x256xf32> to vector<34x256xf32>
    %260 = arith.addf %256, %259 : vector<34x256xf32>
    %cst_111 = arith.constant 0.707106769 : f32
    %261 = vector.broadcast %cst_111 : f32 to vector<34x256xf32>
    %262 = arith.mulf %260, %261 : vector<34x256xf32>
    %263 = math.absf %262 : vector<34x256xf32>
    %cst_112 = arith.constant 0.327591091 : f32
    %264 = vector.broadcast %cst_112 : f32 to vector<34x256xf32>
    %265 = arith.mulf %264, %263 : vector<34x256xf32>
    %cst_113 = arith.constant 1.000000e+00 : f32
    %266 = vector.broadcast %cst_113 : f32 to vector<34x256xf32>
    %267 = arith.addf %266, %265 : vector<34x256xf32>
    %268 = tpu.reciprocal %267 {approx = true} : vector<34x256xf32> -> vector<34x256xf32>
    %cst_114 = arith.constant 1.06140542 : f32
    %269 = vector.broadcast %cst_114 : f32 to vector<34x256xf32>
    %270 = arith.mulf %268, %269 : vector<34x256xf32>
    %cst_115 = arith.constant -1.45315206 : f32
    %271 = vector.broadcast %cst_115 : f32 to vector<34x256xf32>
    %272 = arith.addf %271, %270 : vector<34x256xf32>
    %273 = arith.mulf %268, %272 : vector<34x256xf32>
    %cst_116 = arith.constant 1.42141378 : f32
    %274 = vector.broadcast %cst_116 : f32 to vector<34x256xf32>
    %275 = arith.addf %274, %273 : vector<34x256xf32>
    %276 = arith.mulf %268, %275 : vector<34x256xf32>
    %cst_117 = arith.constant -0.284496725 : f32
    %277 = vector.broadcast %cst_117 : f32 to vector<34x256xf32>
    %278 = arith.addf %277, %276 : vector<34x256xf32>
    %279 = arith.mulf %268, %278 : vector<34x256xf32>
    %cst_118 = arith.constant 0.254829586 : f32
    %280 = vector.broadcast %cst_118 : f32 to vector<34x256xf32>
    %281 = arith.addf %280, %279 : vector<34x256xf32>
    %282 = arith.mulf %268, %281 : vector<34x256xf32>
    %cst_119 = arith.constant 0.000000e+00 : f32
    %283 = vector.broadcast %cst_119 : f32 to vector<34x256xf32>
    %284 = arith.subf %283, %263 : vector<34x256xf32>
    %285 = arith.mulf %284, %263 : vector<34x256xf32>
    %286 = math.exp %285 : vector<34x256xf32>
    %287 = arith.mulf %282, %286 : vector<34x256xf32>
    %cst_120 = arith.constant 1.000000e+00 : f32
    %288 = vector.broadcast %cst_120 : f32 to vector<34x256xf32>
    %289 = arith.subf %288, %287 : vector<34x256xf32>
    %cst_121 = arith.constant 0.000000e+00 : f32
    %290 = vector.broadcast %cst_121 : f32 to vector<34x256xf32>
    %291 = arith.cmpf oge, %262, %290 : vector<34x256xf32>
    %cst_122 = arith.constant 0.000000e+00 : f32
    %292 = vector.broadcast %cst_122 : f32 to vector<34x256xf32>
    %293 = arith.subf %292, %289 : vector<34x256xf32>
    %294 = arith.select %291, %289, %293 : vector<34x256xi1>, vector<34x256xf32>
    %cst_123 = arith.constant 5.000000e-01 : f32
    %295 = vector.broadcast %cst_123 : f32 to vector<34x256xf32>
    %296 = arith.mulf %295, %260 : vector<34x256xf32>
    %cst_124 = arith.constant 1.000000e+00 : f32
    %297 = vector.broadcast %cst_124 : f32 to vector<34x256xf32>
    %298 = arith.addf %297, %294 : vector<34x256xf32>
    %299 = arith.mulf %296, %298 : vector<34x256xf32>
    %300 = arith.truncf %299 : vector<34x256xf32> to vector<34x256xbf16>
    %c1_125 = arith.constant 1 : index
    %c0_126 = arith.constant 0 : index
    %c0_127 = arith.constant 0 : index
    %301 = vector.load %arg10[%c1_125, %c0_126, %c0_127] : memref<2x256x64xbf16, #tpu.memory_space<vmem>>, vector<1x256x64xbf16>
    %302 = vector.shape_cast %301 : vector<1x256x64xbf16> to vector<256x64xbf16>
    %cst_128 = arith.constant dense<0.000000e+00> : vector<34x64xf32>
    %303 = tpu.matmul %300, %302, %cst_128 {dimension_numbers = #tpu.dot_dimension_numbers<[1], [0], [0], [1], [0, 0, 1, 1], [], []>} : vector<34x256xbf16>, vector<256x64xbf16>, vector<34x64xf32> -> vector<34x64xf32>
    %304 = vector.extract_strided_slice %160 {offsets = [5, 0], sizes = [1, 64], strides = [1, 1]} : vector<6x64xf32> to vector<1x64xf32>
    %305 = vector.broadcast %304 : vector<1x64xf32> to vector<34x64xf32>
    %306 = arith.addf %303, %305 : vector<34x64xf32>
    %307 = arith.addf %228, %306 : vector<34x64xf32>
    %c0_129 = arith.constant 0 : index
    %c0_130 = arith.constant 0 : index
    %308 = vector.load %arg15[%c0_129, %c0_130] : memref<2x34xf32, #tpu.memory_space<vmem>>, vector<2x34xf32>
    %cst_131 = arith.constant dense<0.000000e+00> : vector<2x64xf32>
    %309 = tpu.matmul %308, %307, %cst_131 {dimension_numbers = #tpu.dot_dimension_numbers<[1], [0], [0], [1], [0, 0, 1, 1], [], []>} : vector<2x34xf32>, vector<34x64xf32>, vector<2x64xf32> -> vector<2x64xf32>
    %310 = vector.extract_strided_slice %3 {offsets = [0, 0], sizes = [1, 64], strides = [1, 1]} : vector<2x64xf32> to vector<1x64xf32>
    %311 = vector.extract_strided_slice %3 {offsets = [1, 0], sizes = [1, 64], strides = [1, 1]} : vector<2x64xf32> to vector<1x64xf32>
    %cst_132 = arith.constant dense<0.000000e+00> : vector<2xf32>
    %312 = vector.multi_reduction <add>, %309, %cst_132 [1] : vector<2x64xf32> to vector<2xf32>
    %313 = vector.shape_cast %312 : vector<2xf32> to vector<2x1xf32>
    %cst_133 = arith.constant 6.400000e+01 : f32
    %314 = vector.broadcast %cst_133 : f32 to vector<2x1xf32>
    %315 = arith.divf %313, %314 : vector<2x1xf32>
    %316 = vector.broadcast %315 : vector<2x1xf32> to vector<2x64xf32>
    %317 = arith.subf %309, %316 : vector<2x64xf32>
    %318 = arith.mulf %317, %317 : vector<2x64xf32>
    %cst_134 = arith.constant dense<0.000000e+00> : vector<2xf32>
    %319 = vector.multi_reduction <add>, %318, %cst_134 [1] : vector<2x64xf32> to vector<2xf32>
    %320 = vector.shape_cast %319 : vector<2xf32> to vector<2x1xf32>
    %cst_135 = arith.constant 6.400000e+01 : f32
    %321 = vector.broadcast %cst_135 : f32 to vector<2x1xf32>
    %322 = arith.divf %320, %321 : vector<2x1xf32>
    %323 = vector.broadcast %315 : vector<2x1xf32> to vector<2x64xf32>
    %324 = arith.subf %309, %323 : vector<2x64xf32>
    %cst_136 = arith.constant 9.99999997E-7 : f32
    %325 = vector.broadcast %cst_136 : f32 to vector<2x1xf32>
    %326 = arith.addf %322, %325 : vector<2x1xf32>
    %327 = math.rsqrt %326 : vector<2x1xf32>
    %328 = vector.broadcast %327 : vector<2x1xf32> to vector<2x64xf32>
    %329 = arith.mulf %324, %328 : vector<2x64xf32>
    %330 = vector.broadcast %310 : vector<1x64xf32> to vector<2x64xf32>
    %331 = arith.mulf %329, %330 : vector<2x64xf32>
    %332 = vector.broadcast %311 : vector<1x64xf32> to vector<2x64xf32>
    %333 = arith.addf %331, %332 : vector<2x64xf32>
    %c0_137 = arith.constant 0 : index
    %c0_138 = arith.constant 0 : index
    %334 = vector.load %arg17[%c0_137, %c0_138] : memref<64x128xf32, #tpu.memory_space<vmem>>, vector<64x128xf32>
    %cst_139 = arith.constant dense<0.000000e+00> : vector<2x128xf32>
    %335 = tpu.matmul %333, %334, %cst_139 {dimension_numbers = #tpu.dot_dimension_numbers<[1], [0], [0], [1], [0, 0, 1, 1], [], []>} : vector<2x64xf32>, vector<64x128xf32>, vector<2x128xf32> -> vector<2x128xf32>
    %c0_140 = arith.constant 0 : index
    %c0_141 = arith.constant 0 : index
    %336 = vector.load %arg18[%c0_140, %c0_141] : memref<1x128xf32, #tpu.memory_space<vmem>>, vector<1x128xf32>
    %337 = vector.broadcast %336 : vector<1x128xf32> to vector<2x128xf32>
    %338 = arith.addf %335, %337 : vector<2x128xf32>
    %339 = vector.shape_cast %338 : vector<2x128xf32> to vector<1x2x128xf32>
    %c0_142 = arith.constant 0 : index
    %c0_143 = arith.constant 0 : index
    %c0_144 = arith.constant 0 : index
    %340 = vector.load %arg19[%c0_142, %c0_143, %c0_144] : memref<1x2x128xf32, #tpu.memory_space<vmem>>, vector<1x2x128xf32>
    tpu.vector_store %arg19[%c0_142, %c0_143, %c0_144], %339 {strides = array<i32>} : memref<1x2x128xf32, #tpu.memory_space<vmem>>, vector<1x2x128xf32>,
    return
  }
  func.func @transform_0(%arg0: i32) -> (i32, i32, i32) {
    %c0_i32 = arith.constant 0 : i32
    %c0_i32_0 = arith.constant 0 : i32
    %c0_i32_1 = arith.constant 0 : i32
    return %arg0, %c0_i32, %c0_i32_0 : i32, i32, i32
  }
  func.func @transform_1(%arg0: i32) -> (i32, i32) {
    %c0_i32 = arith.constant 0 : i32
    %c0_i32_0 = arith.constant 0 : i32
    %c0_i32_1 = arith.constant 0 : i32
    return %c0_i32, %c0_i32_0 : i32, i32
  }
  func.func @transform_2(%arg0: i32) -> (i32, i32) {
    %c0_i32 = arith.constant 0 : i32
    %c0_i32_0 = arith.constant 0 : i32
    %c0_i32_1 = arith.constant 0 : i32
    return %c0_i32, %c0_i32_0 : i32, i32
  }
  func.func @transform_3(%arg0: i32) -> (i32, i32, i32) {
    %c0_i32 = arith.constant 0 : i32
    %c0_i32_0 = arith.constant 0 : i32
    %c0_i32_1 = arith.constant 0 : i32
    %c0_i32_2 = arith.constant 0 : i32
    return %c0_i32, %c0_i32_0, %c0_i32_1 : i32, i32, i32
  }
  func.func @transform_4(%arg0: i32) -> (i32, i32, i32) {
    %c0_i32 = arith.constant 0 : i32
    %c0_i32_0 = arith.constant 0 : i32
    %c0_i32_1 = arith.constant 0 : i32
    %c0_i32_2 = arith.constant 0 : i32
    return %c0_i32, %c0_i32_0, %c0_i32_1 : i32, i32, i32
  }
  func.func @transform_5(%arg0: i32) -> (i32, i32, i32) {
    %c0_i32 = arith.constant 0 : i32
    %c0_i32_0 = arith.constant 0 : i32
    %c0_i32_1 = arith.constant 0 : i32
    %c0_i32_2 = arith.constant 0 : i32
    return %c0_i32, %c0_i32_0, %c0_i32_1 : i32, i32, i32
  }
  func.func @transform_6(%arg0: i32) -> (i32, i32, i32) {
    %c0_i32 = arith.constant 0 : i32
    %c0_i32_0 = arith.constant 0 : i32
    %c0_i32_1 = arith.constant 0 : i32
    %c0_i32_2 = arith.constant 0 : i32
    return %c0_i32, %c0_i32_0, %c0_i32_1 : i32, i32, i32
  }
  func.func @transform_7(%arg0: i32) -> (i32, i32, i32) {
    %c0_i32 = arith.constant 0 : i32
    %c0_i32_0 = arith.constant 0 : i32
    %c0_i32_1 = arith.constant 0 : i32
    %c0_i32_2 = arith.constant 0 : i32
    return %c0_i32, %c0_i32_0, %c0_i32_1 : i32, i32, i32
  }
  func.func @transform_8(%arg0: i32) -> (i32, i32, i32) {
    %c0_i32 = arith.constant 0 : i32
    %c0_i32_0 = arith.constant 0 : i32
    %c0_i32_1 = arith.constant 0 : i32
    %c0_i32_2 = arith.constant 0 : i32
    return %c0_i32, %c0_i32_0, %c0_i32_1 : i32, i32, i32
  }
  func.func @transform_9(%arg0: i32) -> (i32, i32, i32) {
    %c0_i32 = arith.constant 0 : i32
    %c0_i32_0 = arith.constant 0 : i32
    %c0_i32_1 = arith.constant 0 : i32
    %c0_i32_2 = arith.constant 0 : i32
    return %c0_i32, %c0_i32_0, %c0_i32_1 : i32, i32, i32
  }
  func.func @transform_10(%arg0: i32) -> (i32, i32, i32) {
    %c0_i32 = arith.constant 0 : i32
    %c0_i32_0 = arith.constant 0 : i32
    %c0_i32_1 = arith.constant 0 : i32
    %c0_i32_2 = arith.constant 0 : i32
    return %c0_i32, %c0_i32_0, %c0_i32_1 : i32, i32, i32
  }
  func.func @transform_11(%arg0: i32) -> (i32, i32) {
    %c0_i32 = arith.constant 0 : i32
    %c0_i32_0 = arith.constant 0 : i32
    %c0_i32_1 = arith.constant 0 : i32
    return %c0_i32, %c0_i32_0 : i32, i32
  }
  func.func @transform_12(%arg0: i32) -> (i32, i32) {
    %c0_i32 = arith.constant 0 : i32
    %c0_i32_0 = arith.constant 0 : i32
    %c0_i32_1 = arith.constant 0 : i32
    return %c0_i32, %c0_i32_0 : i32, i32
  }
  func.func @transform_13(%arg0: i32) -> (i32, i32) {
    %c0_i32 = arith.constant 0 : i32
    %c0_i32_0 = arith.constant 0 : i32
    %c0_i32_1 = arith.constant 0 : i32
    return %c0_i32, %c0_i32_0 : i32, i32
  }
  func.func @transform_14(%arg0: i32) -> (i32, i32) {
    %c0_i32 = arith.constant 0 : i32
    %c0_i32_0 = arith.constant 0 : i32
    %c0_i32_1 = arith.constant 0 : i32
    return %c0_i32, %c0_i32_0 : i32, i32
  }
  func.func @transform_15(%arg0: i32) -> (i32, i32) {
    %c0_i32 = arith.constant 0 : i32
    %c0_i32_0 = arith.constant 0 : i32
    %c0_i32_1 = arith.constant 0 : i32
    return %c0_i32, %c0_i32_0 : i32, i32
  }
  func.func @transform_16(%arg0: i32) -> (i32, i32) {
    %c0_i32 = arith.constant 0 : i32
    %c0_i32_0 = arith.constant 0 : i32
    %c0_i32_1 = arith.constant 0 : i32
    return %c0_i32, %c0_i32_0 : i32, i32
  }
  func.func @transform_17(%arg0: i32) -> (i32, i32) {
    %c0_i32 = arith.constant 0 : i32
    %c0_i32_0 = arith.constant 0 : i32
    %c0_i32_1 = arith.constant 0 : i32
    return %c0_i32, %c0_i32_0 : i32, i32
  }
  func.func @transform_18(%arg0: i32) -> (i32, i32, i32) {
    %c0_i32 = arith.constant 0 : i32
    %c0_i32_0 = arith.constant 0 : i32
    %c0_i32_1 = arith.constant 0 : i32
    return %arg0, %c0_i32, %c0_i32_0 : i32, i32, i32
  }
}

</mosaic_0001>

<llo_original>
// kernel: mul.30
$region0: #{mul.30}
  #allocation0 [shape = 's32[1]{0}', space=sflag, size = 0x4, scoped, tag = 'scoped memory for mul.30']
  %s0 = inlined_call_operand.vmem [shape: f32[2,1,64], index: 0, kind: input, shape index: {}]
  %s1 = inlined_call_operand.vmem [shape: f32[2,1,64], index: 1, kind: input, shape index: {}]
  %s2 = inlined_call_operand.vmem [shape: f32[2,1,64], index: 2, kind: output, shape index: {}]
  %v3 = vld [vmem:[%s0] sm:$0x1]
  %v4 = vld [vmem:[%s1] sm:$0x1]
  %5 = xla_tuple %v3, %v4
  %6 = xla_tuple %5
  %v7 = vmul.f32 %v3, %v4
  %8 = xla_tuple %v7
  %9 = vst [vmem:[%s2] sm:$0x1] %v7
  %s10 = scalar_lea.vmem %s0, 1
  %v11 = vld [vmem:[%s10] sm:$0x1]
  %s12 = scalar_lea.vmem %s1, 1
  %v13 = vld [vmem:[%s12] sm:$0x1]
  %14 = xla_tuple %v11, %v13
  %15 = xla_tuple %14
  %v16 = vmul.f32 %v11, %v13
  %17 = xla_tuple %v16
  %s18 = scalar_lea.vmem %s2, 1
  %19 = vst [vmem:[%s18] sm:$0x1] %v16

// kernel: beit_forward.1
$region0: #{beit_forward.1}
  #allocation0 [shape = 'u32[]', space=smem, size = 0x4, offset = 0x4, fixed_abs, tag = 'smem constant byte address 0x4 - core index']
  #allocation1 [shape = 'u32[144,128]{1,0:T(1,128)}', space=vmem, size = 0x12000, scoped, tag = 'internal scratch']
  %s0 = inlined_call_operand.vmem [shape: bf16[1,34,192], index: 0, kind: input, shape index: {}]
  %s1 = inlined_call_operand.vmem [shape: bf16[192,64], index: 1, kind: input, shape index: {}]
  %s2 = inlined_call_operand.vmem [shape: f32[34,64], index: 2, kind: input, shape index: {}]
  %s3 = inlined_call_operand.vmem [shape: f32[2,6,64], index: 3, kind: input, shape index: {}]
  %s4 = inlined_call_operand.vmem [shape: bf16[2,64,192], index: 4, kind: input, shape index: {}]
  %s5 = inlined_call_operand.vmem [shape: f32[2,1,192], index: 5, kind: input, shape index: {}]
  %s6 = inlined_call_operand.vmem [shape: bf16[2,64,64], index: 6, kind: input, shape index: {}]
  %s7 = inlined_call_operand.vmem [shape: bf16[2,64,256], index: 7, kind: input, shape index: {}]
  %s8 = inlined_call_operand.vmem [shape: f32[2,1,256], index: 8, kind: input, shape index: {}]
  %s9 = inlined_call_operand.vmem [shape: bf16[2,256,64], index: 9, kind: input, shape index: {}]
  %s10 = inlined_call_operand.vmem [shape: f32[2,136,34], index: 10, kind: input, shape index: {}]
  %s11 = inlined_call_operand.vmem [shape: f32[136,64], index: 11, kind: input, shape index: {}]
  %s12 = inlined_call_operand.vmem [shape: bf16[136,34], index: 12, kind: input, shape index: {}]
  %s13 = inlined_call_operand.vmem [shape: bf16[34,136], index: 13, kind: input, shape index: {}]
  %s14 = inlined_call_operand.vmem [shape: f32[2,34], index: 14, kind: input, shape index: {}]
  %s15 = inlined_call_operand.vmem [shape: f32[2,64], index: 15, kind: input, shape index: {}]
  %s16 = inlined_call_operand.vmem [shape: f32[64,128], index: 16, kind: input, shape index: {}]
  %s17 = inlined_call_operand.vmem [shape: f32[1,128], index: 17, kind: input, shape index: {}]
  %s18 = inlined_call_operand.hbm [shape: f32[1,2,128], index: 18, kind: output, shape index: {}]
  %s19 = sld [smem:[#allocation0]]
  $region82: #{beit_forward.1} parent=0
    _
  %s21 = ssub.s32 1, %s19
  %s22 = scalar_select 0, %s21, %s19
  $region1: #{beit_forward.1} parent=0
    #allocation2 [shape = 'u8[1024]{0}', space=vmem, size = 0x400, scoped, tag = 'output window, operand 0, single buffered']
    #allocation3 [shape = 's32[1]{0}', space=sflag, size = 0x4, scoped, tag = 'scoped memory for beit_forward.1']
    %23 = vsyncpa [#allocation3], 0
    // Predicated region
    $region2: #{beit_forward.1} parent=1 // pred_check
      _
    $region3: #{beit_forward.1} parent=1 // pred_check_branch
      %25 = sbr.rel (0) target = $region5
    $region4: #{beit_forward.1} parent=1 // pred_region
      _
    $region5: #{beit_forward.1} parent=1 // pred_fallthru
      _
    // Predicated region
    $region6: #{beit_forward.1} parent=1 // pred_check
      _
    $region7: #{beit_forward.1} parent=1 // pred_check_branch
      %27 = sbr.rel (0) target = $region9
    $region8: #{beit_forward.1} parent=1 // pred_region
      _
    $region9: #{beit_forward.1} parent=1 // pred_fallthru
      _
    // Predicated region
    $region10: #{beit_forward.1} parent=1 // pred_check
      _
    $region11: #{beit_forward.1} parent=1 // pred_check_branch
      %29 = sbr.rel (0) target = $region13
    $region12: #{beit_forward.1} parent=1 // pred_region
      _
    $region13: #{beit_forward.1} parent=1 // pred_fallthru
      _
    // Predicated region
    $region14: #{beit_forward.1} parent=1 // pred_check
      _
    $region15: #{beit_forward.1} parent=1 // pred_check_branch
      %31 = sbr.rel (0) target = $region17
    $region16: #{beit_forward.1} parent=1 // pred_region
      _
    $region17: #{beit_forward.1} parent=1 // pred_fallthru
      _
    // Predicated region
    $region18: #{beit_forward.1} parent=1 // pred_check
      _
    $region19: #{beit_forward.1} parent=1 // pred_check_branch
      %33 = sbr.rel (0) target = $region21
    $region20: #{beit_forward.1} parent=1 // pred_region
      _
    $region21: #{beit_forward.1} parent=1 // pred_fallthru
      _
    // Predicated region
    $region22: #{beit_forward.1} parent=1 // pred_check
      _
    $region23: #{beit_forward.1} parent=1 // pred_check_branch
      %35 = sbr.rel (0) target = $region25
    $region24: #{beit_forward.1} parent=1 // pred_region
      _
    $region25: #{beit_forward.1} parent=1 // pred_fallthru
      _
    // Predicated region
    $region26: #{beit_forward.1} parent=1 // pred_check
      _
    $region27: #{beit_forward.1} parent=1 // pred_check_branch
      %37 = sbr.rel (0) target = $region29
    $region28: #{beit_forward.1} parent=1 // pred_region
      _
    $region29: #{beit_forward.1} parent=1 // pred_fallthru
      _
    // Predicated region
    $region30: #{beit_forward.1} parent=1 // pred_check
      _
    $region31: #{beit_forward.1} parent=1 // pred_check_branch
      %39 = sbr.rel (0) target = $region33
    $region32: #{beit_forward.1} parent=1 // pred_region
      _
    $region33: #{beit_forward.1} parent=1 // pred_fallthru
      _
    // Predicated region
    $region34: #{beit_forward.1} parent=1 // pred_check
      _
    $region35: #{beit_forward.1} parent=1 // pred_check_branch
      %41 = sbr.rel (0) target = $region37
    $region36: #{beit_forward.1} parent=1 // pred_region
      _
    $region37: #{beit_forward.1} parent=1 // pred_fallthru
      _
    // Predicated region
    $region38: #{beit_forward.1} parent=1 // pred_check
      _
    $region39: #{beit_forward.1} parent=1 // pred_check_branch
      %43 = sbr.rel (0) target = $region41
    $region40: #{beit_forward.1} parent=1 // pred_region
      _
    $region41: #{beit_forward.1} parent=1 // pred_fallthru
      _
    // Predicated region
    $region42: #{beit_forward.1} parent=1 // pred_check
      _
    $region43: #{beit_forward.1} parent=1 // pred_check_branch
      %45 = sbr.rel (0) target = $region45
    $region44: #{beit_forward.1} parent=1 // pred_region
      _
    $region45: #{beit_forward.1} parent=1 // pred_fallthru
      _
    // Predicated region
    $region46: #{beit_forward.1} parent=1 // pred_check
      _
    $region47: #{beit_forward.1} parent=1 // pred_check_branch
      %47 = sbr.rel (0) target = $region49
    $region48: #{beit_forward.1} parent=1 // pred_region
      _
    $region49: #{beit_forward.1} parent=1 // pred_fallthru
      _
    // Predicated region
    $region50: #{beit_forward.1} parent=1 // pred_check
      _
    $region51: #{beit_forward.1} parent=1 // pred_check_branch
      %49 = sbr.rel (0) target = $region53
    $region52: #{beit_forward.1} parent=1 // pred_region
      _
    $region53: #{beit_forward.1} parent=1 // pred_fallthru
      _
    // Predicated region
    $region54: #{beit_forward.1} parent=1 // pred_check
      _
    $region55: #{beit_forward.1} parent=1 // pred_check_branch
      %51 = sbr.rel (0) target = $region57
    $region56: #{beit_forward.1} parent=1 // pred_region
      _
    $region57: #{beit_forward.1} parent=1 // pred_fallthru
      _
    // Predicated region
    $region58: #{beit_forward.1} parent=1 // pred_check
      _
    $region59: #{beit_forward.1} parent=1 // pred_check_branch
      %53 = sbr.rel (0) target = $region61
    $region60: #{beit_forward.1} parent=1 // pred_region
      _
    $region61: #{beit_forward.1} parent=1 // pred_fallthru
      _
    // Predicated region
    $region62: #{beit_forward.1} parent=1 // pred_check
      _
    $region63: #{beit_forward.1} parent=1 // pred_check_branch
      %55 = sbr.rel (0) target = $region65
    $region64: #{beit_forward.1} parent=1 // pred_region
      _
    $region65: #{beit_forward.1} parent=1 // pred_fallthru
      _
    // Predicated region
    $region66: #{beit_forward.1} parent=1 // pred_check
      _
    $region67: #{beit_forward.1} parent=1 // pred_check_branch
      %57 = sbr.rel (0) target = $region69
    $region68: #{beit_forward.1} parent=1 // pred_region
      _
    $region69: #{beit_forward.1} parent=1 // pred_fallthru
      _
    // Predicated region
    $region70: #{beit_forward.1} parent=1 // pred_check
      _
    $region71: #{beit_forward.1} parent=1 // pred_check_branch
      %59 = sbr.rel (0) target = $region73
    $region72: #{beit_forward.1} parent=1 // pred_region
      _
    $region73: #{beit_forward.1} parent=1 // pred_fallthru
      _
    %v61 = vld [vmem:[%s11] sm:$0xff]
    %v62 = vld [vmem:[%s11 + $0x8] sm:$0xff]
    %v63 = vld [vmem:[%s11 + $0x10] sm:$0xff]
    %v64 = vld [vmem:[%s11 + $0x18] sm:$0xff]
    %v65 = vld [vmem:[%s11 + $0x20] sm:$0xff]
    %v66 = vld [vmem:[%s11 + $0x28] sm:$0xff]
    %v67 = vld [vmem:[%s11 + $0x30] sm:$0xff]
    %v68 = vld [vmem:[%s11 + $0x38] sm:$0xff]
    %v69 = vld [vmem:[%s11 + $0x40] sm:$0xff]
    %v70 = vld [vmem:[%s11 + $0x48] sm:$0xff]
    %v71 = vld [vmem:[%s11 + $0x50] sm:$0xff]
    %v72 = vld [vmem:[%s11 + $0x58] sm:$0xff]
    %v73 = vld [vmem:[%s11 + $0x60] sm:$0xff]
    %v74 = vld [vmem:[%s11 + $0x68] sm:$0xff]
    %v75 = vld [vmem:[%s11 + $0x70] sm:$0xff]
    %v76 = vld [vmem:[%s11 + $0x78] sm:$0xff]
    %v77 = vld [vmem:[%s11 + $0x80] sm:$0xff]
    %v78 = vld [vmem:[%s12] sm:$0xf]
    %v79 = vld [vmem:[%s12 + $0x4] sm:$0xf]
    %v80 = vld [vmem:[%s12 + $0x8] sm:$0xf]
    %v81 = vld [vmem:[%s12 + $0xc] sm:$0xf]
    %v82 = vld [vmem:[%s12 + $0x10] sm:$0xf]
    %v83 = vld [vmem:[%s12 + $0x14] sm:$0xf]
    %v84 = vld [vmem:[%s12 + $0x18] sm:$0xf]
    %v85 = vld [vmem:[%s12 + $0x1c] sm:$0xf]
    %v86 = vld [vmem:[%s12 + $0x20] sm:$0xf]
    %v87 = vld [vmem:[%s12 + $0x24] sm:$0xf]
    %v88 = vld [vmem:[%s12 + $0x28] sm:$0xf]
    %v89 = vld [vmem:[%s12 + $0x2c] sm:$0xf]
    %v90 = vld [vmem:[%s12 + $0x30] sm:$0xf]
    %v91 = vld [vmem:[%s12 + $0x34] sm:$0xf]
    %v92 = vld [vmem:[%s12 + $0x38] sm:$0xf]
    %v93 = vld [vmem:[%s12 + $0x3c] sm:$0xf]
    %v94 = vld [vmem:[%s12 + $0x40] sm:$0xf]
    %v95 = vld [vmem:[%s13] sm:$0xff]
    %v96 = vld [vmem:[%s13 + $0x8] sm:$0xff]
    %v97 = vld [vmem:[%s13 + $0x10] sm:$0xff]
    %v98 = vld [vmem:[%s13 + $0x18] sm:$0xff]
    %v99 = vld [vmem:[%s13 + $0x20] sm:$0x11]
    %v100 = vld [vmem:[%s15] sm:$0x3]
    %v101 = vld [vmem:[%s0] sm:$0xff]
    %v102 = vld [vmem:[%s0 + $0x8] sm:$0xff]
    %v103 = vld [vmem:[%s0 + $0x10] sm:$0xff]
    %v104 = vld [vmem:[%s0 + $0x18] sm:$0xff]
    %v105 = vld [vmem:[%s0 + $0x20] sm:$0x11]
    %v106 = vld [vmem:[%s1] sm:$0xf]
    %v107 = vld [vmem:[%s1 + $0x4] sm:$0xf]
    %v108 = vld [vmem:[%s1 + $0x8] sm:$0xf]
    %v109 = vld [vmem:[%s1 + $0xc] sm:$0xf]
    %v110 = vld [vmem:[%s1 + $0x10] sm:$0xf]
    %v111 = vld [vmem:[%s1 + $0x14] sm:$0xf]
    %v112 = vld [vmem:[%s1 + $0x18] sm:$0xf]
    %v113 = vld [vmem:[%s1 + $0x1c] sm:$0xf]
    %v114 = vld [vmem:[%s1 + $0x20] sm:$0xf]
    %v115 = vld [vmem:[%s1 + $0x24] sm:$0xf]
    %v116 = vld [vmem:[%s1 + $0x28] sm:$0xf]
    %v117 = vld [vmem:[%s1 + $0x2c] sm:$0xf]
    %v118 = vld [vmem:[%s1 + $0x30] sm:$0xf]
    %v119 = vld [vmem:[%s1 + $0x34] sm:$0xf]
    %v120 = vld [vmem:[%s1 + $0x38] sm:$0xf]
    %v121 = vld [vmem:[%s1 + $0x3c] sm:$0xf]
    %v122 = vld [vmem:[%s1 + $0x40] sm:$0xf]
    %v123 = vld [vmem:[%s1 + $0x44] sm:$0xf]
    %v124 = vld [vmem:[%s1 + $0x48] sm:$0xf]
    %v125 = vld [vmem:[%s1 + $0x4c] sm:$0xf]
    %v126 = vld [vmem:[%s1 + $0x50] sm:$0xf]
    %v127 = vld [vmem:[%s1 + $0x54] sm:$0xf]
    %v128 = vld [vmem:[%s1 + $0x58] sm:$0xf]
    %v129 = vld [vmem:[%s1 + $0x5c] sm:$0xf]
    %v130 = vld [vmem:[%s2] sm:$0xff]
    %v131 = vld [vmem:[%s2 + $0x8] sm:$0xff]
    %v132 = vld [vmem:[%s2 + $0x10] sm:$0xff]
    %v133 = vld [vmem:[%s2 + $0x18] sm:$0xff]
    %v134 = vld [vmem:[%s2 + $0x20] sm:$0x3]
    %v140 = vunpack.c.l.b16 %v101
    %v141 = vunpack.c.h.b16 %v101
    %v142 = vunpack.c.l.b16 %v102
    %v143 = vunpack.c.h.b16 %v102
    %v144 = vunpack.c.l.b16 %v103
    %v145 = vunpack.c.h.b16 %v103
    %v146 = vunpack.c.l.b16 %v104
    %v147 = vunpack.c.h.b16 %v104
    %v148 = vunpack.c.l.b16 %v105
    %v149 = vunpack.c.h.b16 %v105
    %v150 = vpack.c.b16 %v142, %v140
    %v151 = vpack.c.b16 %v143, %v141
    %v152 = vpack.c.b16 %v146, %v144
    %v153 = vpack.c.b16 %v147, %v145
    %v154 = vpack.c.b16 %v148, %v148
    %v155 = vpack.c.b16 %v149, %v149
    %v183 = vunpack.c.l.b16 %v106
    %v184 = vunpack.c.l.b16 %v107
    %v185 = vunpack.c.l.b16 %v108
    %v186 = vunpack.c.l.b16 %v109
    %v187 = vunpack.c.l.b16 %v110
    %v188 = vunpack.c.l.b16 %v111
    %v189 = vunpack.c.l.b16 %v112
    %v190 = vunpack.c.l.b16 %v113
    %v191 = vunpack.c.l.b16 %v114
    %v192 = vunpack.c.l.b16 %v115
    %v193 = vunpack.c.l.b16 %v116
    %v194 = vunpack.c.l.b16 %v117
    %v195 = vunpack.c.l.b16 %v118
    %v196 = vunpack.c.l.b16 %v119
    %v197 = vunpack.c.l.b16 %v120
    %v198 = vunpack.c.l.b16 %v121
    %v199 = vunpack.c.l.b16 %v122
    %v200 = vunpack.c.l.b16 %v123
    %v201 = vunpack.c.l.b16 %v124
    %v202 = vunpack.c.l.b16 %v125
    %v203 = vunpack.c.l.b16 %v126
    %v204 = vunpack.c.l.b16 %v127
    %v205 = vunpack.c.l.b16 %v128
    %v206 = vunpack.c.l.b16 %v129
    %v207 = vpack.c.b16 %v184, %v183
    %v208 = vpack.c.b16 %v186, %v185
    %v209 = vpack.c.b16 %v188, %v187
    %v210 = vpack.c.b16 %v190, %v189
    %v211 = vpack.c.b16 %v192, %v191
    %v212 = vpack.c.b16 %v194, %v193
    %v213 = vpack.c.b16 %v196, %v195
    %v214 = vpack.c.b16 %v198, %v197
    %v215 = vpack.c.b16 %v200, %v199
    %v216 = vpack.c.b16 %v202, %v201
    %v217 = vpack.c.b16 %v204, %v203
    %v218 = vpack.c.b16 %v206, %v205
    %vm231 = vcmask 523264
    %v233 = vsel %vm231, %v151, 0
    %v236 = vsel %vm231, %v153, 0
    %v239 = vsel %vm231, %v155, 0
    %241 = vmatprep.subr.bf16.mxu0 0
    %242 = vmatpush1.bf16.msra.mxu0 %v207
    %243 = vmatprep.subr.bf16.mxu0 0
    %244 = vmatpush1.bf16.msra.mxu0 %v208
    %245 = vmatprep.subr.bf16.mxu0 0
    %246 = vmatpush1.bf16.msra.mxu0 %v209
    %247 = vmatprep.subr.bf16.mxu0 0
    %248 = vmatpush1.bf16.msra.mxu0 %v210
    %249 = vmatprep.subr.bf16.mxu0 0
    %250 = vmatpush1.bf16.msra.mxu0 %v211
    %251 = vmatprep.subr.bf16.mxu0 0
    %252 = vmatpush1.bf16.msra.mxu0 %v212
    %253 = vmatprep.subr.bf16.mxu0 0
    %254 = vmatpush1.bf16.msra.mxu0 %v213
    %255 = vmatprep.subr.bf16.mxu0 0
    %256 = vmatpush1.bf16.msra.mxu0 %v214
    %257 = vmatprep.subr.bf16.mxu0 0
    %258 = vmatpush1.bf16.msra.mxu0 %v215
    %259 = vmatprep.subr.bf16.mxu0 0
    %260 = vmatpush1.bf16.msra.mxu0 %v216
    %261 = vmatprep.subr.bf16.mxu0 0
    %262 = vmatpush1.bf16.msra.mxu0 %v217
    %263 = vmatprep.subr.bf16.mxu0 0
    %264 = vmatpush1.bf16.msra.mxu0 %v218
    %265 = vmatprep.subr.bf16.mxu0 0
    %266 = vmatpush1.bf16.msra.mxu0 0
    %267 = vmatprep.subr.bf16.mxu0 0
    %268 = vmatpush1.bf16.msra.mxu0 0
    %269 = vmatprep.subr.bf16.mxu0 0
    %270 = vmatpush1.bf16.msra.mxu0 0
    %271 = vmatprep.subr.bf16.mxu0 0
    %272 = vmatpush1.bf16.msra.mxu0 0
    %273 = vmatprep.mubr.bf16.mxu0 %v233
    %274 = vmatmul.mubr.bf16.gmra.mrb[0].mxu0 %v150
    %v275 = vpop.f32.mrb[0].mxu0
    %v276 = vadd.f32 %v130, %v275
    %v277 = vpop.f32.mrb[0].mxu0
    %v278 = vpop.f32.mrb[0].mxu0
    %v279 = vadd.f32 %v131, %v278
    %v280 = vpop.f32.mrb[0].mxu0
    %281 = vmatprep.mubr.bf16.mxu0 %v236
    %282 = vmatmul.mubr.bf16.gmra.mrb[0].mxu0 %v152
    %v283 = vpop.f32.mrb[0].mxu0
    %v284 = vadd.f32 %v132, %v283
    %v285 = vpop.f32.mrb[0].mxu0
    %v286 = vpop.f32.mrb[0].mxu0
    %v287 = vadd.f32 %v133, %v286
    %v288 = vpop.f32.mrb[0].mxu0
    %289 = vmatprep.mubr.bf16.mxu0 %v239
    %290 = vmatmul.mubr.bf16.gmra.mrb[0].mxu0 %v154
    %v291 = vpop.f32.mrb[0].mxu0
    %v292 = vadd.f32 %v134, %v291
    %v293 = vpop.f32.mrb[0].mxu0
    %v294 = vpop.f32.mrb[0].mxu0
    %v295 = vpop.f32.mrb[0].mxu0
    %296 = vdwg.mxu0
    %v297 = vld [vmem:[%s3] sm:$0x3f]
    %v298 = vsel %vm231, %v276, 0.0
    %299 = vadd.xlane.f32.xlu0 %v298
    %v300 = vpop.xlane.xlu0 %299
    %v301 = vsel %vm231, %v279, 0.0
    %302 = vadd.xlane.f32.xlu0 %v301
    %v303 = vpop.xlane.xlu0 %302
    %v304 = vsel %vm231, %v284, 0.0
    %305 = vadd.xlane.f32.xlu0 %v304
    %v306 = vpop.xlane.xlu0 %305
    %v307 = vsel %vm231, %v287, 0.0
    %308 = vadd.xlane.f32.xlu0 %v307
    %v309 = vpop.xlane.xlu0 %308
    %vm310 = vcmask 517120
    %v311 = vsel %vm310, %v292, 0.0
    %312 = vadd.xlane.f32.xlu0 %v311
    %v313 = vpop.xlane.xlu0 %312
    %v314 = vrcp.pop 64.0
    %v315 = vmul.f32 %v300, %v314
    %v316 = vmul.f32 %v303, %v314
    %v317 = vmul.f32 %v306, %v314
    %v318 = vmul.f32 %v309, %v314
    %v319 = vmul.f32 %v313, %v314
    %v320 = vsub.f32 %v276, %v315
    %v321 = vsub.f32 %v279, %v316
    %v322 = vsub.f32 %v284, %v317
    %v323 = vsub.f32 %v287, %v318
    %v324 = vsub.f32 %v292, %v319
    %v325 = vmul.f32 %v320, %v320
    %v326 = vmul.f32 %v321, %v321
    %v327 = vmul.f32 %v322, %v322
    %v328 = vmul.f32 %v323, %v323
    %v329 = vmul.f32 %v324, %v324
    %v330 = vsel %vm231, %v325, 0.0
    %331 = vadd.xlane.f32.xlu0 %v330
    %v332 = vpop.xlane.xlu0 %331
    %v333 = vsel %vm231, %v326, 0.0
    %334 = vadd.xlane.f32.xlu0 %v333
    %v335 = vpop.xlane.xlu0 %334
    %v336 = vsel %vm231, %v327, 0.0
    %337 = vadd.xlane.f32.xlu0 %v336
    %v338 = vpop.xlane.xlu0 %337
    %v339 = vsel %vm231, %v328, 0.0
    %340 = vadd.xlane.f32.xlu0 %v339
    %v341 = vpop.xlane.xlu0 %340
    %v342 = vsel %vm310, %v329, 0.0
    %343 = vadd.xlane.f32.xlu0 %v342
    %v344 = vpop.xlane.xlu0 %343
    %v345 = vmul.f32 %v332, %v314
    %v346 = vmul.f32 %v335, %v314
    %v347 = vmul.f32 %v338, %v314
    %v348 = vmul.f32 %v341, %v314
    %v349 = vmul.f32 %v344, %v314
    %v350 = vadd.f32 %v345, 1e-06
    %v351 = vadd.f32 %v346, 1e-06
    %v352 = vadd.f32 %v347, 1e-06
    %v353 = vadd.f32 %v348, 1e-06
    %v354 = vadd.f32 %v349, 1e-06
    %v355 = vrsqrt.pop %v350
    %v356 = vrsqrt.pop %v351
    %v357 = vrsqrt.pop %v352
    %v358 = vrsqrt.pop %v353
    %v359 = vrsqrt.pop %v354
    %v360 = vmul.f32 %v320, %v355
    %v361 = vmul.f32 %v321, %v356
    %v362 = vmul.f32 %v322, %v357
    %v363 = vmul.f32 %v323, %v358
    %v364 = vmul.f32 %v324, %v359
    %v365 = vlaneseq
    %v366 = vshrl.u32 %v365, 7
    %v367 = vsub.s32 0, %v366
    %v368 = vrot.slane %v297, %v367
    %v369 = vmul.f32 %v360, %v368
    %v370 = vmul.f32 %v361, %v368
    %v371 = vmul.f32 %v362, %v368
    %v372 = vmul.f32 %v363, %v368
    %v373 = vmul.f32 %v364, %v368
    %v374 = vlaneseq
    %v375 = vshrl.u32 %v374, 7
    %v376 = vsub.s32 1, %v375
    %v377 = vrot.slane %v297, %v376
    %v378 = vadd.f32 %v369, %v377
    %v379 = vadd.f32 %v370, %v377
    %v380 = vadd.f32 %v371, %v377
    %v381 = vadd.f32 %v372, %v377
    %v382 = vadd.f32 %v373, %v377
    %v383 = vpack.c.bf16 %v379, %v378
    %v384 = vpack.c.bf16 %v381, %v380
    %v385 = vpack.c.bf16 %v382, %v382
    %v386 = vld [vmem:[%s4] sm:$0xff]
    %v387 = vld [vmem:[%s4 + $0x8] sm:$0xff]
    %v388 = vld [vmem:[%s4 + $0x10] sm:$0xff]
    %v389 = vld [vmem:[%s4 + $0x18] sm:$0xff]
    %v390 = vld [vmem:[%s4 + $0x20] sm:$0xff]
    %v391 = vld [vmem:[%s4 + $0x28] sm:$0xff]
    %v392 = vld [vmem:[%s4 + $0x30] sm:$0xff]
    %v393 = vld [vmem:[%s4 + $0x38] sm:$0xff]
    %v394 = vld [vmem:[%s5] sm:$0x3]
    %v396 = vlaneseq
    %v397 = vshrl.u32 %v396, 7
    %v398 = vsub.s32 0, %v397
    %v399 = vrot.slane %v394, %v398
    %v400 = vlaneseq
    %v401 = vshrl.u32 %v400, 7
    %v402 = vsub.s32 1, %v401
    %v403 = vrot.slane %v394, %v402
    %v414 = vunpack.c.l.b16 %v386
    %v415 = vunpack.c.h.b16 %v386
    %v416 = vunpack.c.l.b16 %v387
    %v417 = vunpack.c.h.b16 %v387
    %v418 = vunpack.c.l.b16 %v388
    %v419 = vunpack.c.h.b16 %v388
    %v420 = vunpack.c.l.b16 %v389
    %v421 = vunpack.c.h.b16 %v389
    %v422 = vunpack.c.l.b16 %v390
    %v423 = vunpack.c.h.b16 %v390
    %v424 = vunpack.c.l.b16 %v391
    %v425 = vunpack.c.h.b16 %v391
    %v426 = vunpack.c.l.b16 %v392
    %v427 = vunpack.c.h.b16 %v392
    %v428 = vunpack.c.l.b16 %v393
    %v429 = vunpack.c.h.b16 %v393
    %v430 = vpack.c.b16 %v416, %v414
    %v431 = vpack.c.b16 %v417, %v415
    %v432 = vpack.c.b16 %v420, %v418
    %v433 = vpack.c.b16 %v421, %v419
    %v434 = vpack.c.b16 %v424, %v422
    %v435 = vpack.c.b16 %v425, %v423
    %v436 = vpack.c.b16 %v428, %v426
    %v437 = vpack.c.b16 %v429, %v427
    %v447 = vsel %vm231, %v383, 0
    %v450 = vsel %vm231, %v384, 0
    %v453 = vsel %vm231, %v385, 0
    %455 = vmatprep.subr.bf16.mxu0 %v431
    %456 = vmatpush1.bf16.msra.mxu0 %v430
    %457 = vmatprep.subr.bf16.mxu0 %v433
    %458 = vmatpush1.bf16.msra.mxu0 %v432
    %459 = vmatprep.subr.bf16.mxu0 %v435
    %460 = vmatpush1.bf16.msra.mxu0 %v434
    %461 = vmatprep.subr.bf16.mxu0 %v437
    %462 = vmatpush1.bf16.msra.mxu0 %v436
    %463 = vmatprep.subr.bf16.mxu0 0
    %464 = vmatpush1.bf16.msra.mxu0 0
    %465 = vmatprep.subr.bf16.mxu0 0
    %466 = vmatpush1.bf16.msra.mxu0 0
    %467 = vmatprep.subr.bf16.mxu0 0
    %468 = vmatpush1.bf16.msra.mxu0 0
    %469 = vmatprep.subr.bf16.mxu0 0
    %470 = vmatpush1.bf16.msra.mxu0 0
    %471 = vmatprep.subr.bf16.mxu0 0
    %472 = vmatpush1.bf16.msra.mxu0 0
    %473 = vmatprep.subr.bf16.mxu0 0
    %474 = vmatpush1.bf16.msra.mxu0 0
    %475 = vmatprep.subr.bf16.mxu0 0
    %476 = vmatpush1.bf16.msra.mxu0 0
    %477 = vmatprep.subr.bf16.mxu0 0
    %478 = vmatpush1.bf16.msra.mxu0 0
    %479 = vmatprep.subr.bf16.mxu0 0
    %480 = vmatpush1.bf16.msra.mxu0 0
    %481 = vmatprep.subr.bf16.mxu0 0
    %482 = vmatpush1.bf16.msra.mxu0 0
    %483 = vmatprep.subr.bf16.mxu0 0
    %484 = vmatpush1.bf16.msra.mxu0 0
    %485 = vmatprep.subr.bf16.mxu0 0
    %486 = vmatpush1.bf16.msra.mxu0 0
    %487 = vmatprep.mubr.bf16.mxu0 0
    %488 = vmatmul.mubr.bf16.gmra.mrb[0].mxu0 %v447
    %v489 = vpop.f32.mrb[0].mxu0
    %v490 = vadd.f32 %v399, %v489
    %v491 = vpop.f32.mrb[0].mxu0
    %v492 = vadd.f32 %v403, %v491
    %v493 = vpop.f32.mrb[0].mxu0
    %v494 = vadd.f32 %v399, %v493
    %v495 = vpop.f32.mrb[0].mxu0
    %v496 = vadd.f32 %v403, %v495
    %497 = vmatprep.mubr.bf16.mxu0 0
    %498 = vmatmul.mubr.bf16.gmra.mrb[0].mxu0 %v450
    %v499 = vpop.f32.mrb[0].mxu0
    %v500 = vadd.f32 %v399, %v499
    %v501 = vpop.f32.mrb[0].mxu0
    %v502 = vadd.f32 %v403, %v501
    %v503 = vpop.f32.mrb[0].mxu0
    %v504 = vadd.f32 %v399, %v503
    %v505 = vpop.f32.mrb[0].mxu0
    %v506 = vadd.f32 %v403, %v505
    %507 = vmatprep.mubr.bf16.mxu0 0
    %508 = vmatmul.mubr.bf16.gmra.mrb[0].mxu0 %v453
    %v509 = vpop.f32.mrb[0].mxu0
    %v510 = vadd.f32 %v399, %v509
    %v511 = vpop.f32.mrb[0].mxu0
    %v512 = vadd.f32 %v403, %v511
    %v513 = vpop.f32.mrb[0].mxu0
    %v514 = vpop.f32.mrb[0].mxu0
    %515 = vdwg.mxu0
    %v516 = vpack.c.bf16 %v494, %v490
    %v517 = vpack.c.bf16 %v504, %v500
    %v518 = vpack.c.bf16 %v510, %v510
    %v519 = vpack.c.bf16 %v496, %v492
    %v520 = vpack.c.bf16 %v506, %v502
    %v521 = vpack.c.bf16 %v512, %v512
    %v539 = vunpack.c.l.b16 %v78
    %v540 = vunpack.c.l.b16 %v79
    %v541 = vunpack.c.l.b16 %v80
    %v542 = vunpack.c.l.b16 %v81
    %v543 = vunpack.c.l.b16 %v82
    %v544 = vunpack.c.l.b16 %v83
    %v545 = vunpack.c.l.b16 %v84
    %v546 = vunpack.c.l.b16 %v85
    %v547 = vunpack.c.l.b16 %v86
    %v548 = vunpack.c.l.b16 %v87
    %v549 = vunpack.c.l.b16 %v88
    %v550 = vunpack.c.l.b16 %v89
    %v551 = vunpack.c.l.b16 %v90
    %v552 = vunpack.c.l.b16 %v91
    %v553 = vunpack.c.l.b16 %v92
    %v554 = vunpack.c.l.b16 %v93
    %v555 = vunpack.c.l.b16 %v94
    %v556 = vpack.c.b16 %v540, %v539
    %v557 = vpack.c.b16 %v542, %v541
    %v558 = vpack.c.b16 %v544, %v543
    %v559 = vpack.c.b16 %v546, %v545
    %v560 = vpack.c.b16 %v548, %v547
    %v561 = vpack.c.b16 %v550, %v549
    %v562 = vpack.c.b16 %v552, %v551
    %v563 = vpack.c.b16 %v554, %v553
    %v564 = vpack.c.b16 %v555, %v555
    %vm565 = vcmask 277504
    %v567 = vsel %vm565, %v556, 0
    %v570 = vsel %vm565, %v557, 0
    %v573 = vsel %vm565, %v558, 0
    %v576 = vsel %vm565, %v559, 0
    %v579 = vsel %vm565, %v560, 0
    %v582 = vsel %vm565, %v561, 0
    %v585 = vsel %vm565, %v562, 0
    %v588 = vsel %vm565, %v563, 0
    %v591 = vsel %vm565, %v564, 0
    %vm593 = vcmask 1040384
    %v595 = vsel %vm593, %v518, 0
    %597 = vmatprep.subr.bf16.mxu0 0
    %598 = vmatpush1.bf16.msra.mxu0 %v516
    %599 = vmatprep.subr.bf16.mxu0 0
    %600 = vmatpush1.bf16.msra.mxu0 %v517
    %601 = vmatprep.subr.bf16.mxu0 0
    %602 = vmatpush1.bf16.msra.mxu0 %v595
    %603 = vmatprep.subr.bf16.mxu0 0
    %604 = vmatpush1.bf16.msra.mxu0 0
    %605 = vmatprep.subr.bf16.mxu0 0
    %606 = vmatpush1.bf16.msra.mxu0 0
    %607 = vmatprep.subr.bf16.mxu0 0
    %608 = vmatpush1.bf16.msra.mxu0 0
    %609 = vmatprep.subr.bf16.mxu0 0
    %610 = vmatpush1.bf16.msra.mxu0 0
    %611 = vmatprep.subr.bf16.mxu0 0
    %612 = vmatpush1.bf16.msra.mxu0 0
    %613 = vmatprep.subr.bf16.mxu0 0
    %614 = vmatpush1.bf16.msra.mxu0 0
    %615 = vmatprep.subr.bf16.mxu0 0
    %616 = vmatpush1.bf16.msra.mxu0 0
    %617 = vmatprep.subr.bf16.mxu0 0
    %618 = vmatpush1.bf16.msra.mxu0 0
    %619 = vmatprep.subr.bf16.mxu0 0
    %620 = vmatpush1.bf16.msra.mxu0 0
    %621 = vmatprep.subr.bf16.mxu0 0
    %622 = vmatpush1.bf16.msra.mxu0 0
    %623 = vmatprep.subr.bf16.mxu0 0
    %624 = vmatpush1.bf16.msra.mxu0 0
    %625 = vmatprep.subr.bf16.mxu0 0
    %626 = vmatpush1.bf16.msra.mxu0 0
    %627 = vmatprep.subr.bf16.mxu0 0
    %628 = vmatpush1.bf16.msra.mxu0 0
    %629 = vmatprep.mubr.bf16.mxu0 0
    %630 = vmatmul.mubr.bf16.gmra.mrb[0].mxu0 %v567
    %v631 = vpop.f32.mrb[0].mxu0
    %v632 = vadd.f32 0.0, %v631
    %v633 = vpop.f32.mrb[0].mxu0
    %v634 = vpop.f32.mrb[0].mxu0
    %v635 = vadd.f32 0.0, %v634
    %v636 = vpop.f32.mrb[0].mxu0
    %637 = vmatprep.mubr.bf16.mxu0 0
    %638 = vmatmul.mubr.bf16.gmra.mrb[0].mxu0 %v570
    %v639 = vpop.f32.mrb[0].mxu0
    %v640 = vadd.f32 0.0, %v639
    %v641 = vpop.f32.mrb[0].mxu0
    %v642 = vpop.f32.mrb[0].mxu0
    %v643 = vadd.f32 0.0, %v642
    %v644 = vpop.f32.mrb[0].mxu0
    %645 = vmatprep.mubr.bf16.mxu0 0
    %646 = vmatmul.mubr.bf16.gmra.mrb[0].mxu0 %v573
    %v647 = vpop.f32.mrb[0].mxu0
    %v648 = vadd.f32 0.0, %v647
    %v649 = vpop.f32.mrb[0].mxu0
    %v650 = vpop.f32.mrb[0].mxu0
    %v651 = vadd.f32 0.0, %v650
    %v652 = vpop.f32.mrb[0].mxu0
    %653 = vmatprep.mubr.bf16.mxu0 0
    %654 = vmatmul.mubr.bf16.gmra.mrb[0].mxu0 %v576
    %v655 = vpop.f32.mrb[0].mxu0
    %v656 = vadd.f32 0.0, %v655
    %v657 = vpop.f32.mrb[0].mxu0
    %v658 = vpop.f32.mrb[0].mxu0
    %v659 = vadd.f32 0.0, %v658
    %v660 = vpop.f32.mrb[0].mxu0
    %661 = vmatprep.mubr.bf16.mxu0 0
    %662 = vmatmul.mubr.bf16.gmra.mrb[0].mxu0 %v579
    %v663 = vpop.f32.mrb[0].mxu0
    %v664 = vadd.f32 0.0, %v663
    %v665 = vpop.f32.mrb[0].mxu0
    %v666 = vpop.f32.mrb[0].mxu0
    %v667 = vadd.f32 0.0, %v666
    %v668 = vpop.f32.mrb[0].mxu0
    %669 = vmatprep.mubr.bf16.mxu0 0
    %670 = vmatmul.mubr.bf16.gmra.mrb[0].mxu0 %v582
    %v671 = vpop.f32.mrb[0].mxu0
    %v672 = vadd.f32 0.0, %v671
    %v673 = vpop.f32.mrb[0].mxu0
    %v674 = vpop.f32.mrb[0].mxu0
    %v675 = vadd.f32 0.0, %v674
    %v676 = vpop.f32.mrb[0].mxu0
    %677 = vmatprep.mubr.bf16.mxu0 0
    %678 = vmatmul.mubr.bf16.gmra.mrb[0].mxu0 %v585
    %v679 = vpop.f32.mrb[0].mxu0
    %v680 = vadd.f32 0.0, %v679
    %v681 = vpop.f32.mrb[0].mxu0
    %v682 = vpop.f32.mrb[0].mxu0
    %v683 = vadd.f32 0.0, %v682
    %v684 = vpop.f32.mrb[0].mxu0
    %685 = vmatprep.mubr.bf16.mxu0 0
    %686 = vmatmul.mubr.bf16.gmra.mrb[0].mxu0 %v588
    %v687 = vpop.f32.mrb[0].mxu0
    %v688 = vadd.f32 0.0, %v687
    %v689 = vpop.f32.mrb[0].mxu0
    %v690 = vpop.f32.mrb[0].mxu0
    %v691 = vadd.f32 0.0, %v690
    %v692 = vpop.f32.mrb[0].mxu0
    %693 = vmatprep.mubr.bf16.mxu0 0
    %694 = vmatmul.mubr.bf16.gmra.mrb[0].mxu0 %v591
    %v695 = vpop.f32.mrb[0].mxu0
    %v696 = vadd.f32 0.0, %v695
    %v697 = vpop.f32.mrb[0].mxu0
    %v698 = vpop.f32.mrb[0].mxu0
    %v699 = vpop.f32.mrb[0].mxu0
    %700 = vdwg.mxu0
    %v701 = vmul.f32 %v632, %v61
    %v702 = vmul.f32 %v635, %v62
    %v703 = vmul.f32 %v640, %v63
    %v704 = vmul.f32 %v643, %v64
    %v705 = vmul.f32 %v648, %v65
    %v706 = vmul.f32 %v651, %v66
    %v707 = vmul.f32 %v656, %v67
    %v708 = vmul.f32 %v659, %v68
    %v709 = vmul.f32 %v664, %v69
    %v710 = vmul.f32 %v667, %v70
    %v711 = vmul.f32 %v672, %v71
    %v712 = vmul.f32 %v675, %v72
    %v713 = vmul.f32 %v680, %v73
    %v714 = vmul.f32 %v683, %v74
    %v715 = vmul.f32 %v688, %v75
    %v716 = vmul.f32 %v691, %v76
    %v717 = vmul.f32 %v696, %v77
    %v718 = vpack.c.bf16 %v702, %v701
    %v719 = vpack.c.bf16 %v704, %v703
    %v720 = vpack.c.bf16 %v706, %v705
    %v721 = vpack.c.bf16 %v708, %v707
    %v722 = vpack.c.bf16 %v710, %v709
    %v723 = vpack.c.bf16 %v712, %v711
    %v724 = vpack.c.bf16 %v714, %v713
    %v725 = vpack.c.bf16 %v716, %v715
    %v726 = vpack.c.bf16 %v717, %v717
    %v727 = vld [vmem:[%s10] sm:$0xff]
    %v728 = vld [vmem:[%s10 + $0x8] sm:$0xff]
    %v729 = vld [vmem:[%s10 + $0x10] sm:$0xff]
    %v730 = vld [vmem:[%s10 + $0x18] sm:$0xff]
    %v731 = vld [vmem:[%s10 + $0x20] sm:$0xff]
    %v732 = vld [vmem:[%s10 + $0x28] sm:$0xff]
    %v733 = vld [vmem:[%s10 + $0x30] sm:$0xff]
    %v734 = vld [vmem:[%s10 + $0x38] sm:$0xff]
    %v735 = vld [vmem:[%s10 + $0x40] sm:$0xff]
    %v736 = vld [vmem:[%s10 + $0x48] sm:$0xff]
    %v737 = vld [vmem:[%s10 + $0x50] sm:$0xff]
    %v738 = vld [vmem:[%s10 + $0x58] sm:$0xff]
    %v739 = vld [vmem:[%s10 + $0x60] sm:$0xff]
    %v740 = vld [vmem:[%s10 + $0x68] sm:$0xff]
    %v741 = vld [vmem:[%s10 + $0x70] sm:$0xff]
    %v742 = vld [vmem:[%s10 + $0x78] sm:$0xff]
    %v743 = vld [vmem:[%s10 + $0x80] sm:$0xff]
    %747 = vrot.lane.b32.xlu0 %v516, 64
    %v748 = vpop.permute.xlu0 %747
    %749 = vrot.lane.b32.xlu0 %v517, 64
    %v750 = vpop.permute.xlu0 %749
    %751 = vrot.lane.b32.xlu0 %v518, 64
    %v752 = vpop.permute.xlu0 %751
    %v754 = vsel %vm231, %v718, 0
    %v757 = vsel %vm231, %v719, 0
    %v760 = vsel %vm231, %v720, 0
    %v763 = vsel %vm231, %v721, 0
    %v766 = vsel %vm231, %v722, 0
    %v769 = vsel %vm231, %v723, 0
    %v772 = vsel %vm231, %v724, 0
    %v775 = vsel %vm231, %v725, 0
    %v778 = vsel %vm231, %v726, 0
    %v781 = vsel %vm231, %v748, 0
    %v784 = vsel %vm231, %v750, 0
    %v787 = vsel %vm231, %v752, 0
    %789 = vmatprep.subr.bf16.mxu0 0
    %790 = vmatpush1.bf16.xpose.msra.mxu0 %v781
    %791 = vmatprep.subr.bf16.mxu0 0
    %792 = vmatpush1.bf16.xpose.msra.mxu0 %v784
    %793 = vmatprep.subr.bf16.mxu0 0
    %794 = vmatpush1.bf16.xpose.msra.mxu0 %v787
    %795 = vmatprep.subr.bf16.mxu0 0
    %796 = vmatpush1.bf16.xpose.msra.mxu0 0
    %797 = vmatprep.subr.bf16.mxu0 0
    %798 = vmatpush1.bf16.xpose.msra.mxu0 0
    %799 = vmatprep.subr.bf16.mxu0 0
    %800 = vmatpush1.bf16.xpose.msra.mxu0 0
    %801 = vmatprep.subr.bf16.mxu0 0
    %802 = vmatpush1.bf16.xpose.msra.mxu0 0
    %803 = vmatprep.subr.bf16.mxu0 0
    %804 = vmatpush1.bf16.xpose.msra.mxu0 0
    %805 = vmatprep.subr.bf16.mxu0 0
    %806 = vmatpush1.bf16.xpose.msra.mxu0 0
    %807 = vmatprep.subr.bf16.mxu0 0
    %808 = vmatpush1.bf16.xpose.msra.mxu0 0
    %809 = vmatprep.subr.bf16.mxu0 0
    %810 = vmatpush1.bf16.xpose.msra.mxu0 0
    %811 = vmatprep.subr.bf16.mxu0 0
    %812 = vmatpush1.bf16.xpose.msra.mxu0 0
    %813 = vmatprep.subr.bf16.mxu0 0
    %814 = vmatpush1.bf16.xpose.msra.mxu0 0
    %815 = vmatprep.subr.bf16.mxu0 0
    %816 = vmatpush1.bf16.xpose.msra.mxu0 0
    %817 = vmatprep.subr.bf16.mxu0 0
    %818 = vmatpush1.bf16.xpose.msra.mxu0 0
    %819 = vmatprep.subr.bf16.mxu0 0
    %820 = vmatpush1.bf16.xpose.msra.mxu0 0
    %821 = vmatprep.mubr.bf16.mxu0 0
    %822 = vmatmul.mubr.bf16.gmra.mrb[0].mxu0 %v754
    %v823 = vpop.f32.mrb[0].mxu0
    %v824 = vadd.f32 %v727, %v823
    %v825 = vpop.f32.mrb[0].mxu0
    %v826 = vpop.f32.mrb[0].mxu0
    %v827 = vadd.f32 %v728, %v826
    %v828 = vpop.f32.mrb[0].mxu0
    %829 = vmatprep.mubr.bf16.mxu0 0
    %830 = vmatmul.mubr.bf16.gmra.mrb[0].mxu0 %v757
    %v831 = vpop.f32.mrb[0].mxu0
    %v832 = vadd.f32 %v729, %v831
    %v833 = vpop.f32.mrb[0].mxu0
    %v834 = vpop.f32.mrb[0].mxu0
    %v835 = vadd.f32 %v730, %v834
    %v836 = vpop.f32.mrb[0].mxu0
    %837 = vmatprep.mubr.bf16.mxu0 0
    %838 = vmatmul.mubr.bf16.gmra.mrb[0].mxu0 %v760
    %v839 = vpop.f32.mrb[0].mxu0
    %v840 = vadd.f32 %v731, %v839
    %v841 = vpop.f32.mrb[0].mxu0
    %v842 = vpop.f32.mrb[0].mxu0
    %v843 = vadd.f32 %v732, %v842
    %v844 = vpop.f32.mrb[0].mxu0
    %845 = vmatprep.mubr.bf16.mxu0 0
    %846 = vmatmul.mubr.bf16.gmra.mrb[0].mxu0 %v763
    %v847 = vpop.f32.mrb[0].mxu0
    %v848 = vadd.f32 %v733, %v847
    %v849 = vpop.f32.mrb[0].mxu0
    %v850 = vpop.f32.mrb[0].mxu0
    %v851 = vadd.f32 %v734, %v850
    %v852 = vpop.f32.mrb[0].mxu0
    %853 = vmatprep.mubr.bf16.mxu0 0
    %854 = vmatmul.mubr.bf16.gmra.mrb[0].mxu0 %v766
    %v855 = vpop.f32.mrb[0].mxu0
    %v856 = vadd.f32 %v735, %v855
    %v857 = vpop.f32.mrb[0].mxu0
    %v858 = vpop.f32.mrb[0].mxu0
    %v859 = vadd.f32 %v736, %v858
    %v860 = vpop.f32.mrb[0].mxu0
    %861 = vmatprep.mubr.bf16.mxu0 0
    %862 = vmatmul.mubr.bf16.gmra.mrb[0].mxu0 %v769
    %v863 = vpop.f32.mrb[0].mxu0
    %v864 = vadd.f32 %v737, %v863
    %v865 = vpop.f32.mrb[0].mxu0
    %v866 = vpop.f32.mrb[0].mxu0
    %v867 = vadd.f32 %v738, %v866
    %v868 = vpop.f32.mrb[0].mxu0
    %869 = vmatprep.mubr.bf16.mxu0 0
    %870 = vmatmul.mubr.bf16.gmra.mrb[0].mxu0 %v772
    %v871 = vpop.f32.mrb[0].mxu0
    %v872 = vadd.f32 %v739, %v871
    %v873 = vpop.f32.mrb[0].mxu0
    %v874 = vpop.f32.mrb[0].mxu0
    %v875 = vadd.f32 %v740, %v874
    %v876 = vpop.f32.mrb[0].mxu0
    %877 = vmatprep.mubr.bf16.mxu0 0
    %878 = vmatmul.mubr.bf16.gmra.mrb[0].mxu0 %v775
    %v879 = vpop.f32.mrb[0].mxu0
    %v880 = vadd.f32 %v741, %v879
    %v881 = vpop.f32.mrb[0].mxu0
    %v882 = vpop.f32.mrb[0].mxu0
    %v883 = vadd.f32 %v742, %v882
    %v884 = vpop.f32.mrb[0].mxu0
    %885 = vmatprep.mubr.bf16.mxu0 0
    %886 = vmatmul.mubr.bf16.gmra.mrb[0].mxu0 %v778
    %v887 = vpop.f32.mrb[0].mxu0
    %v888 = vadd.f32 %v743, %v887
    %v889 = vpop.f32.mrb[0].mxu0
    %v890 = vpop.f32.mrb[0].mxu0
    %v891 = vpop.f32.mrb[0].mxu0
    %892 = vdwg.mxu0
    %v893 = vsel %vm565, %v824, -inf
    %894 = vmax.xlane.f32.xlu0 %v893
    %v895 = vpop.xlane.xlu0 %894
    %v896 = vsel %vm565, %v827, -inf
    %897 = vmax.xlane.f32.xlu0 %v896
    %v898 = vpop.xlane.xlu0 %897
    %v899 = vsel %vm565, %v832, -inf
    %900 = vmax.xlane.f32.xlu0 %v899
    %v901 = vpop.xlane.xlu0 %900
    %v902 = vsel %vm565, %v835, -inf
    %903 = vmax.xlane.f32.xlu0 %v902
    %v904 = vpop.xlane.xlu0 %903
    %v905 = vsel %vm565, %v840, -inf
    %906 = vmax.xlane.f32.xlu0 %v905
    %v907 = vpop.xlane.xlu0 %906
    %v908 = vsel %vm565, %v843, -inf
    %909 = vmax.xlane.f32.xlu0 %v908
    %v910 = vpop.xlane.xlu0 %909
    %v911 = vsel %vm565, %v848, -inf
    %912 = vmax.xlane.f32.xlu0 %v911
    %v913 = vpop.xlane.xlu0 %912
    %v914 = vsel %vm565, %v851, -inf
    %915 = vmax.xlane.f32.xlu0 %v914
    %v916 = vpop.xlane.xlu0 %915
    %v917 = vsel %vm565, %v856, -inf
    %918 = vmax.xlane.f32.xlu0 %v917
    %v919 = vpop.xlane.xlu0 %918
    %v920 = vsel %vm565, %v859, -inf
    %921 = vmax.xlane.f32.xlu0 %v920
    %v922 = vpop.xlane.xlu0 %921
    %v923 = vsel %vm565, %v864, -inf
    %924 = vmax.xlane.f32.xlu0 %v923
    %v925 = vpop.xlane.xlu0 %924
    %v926 = vsel %vm565, %v867, -inf
    %927 = vmax.xlane.f32.xlu0 %v926
    %v928 = vpop.xlane.xlu0 %927
    %v929 = vsel %vm565, %v872, -inf
    %930 = vmax.xlane.f32.xlu0 %v929
    %v931 = vpop.xlane.xlu0 %930
    %v932 = vsel %vm565, %v875, -inf
    %933 = vmax.xlane.f32.xlu0 %v932
    %v934 = vpop.xlane.xlu0 %933
    %v935 = vsel %vm565, %v880, -inf
    %936 = vmax.xlane.f32.xlu0 %v935
    %v937 = vpop.xlane.xlu0 %936
    %v938 = vsel %vm565, %v883, -inf
    %939 = vmax.xlane.f32.xlu0 %v938
    %v940 = vpop.xlane.xlu0 %939
    %v941 = vsel %vm565, %v888, -inf
    %942 = vmax.xlane.f32.xlu0 %v941
    %v943 = vpop.xlane.xlu0 %942
    %v944 = vsub.f32 %v824, %v895
    %v945 = vsub.f32 %v827, %v898
    %v946 = vsub.f32 %v832, %v901
    %v947 = vsub.f32 %v835, %v904
    %v948 = vsub.f32 %v840, %v907
    %v949 = vsub.f32 %v843, %v910
    %v950 = vsub.f32 %v848, %v913
    %v951 = vsub.f32 %v851, %v916
    %v952 = vsub.f32 %v856, %v919
    %v953 = vsub.f32 %v859, %v922
    %v954 = vsub.f32 %v864, %v925
    %v955 = vsub.f32 %v867, %v928
    %v956 = vsub.f32 %v872, %v931
    %v957 = vsub.f32 %v875, %v934
    %v958 = vsub.f32 %v880, %v937
    %v959 = vsub.f32 %v883, %v940
    %v960 = vsub.f32 %v888, %v943
    %v961 = vmul.f32 %v944, 1.442695
    %v962 = vpow.pop %v961
    %v963 = vmul.f32 %v945, 1.442695
    %v964 = vpow.pop %v963
    %v965 = vmul.f32 %v946, 1.442695
    %v966 = vpow.pop %v965
    %v967 = vmul.f32 %v947, 1.442695
    %v968 = vpow.pop %v967
    %v969 = vmul.f32 %v948, 1.442695
    %v970 = vpow.pop %v969
    %v971 = vmul.f32 %v949, 1.442695
    %v972 = vpow.pop %v971
    %v973 = vmul.f32 %v950, 1.442695
    %v974 = vpow.pop %v973
    %v975 = vmul.f32 %v951, 1.442695
    %v976 = vpow.pop %v975
    %v977 = vmul.f32 %v952, 1.442695
    %v978 = vpow.pop %v977
    %v979 = vmul.f32 %v953, 1.442695
    %v980 = vpow.pop %v979
    %v981 = vmul.f32 %v954, 1.442695
    %v982 = vpow.pop %v981
    %v983 = vmul.f32 %v955, 1.442695
    %v984 = vpow.pop %v983
    %v985 = vmul.f32 %v956, 1.442695
    %v986 = vpow.pop %v985
    %v987 = vmul.f32 %v957, 1.442695
    %v988 = vpow.pop %v987
    %v989 = vmul.f32 %v958, 1.442695
    %v990 = vpow.pop %v989
    %v991 = vmul.f32 %v959, 1.442695
    %v992 = vpow.pop %v991
    %v993 = vmul.f32 %v960, 1.442695
    %v994 = vpow.pop %v993
    %v995 = vsel %vm565, %v962, 0.0
    %996 = vadd.xlane.f32.xlu0 %v995
    %v997 = vpop.xlane.xlu0 %996
    %v998 = vsel %vm565, %v964, 0.0
    %999 = vadd.xlane.f32.xlu0 %v998
    %v1000 = vpop.xlane.xlu0 %999
    %v1001 = vsel %vm565, %v966, 0.0
    %1002 = vadd.xlane.f32.xlu0 %v1001
    %v1003 = vpop.xlane.xlu0 %1002
    %v1004 = vsel %vm565, %v968, 0.0
    %1005 = vadd.xlane.f32.xlu0 %v1004
    %v1006 = vpop.xlane.xlu0 %1005
    %v1007 = vsel %vm565, %v970, 0.0
    %1008 = vadd.xlane.f32.xlu0 %v1007
    %v1009 = vpop.xlane.xlu0 %1008
    %v1010 = vsel %vm565, %v972, 0.0
    %1011 = vadd.xlane.f32.xlu0 %v1010
    %v1012 = vpop.xlane.xlu0 %1011
    %v1013 = vsel %vm565, %v974, 0.0
    %1014 = vadd.xlane.f32.xlu0 %v1013
    %v1015 = vpop.xlane.xlu0 %1014
    %v1016 = vsel %vm565, %v976, 0.0
    %1017 = vadd.xlane.f32.xlu0 %v1016
    %v1018 = vpop.xlane.xlu0 %1017
    %v1019 = vsel %vm565, %v978, 0.0
    %1020 = vadd.xlane.f32.xlu0 %v1019
    %v1021 = vpop.xlane.xlu0 %1020
    %v1022 = vsel %vm565, %v980, 0.0
    %1023 = vadd.xlane.f32.xlu0 %v1022
    %v1024 = vpop.xlane.xlu0 %1023
    %v1025 = vsel %vm565, %v982, 0.0
    %1026 = vadd.xlane.f32.xlu0 %v1025
    %v1027 = vpop.xlane.xlu0 %1026
    %v1028 = vsel %vm565, %v984, 0.0
    %1029 = vadd.xlane.f32.xlu0 %v1028
    %v1030 = vpop.xlane.xlu0 %1029
    %v1031 = vsel %vm565, %v986, 0.0
    %1032 = vadd.xlane.f32.xlu0 %v1031
    %v1033 = vpop.xlane.xlu0 %1032
    %v1034 = vsel %vm565, %v988, 0.0
    %1035 = vadd.xlane.f32.xlu0 %v1034
    %v1036 = vpop.xlane.xlu0 %1035
    %v1037 = vsel %vm565, %v990, 0.0
    %1038 = vadd.xlane.f32.xlu0 %v1037
    %v1039 = vpop.xlane.xlu0 %1038
    %v1040 = vsel %vm565, %v992, 0.0
    %1041 = vadd.xlane.f32.xlu0 %v1040
    %v1042 = vpop.xlane.xlu0 %1041
    %v1043 = vsel %vm565, %v994, 0.0
    %1044 = vadd.xlane.f32.xlu0 %v1043
    %v1045 = vpop.xlane.xlu0 %1044
    %v1046 = vrcp.pop %v997
    %v1047 = vrcp.pop %v1000
    %v1048 = vrcp.pop %v1003
    %v1049 = vrcp.pop %v1006
    %v1050 = vrcp.pop %v1009
    %v1051 = vrcp.pop %v1012
    %v1052 = vrcp.pop %v1015
    %v1053 = vrcp.pop %v1018
    %v1054 = vrcp.pop %v1021
    %v1055 = vrcp.pop %v1024
    %v1056 = vrcp.pop %v1027
    %v1057 = vrcp.pop %v1030
    %v1058 = vrcp.pop %v1033
    %v1059 = vrcp.pop %v1036
    %v1060 = vrcp.pop %v1039
    %v1061 = vrcp.pop %v1042
    %v1062 = vrcp.pop %v1045
    %v1063 = vmul.f32 %v962, %v1046
    %v1064 = vmul.f32 %v964, %v1047
    %v1065 = vmul.f32 %v966, %v1048
    %v1066 = vmul.f32 %v968, %v1049
    %v1067 = vmul.f32 %v970, %v1050
    %v1068 = vmul.f32 %v972, %v1051
    %v1069 = vmul.f32 %v974, %v1052
    %v1070 = vmul.f32 %v976, %v1053
    %v1071 = vmul.f32 %v978, %v1054
    %v1072 = vmul.f32 %v980, %v1055
    %v1073 = vmul.f32 %v982, %v1056
    %v1074 = vmul.f32 %v984, %v1057
    %v1075 = vmul.f32 %v986, %v1058
    %v1076 = vmul.f32 %v988, %v1059
    %v1077 = vmul.f32 %v990, %v1060
    %v1078 = vmul.f32 %v992, %v1061
    %v1079 = vmul.f32 %v994, %v1062
    %v1080 = vpack.c.bf16 %v1064, %v1063
    %v1081 = vpack.c.bf16 %v1066, %v1065
    %v1082 = vpack.c.bf16 %v1068, %v1067
    %v1083 = vpack.c.bf16 %v1070, %v1069
    %v1084 = vpack.c.bf16 %v1072, %v1071
    %v1085 = vpack.c.bf16 %v1074, %v1073
    %v1086 = vpack.c.bf16 %v1076, %v1075
    %v1087 = vpack.c.bf16 %v1078, %v1077
    %v1088 = vpack.c.bf16 %v1079, %v1079
    %v1090 = vsel %vm565, %v1080, 0
    %v1093 = vsel %vm565, %v1081, 0
    %v1096 = vsel %vm565, %v1082, 0
    %v1099 = vsel %vm565, %v1083, 0
    %v1102 = vsel %vm565, %v1084, 0
    %v1105 = vsel %vm565, %v1085, 0
    %v1108 = vsel %vm565, %v1086, 0
    %v1111 = vsel %vm565, %v1087, 0
    %v1114 = vsel %vm565, %v1088, 0
    %v1117 = vsel %vm593, %v521, 0
    %1119 = vmatprep.subr.bf16.mxu0 0
    %1120 = vmatpush1.bf16.msra.mxu0 %v519
    %1121 = vmatprep.subr.bf16.mxu0 0
    %1122 = vmatpush1.bf16.msra.mxu0 %v520
    %1123 = vmatprep.subr.bf16.mxu0 0
    %1124 = vmatpush1.bf16.msra.mxu0 %v1117
    %1125 = vmatprep.subr.bf16.mxu0 0
    %1126 = vmatpush1.bf16.msra.mxu0 0
    %1127 = vmatprep.subr.bf16.mxu0 0
    %1128 = vmatpush1.bf16.msra.mxu0 0
    %1129 = vmatprep.subr.bf16.mxu0 0
    %1130 = vmatpush1.bf16.msra.mxu0 0
    %1131 = vmatprep.subr.bf16.mxu0 0
    %1132 = vmatpush1.bf16.msra.mxu0 0
    %1133 = vmatprep.subr.bf16.mxu0 0
    %1134 = vmatpush1.bf16.msra.mxu0 0
    %1135 = vmatprep.subr.bf16.mxu0 0
    %1136 = vmatpush1.bf16.msra.mxu0 0
    %1137 = vmatprep.subr.bf16.mxu0 0
    %1138 = vmatpush1.bf16.msra.mxu0 0
    %1139 = vmatprep.subr.bf16.mxu0 0
    %1140 = vmatpush1.bf16.msra.mxu0 0
    %1141 = vmatprep.subr.bf16.mxu0 0
    %1142 = vmatpush1.bf16.msra.mxu0 0
    %1143 = vmatprep.subr.bf16.mxu0 0
    %1144 = vmatpush1.bf16.msra.mxu0 0
    %1145 = vmatprep.subr.bf16.mxu0 0
    %1146 = vmatpush1.bf16.msra.mxu0 0
    %1147 = vmatprep.subr.bf16.mxu0 0
    %1148 = vmatpush1.bf16.msra.mxu0 0
    %1149 = vmatprep.subr.bf16.mxu0 0
    %1150 = vmatpush1.bf16.msra.mxu0 0
    %1151 = vmatprep.mubr.bf16.mxu0 0
    %1152 = vmatmul.mubr.bf16.gmra.mrb[0].mxu0 %v1090
    %v1153 = vpop.f32.mrb[0].mxu0
    %v1154 = vadd.f32 0.0, %v1153
    %v1155 = vpop.f32.mrb[0].mxu0
    %v1156 = vpop.f32.mrb[0].mxu0
    %v1157 = vadd.f32 0.0, %v1156
    %v1158 = vpop.f32.mrb[0].mxu0
    %1159 = vmatprep.mubr.bf16.mxu0 0
    %1160 = vmatmul.mubr.bf16.gmra.mrb[0].mxu0 %v1093
    %v1161 = vpop.f32.mrb[0].mxu0
    %v1162 = vadd.f32 0.0, %v1161
    %v1163 = vpop.f32.mrb[0].mxu0
    %v1164 = vpop.f32.mrb[0].mxu0
    %v1165 = vadd.f32 0.0, %v1164
    %v1166 = vpop.f32.mrb[0].mxu0
    %1167 = vmatprep.mubr.bf16.mxu0 0
    %1168 = vmatmul.mubr.bf16.gmra.mrb[0].mxu0 %v1096
    %v1169 = vpop.f32.mrb[0].mxu0
    %v1170 = vadd.f32 0.0, %v1169
    %v1171 = vpop.f32.mrb[0].mxu0
    %v1172 = vpop.f32.mrb[0].mxu0
    %v1173 = vadd.f32 0.0, %v1172
    %v1174 = vpop.f32.mrb[0].mxu0
    %1175 = vmatprep.mubr.bf16.mxu0 0
    %1176 = vmatmul.mubr.bf16.gmra.mrb[0].mxu0 %v1099
    %v1177 = vpop.f32.mrb[0].mxu0
    %v1178 = vadd.f32 0.0, %v1177
    %v1179 = vpop.f32.mrb[0].mxu0
    %v1180 = vpop.f32.mrb[0].mxu0
    %v1181 = vadd.f32 0.0, %v1180
    %v1182 = vpop.f32.mrb[0].mxu0
    %1183 = vmatprep.mubr.bf16.mxu0 0
    %1184 = vmatmul.mubr.bf16.gmra.mrb[0].mxu0 %v1102
    %v1185 = vpop.f32.mrb[0].mxu0
    %v1186 = vadd.f32 0.0, %v1185
    %v1187 = vpop.f32.mrb[0].mxu0
    %v1188 = vpop.f32.mrb[0].mxu0
    %v1189 = vadd.f32 0.0, %v1188
    %v1190 = vpop.f32.mrb[0].mxu0
    %1191 = vmatprep.mubr.bf16.mxu0 0
    %1192 = vmatmul.mubr.bf16.gmra.mrb[0].mxu0 %v1105
    %v1193 = vpop.f32.mrb[0].mxu0
    %v1194 = vadd.f32 0.0, %v1193
    %v1195 = vpop.f32.mrb[0].mxu0
    %v1196 = vpop.f32.mrb[0].mxu0
    %v1197 = vadd.f32 0.0, %v1196
    %v1198 = vpop.f32.mrb[0].mxu0
    %1199 = vmatprep.mubr.bf16.mxu0 0
    %1200 = vmatmul.mubr.bf16.gmra.mrb[0].mxu0 %v1108
    %v1201 = vpop.f32.mrb[0].mxu0
    %v1202 = vadd.f32 0.0, %v1201
    %v1203 = vpop.f32.mrb[0].mxu0
    %v1204 = vpop.f32.mrb[0].mxu0
    %v1205 = vadd.f32 0.0, %v1204
    %v1206 = vpop.f32.mrb[0].mxu0
    %1207 = vmatprep.mubr.bf16.mxu0 0
    %1208 = vmatmul.mubr.bf16.gmra.mrb[0].mxu0 %v1111
    %v1209 = vpop.f32.mrb[0].mxu0
    %v1210 = vadd.f32 0.0, %v1209
    %v1211 = vpop.f32.mrb[0].mxu0
    %v1212 = vpop.f32.mrb[0].mxu0
    %v1213 = vadd.f32 0.0, %v1212
    %v1214 = vpop.f32.mrb[0].mxu0
    %1215 = vmatprep.mubr.bf16.mxu0 0
    %1216 = vmatmul.mubr.bf16.gmra.mrb[0].mxu0 %v1114
    %v1217 = vpop.f32.mrb[0].mxu0
    %v1218 = vadd.f32 0.0, %v1217
    %v1219 = vpop.f32.mrb[0].mxu0
    %v1220 = vpop.f32.mrb[0].mxu0
    %v1221 = vpop.f32.mrb[0].mxu0
    %1222 = vdwg.mxu0
    %v1223 = vmul.f32 %v1154, %v61
    %v1224 = vmul.f32 %v1157, %v62
    %v1225 = vmul.f32 %v1162, %v63
    %v1226 = vmul.f32 %v1165, %v64
    %v1227 = vmul.f32 %v1170, %v65
    %v1228 = vmul.f32 %v1173, %v66
    %v1229 = vmul.f32 %v1178, %v67
    %v1230 = vmul.f32 %v1181, %v68
    %v1231 = vmul.f32 %v1186, %v69
    %v1232 = vmul.f32 %v1189, %v70
    %v1233 = vmul.f32 %v1194, %v71
    %v1234 = vmul.f32 %v1197, %v72
    %v1235 = vmul.f32 %v1202, %v73
    %v1236 = vmul.f32 %v1205, %v74
    %v1237 = vmul.f32 %v1210, %v75
    %v1238 = vmul.f32 %v1213, %v76
    %v1239 = vmul.f32 %v1218, %v77
    %v1240 = vpack.c.bf16 %v1224, %v1223
    %v1241 = vpack.c.bf16 %v1226, %v1225
    %v1242 = vpack.c.bf16 %v1228, %v1227
    %v1243 = vpack.c.bf16 %v1230, %v1229
    %v1244 = vpack.c.bf16 %v1232, %v1231
    %v1245 = vpack.c.bf16 %v1234, %v1233
    %v1246 = vpack.c.bf16 %v1236, %v1235
    %v1247 = vpack.c.bf16 %v1238, %v1237
    %v1248 = vpack.c.bf16 %v1239, %v1239
    %v1254 = vunpack.c.l.b16 %v95
    %v1255 = vunpack.c.h.b16 %v95
    %v1256 = vunpack.c.l.b16 %v96
    %v1257 = vunpack.c.h.b16 %v96
    %v1258 = vunpack.c.l.b16 %v97
    %v1259 = vunpack.c.h.b16 %v97
    %v1260 = vunpack.c.l.b16 %v98
    %v1261 = vunpack.c.h.b16 %v98
    %v1262 = vunpack.c.l.b16 %v99
    %v1263 = vunpack.c.h.b16 %v99
    %v1264 = vpack.c.b16 %v1256, %v1254
    %v1265 = vpack.c.b16 %v1257, %v1255
    %v1266 = vpack.c.b16 %v1260, %v1258
    %v1267 = vpack.c.b16 %v1261, %v1259
    %v1268 = vpack.c.b16 %v1262, %v1262
    %v1269 = vpack.c.b16 %v1263, %v1263
    %vm1273 = vcmask 64512
    %v1275 = vsel %vm1273, %v1265, 0
    %v1278 = vsel %vm1273, %v1267, 0
    %v1281 = vsel %vm1273, %v1269, 0
    %vm1283 = vcmask 1043456
    %v1285 = vsel %vm1283, %v1248, 0
    %1287 = vmatprep.subr.bf16.mxu0 0
    %1288 = vmatpush1.bf16.msra.mxu0 %v1240
    %1289 = vmatprep.subr.bf16.mxu0 0
    %1290 = vmatpush1.bf16.msra.mxu0 %v1241
    %1291 = vmatprep.subr.bf16.mxu0 0
    %1292 = vmatpush1.bf16.msra.mxu0 %v1242
    %1293 = vmatprep.subr.bf16.mxu0 0
    %1294 = vmatpush1.bf16.msra.mxu0 %v1243
    %1295 = vmatprep.subr.bf16.mxu0 0
    %1296 = vmatpush1.bf16.msra.mxu0 %v1244
    %1297 = vmatprep.subr.bf16.mxu0 0
    %1298 = vmatpush1.bf16.msra.mxu0 %v1245
    %1299 = vmatprep.subr.bf16.mxu0 0
    %1300 = vmatpush1.bf16.msra.mxu0 %v1246
    %1301 = vmatprep.subr.bf16.mxu0 0
    %1302 = vmatpush1.bf16.msra.mxu0 %v1247
    %1303 = vmatprep.subr.bf16.mxu0 0
    %1304 = vmatpush1.bf16.msra.mxu0 %v1285
    %1305 = vmatprep.subr.bf16.mxu0 0
    %1306 = vmatpush1.bf16.msra.mxu0 0
    %1307 = vmatprep.subr.bf16.mxu0 0
    %1308 = vmatpush1.bf16.msra.mxu0 0
    %1309 = vmatprep.subr.bf16.mxu0 0
    %1310 = vmatpush1.bf16.msra.mxu0 0
    %1311 = vmatprep.subr.bf16.mxu0 0
    %1312 = vmatpush1.bf16.msra.mxu0 0
    %1313 = vmatprep.subr.bf16.mxu0 0
    %1314 = vmatpush1.bf16.msra.mxu0 0
    %1315 = vmatprep.subr.bf16.mxu0 0
    %1316 = vmatpush1.bf16.msra.mxu0 0
    %1317 = vmatprep.subr.bf16.mxu0 0
    %1318 = vmatpush1.bf16.msra.mxu0 0
    %1319 = vmatprep.mubr.bf16.mxu0 %v1275
    %1320 = vmatmul.mubr.bf16.gmra.mrb[0].mxu0 %v1264
    %v1321 = vpop.f32.mrb[0].mxu0
    %v1322 = vadd.f32 0.0, %v1321
    %v1323 = vpop.f32.mrb[0].mxu0
    %v1324 = vpop.f32.mrb[0].mxu0
    %v1325 = vadd.f32 0.0, %v1324
    %v1326 = vpop.f32.mrb[0].mxu0
    %1327 = vmatprep.mubr.bf16.mxu0 %v1278
    %1328 = vmatmul.mubr.bf16.gmra.mrb[0].mxu0 %v1266
    %v1329 = vpop.f32.mrb[0].mxu0
    %v1330 = vadd.f32 0.0, %v1329
    %v1331 = vpop.f32.mrb[0].mxu0
    %v1332 = vpop.f32.mrb[0].mxu0
    %v1333 = vadd.f32 0.0, %v1332
    %v1334 = vpop.f32.mrb[0].mxu0
    %1335 = vmatprep.mubr.bf16.mxu0 %v1281
    %1336 = vmatmul.mubr.bf16.gmra.mrb[0].mxu0 %v1268
    %v1337 = vpop.f32.mrb[0].mxu0
    %v1338 = vadd.f32 0.0, %v1337
    %v1339 = vpop.f32.mrb[0].mxu0
    %v1340 = vpop.f32.mrb[0].mxu0
    %v1341 = vpop.f32.mrb[0].mxu0
    %1342 = vdwg.mxu0
    %v1343 = vpack.c.bf16 %v1325, %v1322
    %v1344 = vpack.c.bf16 %v1333, %v1330
    %v1345 = vpack.c.bf16 %v1338, %v1338
    %v1346 = vld [vmem:[%s6] sm:$0xf]
    %v1347 = vld [vmem:[%s6 + $0x4] sm:$0xf]
    %v1348 = vld [vmem:[%s6 + $0x8] sm:$0xf]
    %v1349 = vld [vmem:[%s6 + $0xc] sm:$0xf]
    %v1350 = vld [vmem:[%s6 + $0x10] sm:$0xf]
    %v1351 = vld [vmem:[%s6 + $0x14] sm:$0xf]
    %v1352 = vld [vmem:[%s6 + $0x18] sm:$0xf]
    %v1353 = vld [vmem:[%s6 + $0x1c] sm:$0xf]
    %v1354 = vlaneseq
    %v1355 = vshrl.u32 %v1354, 7
    %v1356 = vsub.s32 2, %v1355
    %v1357 = vrot.slane %v297, %v1356
    %v1366 = vunpack.c.l.b16 %v1346
    %v1367 = vunpack.c.l.b16 %v1347
    %v1368 = vunpack.c.l.b16 %v1348
    %v1369 = vunpack.c.l.b16 %v1349
    %v1370 = vunpack.c.l.b16 %v1350
    %v1371 = vunpack.c.l.b16 %v1351
    %v1372 = vunpack.c.l.b16 %v1352
    %v1373 = vunpack.c.l.b16 %v1353
    %v1374 = vpack.c.b16 %v1367, %v1366
    %v1375 = vpack.c.b16 %v1369, %v1368
    %v1376 = vpack.c.b16 %v1371, %v1370
    %v1377 = vpack.c.b16 %v1373, %v1372
    %v1383 = vsel %vm231, %v1343, 0
    %v1386 = vsel %vm231, %v1344, 0
    %v1389 = vsel %vm231, %v1345, 0
    %1391 = vmatprep.subr.bf16.mxu0 0
    %1392 = vmatpush1.bf16.msra.mxu0 %v1374
    %1393 = vmatprep.subr.bf16.mxu0 0
    %1394 = vmatpush1.bf16.msra.mxu0 %v1375
    %1395 = vmatprep.subr.bf16.mxu0 0
    %1396 = vmatpush1.bf16.msra.mxu0 %v1376
    %1397 = vmatprep.subr.bf16.mxu0 0
    %1398 = vmatpush1.bf16.msra.mxu0 %v1377
    %1399 = vmatprep.subr.bf16.mxu0 0
    %1400 = vmatpush1.bf16.msra.mxu0 0
    %1401 = vmatprep.subr.bf16.mxu0 0
    %1402 = vmatpush1.bf16.msra.mxu0 0
    %1403 = vmatprep.subr.bf16.mxu0 0
    %1404 = vmatpush1.bf16.msra.mxu0 0
    %1405 = vmatprep.subr.bf16.mxu0 0
    %1406 = vmatpush1.bf16.msra.mxu0 0
    %1407 = vmatprep.subr.bf16.mxu0 0
    %1408 = vmatpush1.bf16.msra.mxu0 0
    %1409 = vmatprep.subr.bf16.mxu0 0
    %1410 = vmatpush1.bf16.msra.mxu0 0
    %1411 = vmatprep.subr.bf16.mxu0 0
    %1412 = vmatpush1.bf16.msra.mxu0 0
    %1413 = vmatprep.subr.bf16.mxu0 0
    %1414 = vmatpush1.bf16.msra.mxu0 0
    %1415 = vmatprep.subr.bf16.mxu0 0
    %1416 = vmatpush1.bf16.msra.mxu0 0
    %1417 = vmatprep.subr.bf16.mxu0 0
    %1418 = vmatpush1.bf16.msra.mxu0 0
    %1419 = vmatprep.subr.bf16.mxu0 0
    %1420 = vmatpush1.bf16.msra.mxu0 0
    %1421 = vmatprep.subr.bf16.mxu0 0
    %1422 = vmatpush1.bf16.msra.mxu0 0
    %1423 = vmatprep.mubr.bf16.mxu0 0
    %1424 = vmatmul.mubr.bf16.gmra.mrb[0].mxu0 %v1383
    %v1425 = vpop.f32.mrb[0].mxu0
    %v1426 = vadd.f32 %v1357, %v1425
    %v1427 = vpop.f32.mrb[0].mxu0
    %v1428 = vpop.f32.mrb[0].mxu0
    %v1429 = vadd.f32 %v1357, %v1428
    %v1430 = vpop.f32.mrb[0].mxu0
    %1431 = vmatprep.mubr.bf16.mxu0 0
    %1432 = vmatmul.mubr.bf16.gmra.mrb[0].mxu0 %v1386
    %v1433 = vpop.f32.mrb[0].mxu0
    %v1434 = vadd.f32 %v1357, %v1433
    %v1435 = vpop.f32.mrb[0].mxu0
    %v1436 = vpop.f32.mrb[0].mxu0
    %v1437 = vadd.f32 %v1357, %v1436
    %v1438 = vpop.f32.mrb[0].mxu0
    %1439 = vmatprep.mubr.bf16.mxu0 0
    %1440 = vmatmul.mubr.bf16.gmra.mrb[0].mxu0 %v1389
    %v1441 = vpop.f32.mrb[0].mxu0
    %v1442 = vadd.f32 %v1357, %v1441
    %v1443 = vpop.f32.mrb[0].mxu0
    %v1444 = vpop.f32.mrb[0].mxu0
    %v1445 = vpop.f32.mrb[0].mxu0
    %1446 = vdwg.mxu0
    %v1447 = vadd.f32 %v276, %v1426
    %v1448 = vadd.f32 %v279, %v1429
    %v1449 = vadd.f32 %v284, %v1434
    %v1450 = vadd.f32 %v287, %v1437
    %v1451 = vadd.f32 %v292, %v1442
    %v1452 = vsel %vm231, %v1447, 0.0
    %1453 = vadd.xlane.f32.xlu0 %v1452
    %v1454 = vpop.xlane.xlu0 %1453
    %v1455 = vsel %vm231, %v1448, 0.0
    %1456 = vadd.xlane.f32.xlu0 %v1455
    %v1457 = vpop.xlane.xlu0 %1456
    %v1458 = vsel %vm231, %v1449, 0.0
    %1459 = vadd.xlane.f32.xlu0 %v1458
    %v1460 = vpop.xlane.xlu0 %1459
    %v1461 = vsel %vm231, %v1450, 0.0
    %1462 = vadd.xlane.f32.xlu0 %v1461
    %v1463 = vpop.xlane.xlu0 %1462
    %v1464 = vsel %vm310, %v1451, 0.0
    %1465 = vadd.xlane.f32.xlu0 %v1464
    %v1466 = vpop.xlane.xlu0 %1465
    %v1467 = vmul.f32 %v1454, %v314
    %v1468 = vmul.f32 %v1457, %v314
    %v1469 = vmul.f32 %v1460, %v314
    %v1470 = vmul.f32 %v1463, %v314
    %v1471 = vmul.f32 %v1466, %v314
    %v1472 = vsub.f32 %v1447, %v1467
    %v1473 = vsub.f32 %v1448, %v1468
    %v1474 = vsub.f32 %v1449, %v1469
    %v1475 = vsub.f32 %v1450, %v1470
    %v1476 = vsub.f32 %v1451, %v1471
    %v1477 = vmul.f32 %v1472, %v1472
    %v1478 = vmul.f32 %v1473, %v1473
    %v1479 = vmul.f32 %v1474, %v1474
    %v1480 = vmul.f32 %v1475, %v1475
    %v1481 = vmul.f32 %v1476, %v1476
    %v1482 = vsel %vm231, %v1477, 0.0
    %1483 = vadd.xlane.f32.xlu0 %v1482
    %v1484 = vpop.xlane.xlu0 %1483
    %v1485 = vsel %vm231, %v1478, 0.0
    %1486 = vadd.xlane.f32.xlu0 %v1485
    %v1487 = vpop.xlane.xlu0 %1486
    %v1488 = vsel %vm231, %v1479, 0.0
    %1489 = vadd.xlane.f32.xlu0 %v1488
    %v1490 = vpop.xlane.xlu0 %1489
    %v1491 = vsel %vm231, %v1480, 0.0
    %1492 = vadd.xlane.f32.xlu0 %v1491
    %v1493 = vpop.xlane.xlu0 %1492
    %v1494 = vsel %vm310, %v1481, 0.0
    %1495 = vadd.xlane.f32.xlu0 %v1494
    %v1496 = vpop.xlane.xlu0 %1495
    %v1497 = vmul.f32 %v1484, %v314
    %v1498 = vmul.f32 %v1487, %v314
    %v1499 = vmul.f32 %v1490, %v314
    %v1500 = vmul.f32 %v1493, %v314
    %v1501 = vmul.f32 %v1496, %v314
    %v1502 = vadd.f32 %v1497, 1e-06
    %v1503 = vadd.f32 %v1498, 1e-06
    %v1504 = vadd.f32 %v1499, 1e-06
    %v1505 = vadd.f32 %v1500, 1e-06
    %v1506 = vadd.f32 %v1501, 1e-06
    %v1507 = vrsqrt.pop %v1502
    %v1508 = vrsqrt.pop %v1503
    %v1509 = vrsqrt.pop %v1504
    %v1510 = vrsqrt.pop %v1505
    %v1511 = vrsqrt.pop %v1506
    %v1512 = vmul.f32 %v1472, %v1507
    %v1513 = vmul.f32 %v1473, %v1508
    %v1514 = vmul.f32 %v1474, %v1509
    %v1515 = vmul.f32 %v1475, %v1510
    %v1516 = vmul.f32 %v1476, %v1511
    %v1517 = vlaneseq
    %v1518 = vshrl.u32 %v1517, 7
    %v1519 = vsub.s32 3, %v1518
    %v1520 = vrot.slane %v297, %v1519
    %v1521 = vmul.f32 %v1512, %v1520
    %v1522 = vmul.f32 %v1513, %v1520
    %v1523 = vmul.f32 %v1514, %v1520
    %v1524 = vmul.f32 %v1515, %v1520
    %v1525 = vmul.f32 %v1516, %v1520
    %v1526 = vlaneseq
    %v1527 = vshrl.u32 %v1526, 7
    %v1528 = vsub.s32 4, %v1527
    %v1529 = vrot.slane %v297, %v1528
    %v1530 = vadd.f32 %v1521, %v1529
    %v1531 = vadd.f32 %v1522, %v1529
    %v1532 = vadd.f32 %v1523, %v1529
    %v1533 = vadd.f32 %v1524, %v1529
    %v1534 = vadd.f32 %v1525, %v1529
    %v1535 = vpack.c.bf16 %v1531, %v1530
    %v1536 = vpack.c.bf16 %v1533, %v1532
    %v1537 = vpack.c.bf16 %v1534, %v1534
    %v1538 = vld [vmem:[%s7] sm:$0xff]
    %v1539 = vld [vmem:[%s7 + $0x8] sm:$0xff]
    %v1540 = vld [vmem:[%s7 + $0x10] sm:$0xff]
    %v1541 = vld [vmem:[%s7 + $0x18] sm:$0xff]
    %v1542 = vld [vmem:[%s7 + $0x20] sm:$0xff]
    %v1543 = vld [vmem:[%s7 + $0x28] sm:$0xff]
    %v1544 = vld [vmem:[%s7 + $0x30] sm:$0xff]
    %v1545 = vld [vmem:[%s7 + $0x38] sm:$0xff]
    %v1546 = vld [vmem:[%s8] sm:$0x3]
    %v1548 = vlaneseq
    %v1549 = vshrl.u32 %v1548, 7
    %v1550 = vsub.s32 0, %v1549
    %v1551 = vrot.slane %v1546, %v1550
    %v1552 = vlaneseq
    %v1553 = vshrl.u32 %v1552, 7
    %v1554 = vsub.s32 1, %v1553
    %v1555 = vrot.slane %v1546, %v1554
    %v1566 = vunpack.c.l.b16 %v1538
    %v1567 = vunpack.c.h.b16 %v1538
    %v1568 = vunpack.c.l.b16 %v1539
    %v1569 = vunpack.c.h.b16 %v1539
    %v1570 = vunpack.c.l.b16 %v1540
    %v1571 = vunpack.c.h.b16 %v1540
    %v1572 = vunpack.c.l.b16 %v1541
    %v1573 = vunpack.c.h.b16 %v1541
    %v1574 = vunpack.c.l.b16 %v1542
    %v1575 = vunpack.c.h.b16 %v1542
    %v1576 = vunpack.c.l.b16 %v1543
    %v1577 = vunpack.c.h.b16 %v1543
    %v1578 = vunpack.c.l.b16 %v1544
    %v1579 = vunpack.c.h.b16 %v1544
    %v1580 = vunpack.c.l.b16 %v1545
    %v1581 = vunpack.c.h.b16 %v1545
    %v1582 = vpack.c.b16 %v1568, %v1566
    %v1583 = vpack.c.b16 %v1569, %v1567
    %v1584 = vpack.c.b16 %v1572, %v1570
    %v1585 = vpack.c.b16 %v1573, %v1571
    %v1586 = vpack.c.b16 %v1576, %v1574
    %v1587 = vpack.c.b16 %v1577, %v1575
    %v1588 = vpack.c.b16 %v1580, %v1578
    %v1589 = vpack.c.b16 %v1581, %v1579
    %v1599 = vsel %vm231, %v1535, 0
    %v1602 = vsel %vm231, %v1536, 0
    %v1605 = vsel %vm231, %v1537, 0
    %1607 = vmatprep.subr.bf16.mxu0 %v1583
    %1608 = vmatpush1.bf16.msra.mxu0 %v1582
    %1609 = vmatprep.subr.bf16.mxu0 %v1585
    %1610 = vmatpush1.bf16.msra.mxu0 %v1584
    %1611 = vmatprep.subr.bf16.mxu0 %v1587
    %1612 = vmatpush1.bf16.msra.mxu0 %v1586
    %1613 = vmatprep.subr.bf16.mxu0 %v1589
    %1614 = vmatpush1.bf16.msra.mxu0 %v1588
    %1615 = vmatprep.subr.bf16.mxu0 0
    %1616 = vmatpush1.bf16.msra.mxu0 0
    %1617 = vmatprep.subr.bf16.mxu0 0
    %1618 = vmatpush1.bf16.msra.mxu0 0
    %1619 = vmatprep.subr.bf16.mxu0 0
    %1620 = vmatpush1.bf16.msra.mxu0 0
    %1621 = vmatprep.subr.bf16.mxu0 0
    %1622 = vmatpush1.bf16.msra.mxu0 0
    %1623 = vmatprep.subr.bf16.mxu0 0
    %1624 = vmatpush1.bf16.msra.mxu0 0
    %1625 = vmatprep.subr.bf16.mxu0 0
    %1626 = vmatpush1.bf16.msra.mxu0 0
    %1627 = vmatprep.subr.bf16.mxu0 0
    %1628 = vmatpush1.bf16.msra.mxu0 0
    %1629 = vmatprep.subr.bf16.mxu0 0
    %1630 = vmatpush1.bf16.msra.mxu0 0
    %1631 = vmatprep.subr.bf16.mxu0 0
    %1632 = vmatpush1.bf16.msra.mxu0 0
    %1633 = vmatprep.subr.bf16.mxu0 0
    %1634 = vmatpush1.bf16.msra.mxu0 0
    %1635 = vmatprep.subr.bf16.mxu0 0
    %1636 = vmatpush1.bf16.msra.mxu0 0
    %1637 = vmatprep.subr.bf16.mxu0 0
    %1638 = vmatpush1.bf16.msra.mxu0 0
    %1639 = vmatprep.mubr.bf16.mxu0 0
    %1640 = vmatmul.mubr.bf16.gmra.mrb[0].mxu0 %v1599
    %v1641 = vpop.f32.mrb[0].mxu0
    %v1642 = vadd.f32 %v1551, %v1641
    %v1643 = vpop.f32.mrb[0].mxu0
    %v1644 = vadd.f32 %v1555, %v1643
    %v1645 = vpop.f32.mrb[0].mxu0
    %v1646 = vadd.f32 %v1551, %v1645
    %v1647 = vpop.f32.mrb[0].mxu0
    %v1648 = vadd.f32 %v1555, %v1647
    %1649 = vmatprep.mubr.bf16.mxu0 0
    %1650 = vmatmul.mubr.bf16.gmra.mrb[0].mxu0 %v1602
    %v1651 = vpop.f32.mrb[0].mxu0
    %v1652 = vadd.f32 %v1551, %v1651
    %v1653 = vpop.f32.mrb[0].mxu0
    %v1654 = vadd.f32 %v1555, %v1653
    %v1655 = vpop.f32.mrb[0].mxu0
    %v1656 = vadd.f32 %v1551, %v1655
    %v1657 = vpop.f32.mrb[0].mxu0
    %v1658 = vadd.f32 %v1555, %v1657
    %1659 = vmatprep.mubr.bf16.mxu0 0
    %1660 = vmatmul.mubr.bf16.gmra.mrb[0].mxu0 %v1605
    %v1661 = vpop.f32.mrb[0].mxu0
    %v1662 = vadd.f32 %v1551, %v1661
    %v1663 = vpop.f32.mrb[0].mxu0
    %v1664 = vadd.f32 %v1555, %v1663
    %v1665 = vpop.f32.mrb[0].mxu0
    %v1666 = vpop.f32.mrb[0].mxu0
    %1667 = vdwg.mxu0
    %v1668 = vmul.f32 %v1642, 0.70710677
    %v1669 = vmul.f32 %v1644, 0.70710677
    %v1670 = vmul.f32 %v1646, 0.70710677
    %v1671 = vmul.f32 %v1648, 0.70710677
    %v1672 = vmul.f32 %v1652, 0.70710677
    %v1673 = vmul.f32 %v1654, 0.70710677
    %v1674 = vmul.f32 %v1656, 0.70710677
    %v1675 = vmul.f32 %v1658, 0.70710677
    %v1676 = vmul.f32 %v1662, 0.70710677
    %v1677 = vmul.f32 %v1664, 0.70710677
    %v1678 = vand.u32 2147483647, %v1668
    %v1679 = vand.u32 2147483647, %v1669
    %v1680 = vand.u32 2147483647, %v1670
    %v1681 = vand.u32 2147483647, %v1671
    %v1682 = vand.u32 2147483647, %v1672
    %v1683 = vand.u32 2147483647, %v1673
    %v1684 = vand.u32 2147483647, %v1674
    %v1685 = vand.u32 2147483647, %v1675
    %v1686 = vand.u32 2147483647, %v1676
    %v1687 = vand.u32 2147483647, %v1677
    %v1688 = vmul.f32 %v1678, 0.3275911
    %v1689 = vmul.f32 %v1679, 0.3275911
    %v1690 = vmul.f32 %v1680, 0.3275911
    %v1691 = vmul.f32 %v1681, 0.3275911
    %v1692 = vmul.f32 %v1682, 0.3275911
    %v1693 = vmul.f32 %v1683, 0.3275911
    %v1694 = vmul.f32 %v1684, 0.3275911
    %v1695 = vmul.f32 %v1685, 0.3275911
    %v1696 = vmul.f32 %v1686, 0.3275911
    %v1697 = vmul.f32 %v1687, 0.3275911
    %v1698 = vadd.f32 %v1688, 1.0
    %v1699 = vadd.f32 %v1689, 1.0
    %v1700 = vadd.f32 %v1690, 1.0
    %v1701 = vadd.f32 %v1691, 1.0
    %v1702 = vadd.f32 %v1692, 1.0
    %v1703 = vadd.f32 %v1693, 1.0
    %v1704 = vadd.f32 %v1694, 1.0
    %v1705 = vadd.f32 %v1695, 1.0
    %v1706 = vadd.f32 %v1696, 1.0
    %v1707 = vadd.f32 %v1697, 1.0
    %v1708 = vrcp.pop %v1698
    %v1709 = vrcp.pop %v1699
    %v1710 = vrcp.pop %v1700
    %v1711 = vrcp.pop %v1701
    %v1712 = vrcp.pop %v1702
    %v1713 = vrcp.pop %v1703
    %v1714 = vrcp.pop %v1704
    %v1715 = vrcp.pop %v1705
    %v1716 = vrcp.pop %v1706
    %v1717 = vrcp.pop %v1707
    %v1718 = vmul.f32 %v1708, 1.0614054
    %v1719 = vmul.f32 %v1709, 1.0614054
    %v1720 = vmul.f32 %v1710, 1.0614054
    %v1721 = vmul.f32 %v1711, 1.0614054
    %v1722 = vmul.f32 %v1712, 1.0614054
    %v1723 = vmul.f32 %v1713, 1.0614054
    %v1724 = vmul.f32 %v1714, 1.0614054
    %v1725 = vmul.f32 %v1715, 1.0614054
    %v1726 = vmul.f32 %v1716, 1.0614054
    %v1727 = vmul.f32 %v1717, 1.0614054
    %v1728 = vadd.f32 %v1718, -1.4531521
    %v1729 = vadd.f32 %v1719, -1.4531521
    %v1730 = vadd.f32 %v1720, -1.4531521
    %v1731 = vadd.f32 %v1721, -1.4531521
    %v1732 = vadd.f32 %v1722, -1.4531521
    %v1733 = vadd.f32 %v1723, -1.4531521
    %v1734 = vadd.f32 %v1724, -1.4531521
    %v1735 = vadd.f32 %v1725, -1.4531521
    %v1736 = vadd.f32 %v1726, -1.4531521
    %v1737 = vadd.f32 %v1727, -1.4531521
    %v1738 = vmul.f32 %v1708, %v1728
    %v1739 = vmul.f32 %v1709, %v1729
    %v1740 = vmul.f32 %v1710, %v1730
    %v1741 = vmul.f32 %v1711, %v1731
    %v1742 = vmul.f32 %v1712, %v1732
    %v1743 = vmul.f32 %v1713, %v1733
    %v1744 = vmul.f32 %v1714, %v1734
    %v1745 = vmul.f32 %v1715, %v1735
    %v1746 = vmul.f32 %v1716, %v1736
    %v1747 = vmul.f32 %v1717, %v1737
    %v1748 = vadd.f32 %v1738, 1.4214138
    %v1749 = vadd.f32 %v1739, 1.4214138
    %v1750 = vadd.f32 %v1740, 1.4214138
    %v1751 = vadd.f32 %v1741, 1.4214138
    %v1752 = vadd.f32 %v1742, 1.4214138
    %v1753 = vadd.f32 %v1743, 1.4214138
    %v1754 = vadd.f32 %v1744, 1.4214138
    %v1755 = vadd.f32 %v1745, 1.4214138
    %v1756 = vadd.f32 %v1746, 1.4214138
    %v1757 = vadd.f32 %v1747, 1.4214138
    %v1758 = vmul.f32 %v1708, %v1748
    %v1759 = vmul.f32 %v1709, %v1749
    %v1760 = vmul.f32 %v1710, %v1750
    %v1761 = vmul.f32 %v1711, %v1751
    %v1762 = vmul.f32 %v1712, %v1752
    %v1763 = vmul.f32 %v1713, %v1753
    %v1764 = vmul.f32 %v1714, %v1754
    %v1765 = vmul.f32 %v1715, %v1755
    %v1766 = vmul.f32 %v1716, %v1756
    %v1767 = vmul.f32 %v1717, %v1757
    %v1768 = vadd.f32 %v1758, -0.28449672
    %v1769 = vadd.f32 %v1759, -0.28449672
    %v1770 = vadd.f32 %v1760, -0.28449672
    %v1771 = vadd.f32 %v1761, -0.28449672
    %v1772 = vadd.f32 %v1762, -0.28449672
    %v1773 = vadd.f32 %v1763, -0.28449672
    %v1774 = vadd.f32 %v1764, -0.28449672
    %v1775 = vadd.f32 %v1765, -0.28449672
    %v1776 = vadd.f32 %v1766, -0.28449672
    %v1777 = vadd.f32 %v1767, -0.28449672
    %v1778 = vmul.f32 %v1708, %v1768
    %v1779 = vmul.f32 %v1709, %v1769
    %v1780 = vmul.f32 %v1710, %v1770
    %v1781 = vmul.f32 %v1711, %v1771
    %v1782 = vmul.f32 %v1712, %v1772
    %v1783 = vmul.f32 %v1713, %v1773
    %v1784 = vmul.f32 %v1714, %v1774
    %v1785 = vmul.f32 %v1715, %v1775
    %v1786 = vmul.f32 %v1716, %v1776
    %v1787 = vmul.f32 %v1717, %v1777
    %v1788 = vadd.f32 %v1778, 0.2548296
    %v1789 = vadd.f32 %v1779, 0.2548296
    %v1790 = vadd.f32 %v1780, 0.2548296
    %v1791 = vadd.f32 %v1781, 0.2548296
    %v1792 = vadd.f32 %v1782, 0.2548296
    %v1793 = vadd.f32 %v1783, 0.2548296
    %v1794 = vadd.f32 %v1784, 0.2548296
    %v1795 = vadd.f32 %v1785, 0.2548296
    %v1796 = vadd.f32 %v1786, 0.2548296
    %v1797 = vadd.f32 %v1787, 0.2548296
    %v1798 = vmul.f32 %v1708, %v1788
    %v1799 = vmul.f32 %v1709, %v1789
    %v1800 = vmul.f32 %v1710, %v1790
    %v1801 = vmul.f32 %v1711, %v1791
    %v1802 = vmul.f32 %v1712, %v1792
    %v1803 = vmul.f32 %v1713, %v1793
    %v1804 = vmul.f32 %v1714, %v1794
    %v1805 = vmul.f32 %v1715, %v1795
    %v1806 = vmul.f32 %v1716, %v1796
    %v1807 = vmul.f32 %v1717, %v1797
    %v1808 = vsub.f32 0.0, %v1678
    %v1809 = vsub.f32 0.0, %v1679
    %v1810 = vsub.f32 0.0, %v1680
    %v1811 = vsub.f32 0.0, %v1681
    %v1812 = vsub.f32 0.0, %v1682
    %v1813 = vsub.f32 0.0, %v1683
    %v1814 = vsub.f32 0.0, %v1684
    %v1815 = vsub.f32 0.0, %v1685
    %v1816 = vsub.f32 0.0, %v1686
    %v1817 = vsub.f32 0.0, %v1687
    %v1818 = vmul.f32 %v1808, %v1678
    %v1819 = vmul.f32 %v1809, %v1679
    %v1820 = vmul.f32 %v1810, %v1680
    %v1821 = vmul.f32 %v1811, %v1681
    %v1822 = vmul.f32 %v1812, %v1682
    %v1823 = vmul.f32 %v1813, %v1683
    %v1824 = vmul.f32 %v1814, %v1684
    %v1825 = vmul.f32 %v1815, %v1685
    %v1826 = vmul.f32 %v1816, %v1686
    %v1827 = vmul.f32 %v1817, %v1687
    %v1828 = vmul.f32 %v1818, 1.442695
    %v1829 = vpow.pop %v1828
    %v1830 = vmul.f32 %v1819, 1.442695
    %v1831 = vpow.pop %v1830
    %v1832 = vmul.f32 %v1820, 1.442695
    %v1833 = vpow.pop %v1832
    %v1834 = vmul.f32 %v1821, 1.442695
    %v1835 = vpow.pop %v1834
    %v1836 = vmul.f32 %v1822, 1.442695
    %v1837 = vpow.pop %v1836
    %v1838 = vmul.f32 %v1823, 1.442695
    %v1839 = vpow.pop %v1838
    %v1840 = vmul.f32 %v1824, 1.442695
    %v1841 = vpow.pop %v1840
    %v1842 = vmul.f32 %v1825, 1.442695
    %v1843 = vpow.pop %v1842
    %v1844 = vmul.f32 %v1826, 1.442695
    %v1845 = vpow.pop %v1844
    %v1846 = vmul.f32 %v1827, 1.442695
    %v1847 = vpow.pop %v1846
    %v1848 = vmul.f32 %v1798, %v1829
    %v1849 = vmul.f32 %v1799, %v1831
    %v1850 = vmul.f32 %v1800, %v1833
    %v1851 = vmul.f32 %v1801, %v1835
    %v1852 = vmul.f32 %v1802, %v1837
    %v1853 = vmul.f32 %v1803, %v1839
    %v1854 = vmul.f32 %v1804, %v1841
    %v1855 = vmul.f32 %v1805, %v1843
    %v1856 = vmul.f32 %v1806, %v1845
    %v1857 = vmul.f32 %v1807, %v1847
    %v1858 = vsub.f32 1.0, %v1848
    %v1859 = vsub.f32 1.0, %v1849
    %v1860 = vsub.f32 1.0, %v1850
    %v1861 = vsub.f32 1.0, %v1851
    %v1862 = vsub.f32 1.0, %v1852
    %v1863 = vsub.f32 1.0, %v1853
    %v1864 = vsub.f32 1.0, %v1854
    %v1865 = vsub.f32 1.0, %v1855
    %v1866 = vsub.f32 1.0, %v1856
    %v1867 = vsub.f32 1.0, %v1857
    %vm1868 = vcmp.ge.f32.partialorder %v1668, 0.0
    %vm1869 = vcmp.ge.f32.partialorder %v1669, 0.0
    %vm1870 = vcmp.ge.f32.partialorder %v1670, 0.0
    %vm1871 = vcmp.ge.f32.partialorder %v1671, 0.0
    %vm1872 = vcmp.ge.f32.partialorder %v1672, 0.0
    %vm1873 = vcmp.ge.f32.partialorder %v1673, 0.0
    %vm1874 = vcmp.ge.f32.partialorder %v1674, 0.0
    %vm1875 = vcmp.ge.f32.partialorder %v1675, 0.0
    %vm1876 = vcmp.ge.f32.partialorder %v1676, 0.0
    %vm1877 = vcmp.ge.f32.partialorder %v1677, 0.0
    %v1878 = vsub.f32 0.0, %v1858
    %v1879 = vsub.f32 0.0, %v1859
    %v1880 = vsub.f32 0.0, %v1860
    %v1881 = vsub.f32 0.0, %v1861
    %v1882 = vsub.f32 0.0, %v1862
    %v1883 = vsub.f32 0.0, %v1863
    %v1884 = vsub.f32 0.0, %v1864
    %v1885 = vsub.f32 0.0, %v1865
    %v1886 = vsub.f32 0.0, %v1866
    %v1887 = vsub.f32 0.0, %v1867
    %v1888 = vsel %vm1868, %v1858, %v1878
    %v1889 = vsel %vm1869, %v1859, %v1879
    %v1890 = vsel %vm1870, %v1860, %v1880
    %v1891 = vsel %vm1871, %v1861, %v1881
    %v1892 = vsel %vm1872, %v1862, %v1882
    %v1893 = vsel %vm1873, %v1863, %v1883
    %v1894 = vsel %vm1874, %v1864, %v1884
    %v1895 = vsel %vm1875, %v1865, %v1885
    %v1896 = vsel %vm1876, %v1866, %v1886
    %v1897 = vsel %vm1877, %v1867, %v1887
    %v1898 = vmul.f32 %v1642, 0.5
    %v1899 = vmul.f32 %v1644, 0.5
    %v1900 = vmul.f32 %v1646, 0.5
    %v1901 = vmul.f32 %v1648, 0.5
    %v1902 = vmul.f32 %v1652, 0.5
    %v1903 = vmul.f32 %v1654, 0.5
    %v1904 = vmul.f32 %v1656, 0.5
    %v1905 = vmul.f32 %v1658, 0.5
    %v1906 = vmul.f32 %v1662, 0.5
    %v1907 = vmul.f32 %v1664, 0.5
    %v1908 = vadd.f32 %v1888, 1.0
    %v1909 = vadd.f32 %v1889, 1.0
    %v1910 = vadd.f32 %v1890, 1.0
    %v1911 = vadd.f32 %v1891, 1.0
    %v1912 = vadd.f32 %v1892, 1.0
    %v1913 = vadd.f32 %v1893, 1.0
    %v1914 = vadd.f32 %v1894, 1.0
    %v1915 = vadd.f32 %v1895, 1.0
    %v1916 = vadd.f32 %v1896, 1.0
    %v1917 = vadd.f32 %v1897, 1.0
    %v1918 = vmul.f32 %v1898, %v1908
    %v1919 = vmul.f32 %v1899, %v1909
    %v1920 = vmul.f32 %v1900, %v1910
    %v1921 = vmul.f32 %v1901, %v1911
    %v1922 = vmul.f32 %v1902, %v1912
    %v1923 = vmul.f32 %v1903, %v1913
    %v1924 = vmul.f32 %v1904, %v1914
    %v1925 = vmul.f32 %v1905, %v1915
    %v1926 = vmul.f32 %v1906, %v1916
    %v1927 = vmul.f32 %v1907, %v1917
    %v1928 = vpack.c.bf16 %v1920, %v1918
    %v1929 = vpack.c.bf16 %v1921, %v1919
    %v1930 = vpack.c.bf16 %v1924, %v1922
    %v1931 = vpack.c.bf16 %v1925, %v1923
    %v1932 = vpack.c.bf16 %v1926, %v1926
    %v1933 = vpack.c.bf16 %v1927, %v1927
    %v1934 = vld [vmem:[%s9] sm:$0xf]
    %v1935 = vld [vmem:[%s9 + $0x4] sm:$0xf]
    %v1936 = vld [vmem:[%s9 + $0x8] sm:$0xf]
    %v1937 = vld [vmem:[%s9 + $0xc] sm:$0xf]
    %v1938 = vld [vmem:[%s9 + $0x10] sm:$0xf]
    %v1939 = vld [vmem:[%s9 + $0x14] sm:$0xf]
    %v1940 = vld [vmem:[%s9 + $0x18] sm:$0xf]
    %v1941 = vld [vmem:[%s9 + $0x1c] sm:$0xf]
    %v1942 = vld [vmem:[%s9 + $0x20] sm:$0xf]
    %v1943 = vld [vmem:[%s9 + $0x24] sm:$0xf]
    %v1944 = vld [vmem:[%s9 + $0x28] sm:$0xf]
    %v1945 = vld [vmem:[%s9 + $0x2c] sm:$0xf]
    %v1946 = vld [vmem:[%s9 + $0x30] sm:$0xf]
    %v1947 = vld [vmem:[%s9 + $0x34] sm:$0xf]
    %v1948 = vld [vmem:[%s9 + $0x38] sm:$0xf]
    %v1949 = vld [vmem:[%s9 + $0x3c] sm:$0xf]
    %v1950 = vld [vmem:[%s9 + $0x40] sm:$0xf]
    %v1951 = vld [vmem:[%s9 + $0x44] sm:$0xf]
    %v1952 = vld [vmem:[%s9 + $0x48] sm:$0xf]
    %v1953 = vld [vmem:[%s9 + $0x4c] sm:$0xf]
    %v1954 = vld [vmem:[%s9 + $0x50] sm:$0xf]
    %v1955 = vld [vmem:[%s9 + $0x54] sm:$0xf]
    %v1956 = vld [vmem:[%s9 + $0x58] sm:$0xf]
    %v1957 = vld [vmem:[%s9 + $0x5c] sm:$0xf]
    %v1958 = vld [vmem:[%s9 + $0x60] sm:$0xf]
    %v1959 = vld [vmem:[%s9 + $0x64] sm:$0xf]
    %v1960 = vld [vmem:[%s9 + $0x68] sm:$0xf]
    %v1961 = vld [vmem:[%s9 + $0x6c] sm:$0xf]
    %v1962 = vld [vmem:[%s9 + $0x70] sm:$0xf]
    %v1963 = vld [vmem:[%s9 + $0x74] sm:$0xf]
    %v1964 = vld [vmem:[%s9 + $0x78] sm:$0xf]
    %v1965 = vld [vmem:[%s9 + $0x7c] sm:$0xf]
    %v1966 = vlaneseq
    %v1967 = vshrl.u32 %v1966, 7
    %v1968 = vsub.s32 5, %v1967
    %v1969 = vrot.slane %v297, %v1968
    %v2002 = vunpack.c.l.b16 %v1934
    %v2003 = vunpack.c.l.b16 %v1935
    %v2004 = vunpack.c.l.b16 %v1936
    %v2005 = vunpack.c.l.b16 %v1937
    %v2006 = vunpack.c.l.b16 %v1938
    %v2007 = vunpack.c.l.b16 %v1939
    %v2008 = vunpack.c.l.b16 %v1940
    %v2009 = vunpack.c.l.b16 %v1941
    %v2010 = vunpack.c.l.b16 %v1942
    %v2011 = vunpack.c.l.b16 %v1943
    %v2012 = vunpack.c.l.b16 %v1944
    %v2013 = vunpack.c.l.b16 %v1945
    %v2014 = vunpack.c.l.b16 %v1946
    %v2015 = vunpack.c.l.b16 %v1947
    %v2016 = vunpack.c.l.b16 %v1948
    %v2017 = vunpack.c.l.b16 %v1949
    %v2018 = vunpack.c.l.b16 %v1950
    %v2019 = vunpack.c.l.b16 %v1951
    %v2020 = vunpack.c.l.b16 %v1952
    %v2021 = vunpack.c.l.b16 %v1953
    %v2022 = vunpack.c.l.b16 %v1954
    %v2023 = vunpack.c.l.b16 %v1955
    %v2024 = vunpack.c.l.b16 %v1956
    %v2025 = vunpack.c.l.b16 %v1957
    %v2026 = vunpack.c.l.b16 %v1958
    %v2027 = vunpack.c.l.b16 %v1959
    %v2028 = vunpack.c.l.b16 %v1960
    %v2029 = vunpack.c.l.b16 %v1961
    %v2030 = vunpack.c.l.b16 %v1962
    %v2031 = vunpack.c.l.b16 %v1963
    %v2032 = vunpack.c.l.b16 %v1964
    %v2033 = vunpack.c.l.b16 %v1965
    %v2034 = vpack.c.b16 %v2003, %v2002
    %v2035 = vpack.c.b16 %v2005, %v2004
    %v2036 = vpack.c.b16 %v2007, %v2006
    %v2037 = vpack.c.b16 %v2009, %v2008
    %v2038 = vpack.c.b16 %v2011, %v2010
    %v2039 = vpack.c.b16 %v2013, %v2012
    %v2040 = vpack.c.b16 %v2015, %v2014
    %v2041 = vpack.c.b16 %v2017, %v2016
    %v2042 = vpack.c.b16 %v2019, %v2018
    %v2043 = vpack.c.b16 %v2021, %v2020
    %v2044 = vpack.c.b16 %v2023, %v2022
    %v2045 = vpack.c.b16 %v2025, %v2024
    %v2046 = vpack.c.b16 %v2027, %v2026
    %v2047 = vpack.c.b16 %v2029, %v2028
    %v2048 = vpack.c.b16 %v2031, %v2030
    %v2049 = vpack.c.b16 %v2033, %v2032
    %2066 = vmatprep.subr.bf16.mxu0 0
    %2067 = vmatpush1.bf16.msra.mxu0 %v2034
    %2068 = vmatprep.subr.bf16.mxu0 0
    %2069 = vmatpush1.bf16.msra.mxu0 %v2035
    %2070 = vmatprep.subr.bf16.mxu0 0
    %2071 = vmatpush1.bf16.msra.mxu0 %v2036
    %2072 = vmatprep.subr.bf16.mxu0 0
    %2073 = vmatpush1.bf16.msra.mxu0 %v2037
    %2074 = vmatprep.subr.bf16.mxu0 0
    %2075 = vmatpush1.bf16.msra.mxu0 %v2038
    %2076 = vmatprep.subr.bf16.mxu0 0
    %2077 = vmatpush1.bf16.msra.mxu0 %v2039
    %2078 = vmatprep.subr.bf16.mxu0 0
    %2079 = vmatpush1.bf16.msra.mxu0 %v2040
    %2080 = vmatprep.subr.bf16.mxu0 0
    %2081 = vmatpush1.bf16.msra.mxu0 %v2041
    %2082 = vmatprep.subr.bf16.mxu0 0
    %2083 = vmatpush1.bf16.msra.mxu0 %v2042
    %2084 = vmatprep.subr.bf16.mxu0 0
    %2085 = vmatpush1.bf16.msra.mxu0 %v2043
    %2086 = vmatprep.subr.bf16.mxu0 0
    %2087 = vmatpush1.bf16.msra.mxu0 %v2044
    %2088 = vmatprep.subr.bf16.mxu0 0
    %2089 = vmatpush1.bf16.msra.mxu0 %v2045
    %2090 = vmatprep.subr.bf16.mxu0 0
    %2091 = vmatpush1.bf16.msra.mxu0 %v2046
    %2092 = vmatprep.subr.bf16.mxu0 0
    %2093 = vmatpush1.bf16.msra.mxu0 %v2047
    %2094 = vmatprep.subr.bf16.mxu0 0
    %2095 = vmatpush1.bf16.msra.mxu0 %v2048
    %2096 = vmatprep.subr.bf16.mxu0 0
    %2097 = vmatpush1.bf16.msra.mxu0 %v2049
    %2098 = vmatprep.mubr.bf16.mxu0 %v1929
    %2099 = vmatmul.mubr.bf16.gmra.mrb[0].mxu0 %v1928
    %v2100 = vpop.f32.mrb[0].mxu0
    %v2101 = vadd.f32 %v1969, %v2100
    %v2102 = vpop.f32.mrb[0].mxu0
    %v2103 = vpop.f32.mrb[0].mxu0
    %v2104 = vadd.f32 %v1969, %v2103
    %v2105 = vpop.f32.mrb[0].mxu0
    %2106 = vmatprep.mubr.bf16.mxu0 %v1931
    %2107 = vmatmul.mubr.bf16.gmra.mrb[0].mxu0 %v1930
    %v2108 = vpop.f32.mrb[0].mxu0
    %v2109 = vadd.f32 %v1969, %v2108
    %v2110 = vpop.f32.mrb[0].mxu0
    %v2111 = vpop.f32.mrb[0].mxu0
    %v2112 = vadd.f32 %v1969, %v2111
    %v2113 = vpop.f32.mrb[0].mxu0
    %2114 = vmatprep.mubr.bf16.mxu0 %v1933
    %2115 = vmatmul.mubr.bf16.gmra.mrb[0].mxu0 %v1932
    %v2116 = vpop.f32.mrb[0].mxu0
    %v2117 = vadd.f32 %v1969, %v2116
    %v2118 = vpop.f32.mrb[0].mxu0
    %v2119 = vpop.f32.mrb[0].mxu0
    %v2120 = vpop.f32.mrb[0].mxu0
    %2121 = vdwg.mxu0
    %v2122 = vadd.f32 %v1447, %v2101
    %v2123 = vadd.f32 %v1448, %v2104
    %v2124 = vadd.f32 %v1449, %v2109
    %v2125 = vadd.f32 %v1450, %v2112
    %v2126 = vadd.f32 %v1451, %v2117
    %s2127 = scalar_lea.vmem %s3, 8
    %v2128 = vld [vmem:[%s2127] sm:$0x3f]
    %v2129 = vsel %vm231, %v2122, 0.0
    %2130 = vadd.xlane.f32.xlu0 %v2129
    %v2131 = vpop.xlane.xlu0 %2130
    %v2132 = vsel %vm231, %v2123, 0.0
    %2133 = vadd.xlane.f32.xlu0 %v2132
    %v2134 = vpop.xlane.xlu0 %2133
    %v2135 = vsel %vm231, %v2124, 0.0
    %2136 = vadd.xlane.f32.xlu0 %v2135
    %v2137 = vpop.xlane.xlu0 %2136
    %v2138 = vsel %vm231, %v2125, 0.0
    %2139 = vadd.xlane.f32.xlu0 %v2138
    %v2140 = vpop.xlane.xlu0 %2139
    %v2141 = vsel %vm310, %v2126, 0.0
    %2142 = vadd.xlane.f32.xlu0 %v2141
    %v2143 = vpop.xlane.xlu0 %2142
    %v2144 = vmul.f32 %v2131, %v314
    %v2145 = vmul.f32 %v2134, %v314
    %v2146 = vmul.f32 %v2137, %v314
    %v2147 = vmul.f32 %v2140, %v314
    %v2148 = vmul.f32 %v2143, %v314
    %v2149 = vsub.f32 %v2122, %v2144
    %v2150 = vsub.f32 %v2123, %v2145
    %v2151 = vsub.f32 %v2124, %v2146
    %v2152 = vsub.f32 %v2125, %v2147
    %v2153 = vsub.f32 %v2126, %v2148
    %v2154 = vmul.f32 %v2149, %v2149
    %v2155 = vmul.f32 %v2150, %v2150
    %v2156 = vmul.f32 %v2151, %v2151
    %v2157 = vmul.f32 %v2152, %v2152
    %v2158 = vmul.f32 %v2153, %v2153
    %v2159 = vsel %vm231, %v2154, 0.0
    %2160 = vadd.xlane.f32.xlu0 %v2159
    %v2161 = vpop.xlane.xlu0 %2160
    %v2162 = vsel %vm231, %v2155, 0.0
    %2163 = vadd.xlane.f32.xlu0 %v2162
    %v2164 = vpop.xlane.xlu0 %2163
    %v2165 = vsel %vm231, %v2156, 0.0
    %2166 = vadd.xlane.f32.xlu0 %v2165
    %v2167 = vpop.xlane.xlu0 %2166
    %v2168 = vsel %vm231, %v2157, 0.0
    %2169 = vadd.xlane.f32.xlu0 %v2168
    %v2170 = vpop.xlane.xlu0 %2169
    %v2171 = vsel %vm310, %v2158, 0.0
    %2172 = vadd.xlane.f32.xlu0 %v2171
    %v2173 = vpop.xlane.xlu0 %2172
    %v2174 = vmul.f32 %v2161, %v314
    %v2175 = vmul.f32 %v2164, %v314
    %v2176 = vmul.f32 %v2167, %v314
    %v2177 = vmul.f32 %v2170, %v314
    %v2178 = vmul.f32 %v2173, %v314
    %v2179 = vadd.f32 %v2174, 1e-06
    %v2180 = vadd.f32 %v2175, 1e-06
    %v2181 = vadd.f32 %v2176, 1e-06
    %v2182 = vadd.f32 %v2177, 1e-06
    %v2183 = vadd.f32 %v2178, 1e-06
    %v2184 = vrsqrt.pop %v2179
    %v2185 = vrsqrt.pop %v2180
    %v2186 = vrsqrt.pop %v2181
    %v2187 = vrsqrt.pop %v2182
    %v2188 = vrsqrt.pop %v2183
    %v2189 = vmul.f32 %v2149, %v2184
    %v2190 = vmul.f32 %v2150, %v2185
    %v2191 = vmul.f32 %v2151, %v2186
    %v2192 = vmul.f32 %v2152, %v2187
    %v2193 = vmul.f32 %v2153, %v2188
    %v2194 = vlaneseq
    %v2195 = vshrl.u32 %v2194, 7
    %v2196 = vsub.s32 0, %v2195
    %v2197 = vrot.slane %v2128, %v2196
    %v2198 = vmul.f32 %v2189, %v2197
    %v2199 = vmul.f32 %v2190, %v2197
    %v2200 = vmul.f32 %v2191, %v2197
    %v2201 = vmul.f32 %v2192, %v2197
    %v2202 = vmul.f32 %v2193, %v2197
    %v2203 = vlaneseq
    %v2204 = vshrl.u32 %v2203, 7
    %v2205 = vsub.s32 1, %v2204
    %v2206 = vrot.slane %v2128, %v2205
    %v2207 = vadd.f32 %v2198, %v2206
    %v2208 = vadd.f32 %v2199, %v2206
    %v2209 = vadd.f32 %v2200, %v2206
    %v2210 = vadd.f32 %v2201, %v2206
    %v2211 = vadd.f32 %v2202, %v2206
    %v2212 = vpack.c.bf16 %v2208, %v2207
    %v2213 = vpack.c.bf16 %v2210, %v2209
    %v2214 = vpack.c.bf16 %v2211, %v2211
    %s2215 = scalar_lea.vmem %s4, 64
    %v2216 = vld [vmem:[%s2215] sm:$0xff]
    %v2217 = vld [vmem:[%s2215 + $0x8] sm:$0xff]
    %v2218 = vld [vmem:[%s2215 + $0x10] sm:$0xff]
    %v2219 = vld [vmem:[%s2215 + $0x18] sm:$0xff]
    %v2220 = vld [vmem:[%s2215 + $0x20] sm:$0xff]
    %v2221 = vld [vmem:[%s2215 + $0x28] sm:$0xff]
    %v2222 = vld [vmem:[%s2215 + $0x30] sm:$0xff]
    %v2223 = vld [vmem:[%s2215 + $0x38] sm:$0xff]
    %s2224 = scalar_lea.vmem %s5, 2
    %v2225 = vld [vmem:[%s2224] sm:$0x3]
    %v2227 = vlaneseq
    %v2228 = vshrl.u32 %v2227, 7
    %v2229 = vsub.s32 0, %v2228
    %v2230 = vrot.slane %v2225, %v2229
    %v2231 = vlaneseq
    %v2232 = vshrl.u32 %v2231, 7
    %v2233 = vsub.s32 1, %v2232
    %v2234 = vrot.slane %v2225, %v2233
    %v2245 = vunpack.c.l.b16 %v2216
    %v2246 = vunpack.c.h.b16 %v2216
    %v2247 = vunpack.c.l.b16 %v2217
    %v2248 = vunpack.c.h.b16 %v2217
    %v2249 = vunpack.c.l.b16 %v2218
    %v2250 = vunpack.c.h.b16 %v2218
    %v2251 = vunpack.c.l.b16 %v2219
    %v2252 = vunpack.c.h.b16 %v2219
    %v2253 = vunpack.c.l.b16 %v2220
    %v2254 = vunpack.c.h.b16 %v2220
    %v2255 = vunpack.c.l.b16 %v2221
    %v2256 = vunpack.c.h.b16 %v2221
    %v2257 = vunpack.c.l.b16 %v2222
    %v2258 = vunpack.c.h.b16 %v2222
    %v2259 = vunpack.c.l.b16 %v2223
    %v2260 = vunpack.c.h.b16 %v2223
    %v2261 = vpack.c.b16 %v2247, %v2245
    %v2262 = vpack.c.b16 %v2248, %v2246
    %v2263 = vpack.c.b16 %v2251, %v2249
    %v2264 = vpack.c.b16 %v2252, %v2250
    %v2265 = vpack.c.b16 %v2255, %v2253
    %v2266 = vpack.c.b16 %v2256, %v2254
    %v2267 = vpack.c.b16 %v2259, %v2257
    %v2268 = vpack.c.b16 %v2260, %v2258
    %v2278 = vsel %vm231, %v2212, 0
    %v2281 = vsel %vm231, %v2213, 0
    %v2284 = vsel %vm231, %v2214, 0
    %2286 = vmatprep.subr.bf16.mxu0 %v2262
    %2287 = vmatpush1.bf16.msra.mxu0 %v2261
    %2288 = vmatprep.subr.bf16.mxu0 %v2264
    %2289 = vmatpush1.bf16.msra.mxu0 %v2263
    %2290 = vmatprep.subr.bf16.mxu0 %v2266
    %2291 = vmatpush1.bf16.msra.mxu0 %v2265
    %2292 = vmatprep.subr.bf16.mxu0 %v2268
    %2293 = vmatpush1.bf16.msra.mxu0 %v2267
    %2294 = vmatprep.subr.bf16.mxu0 0
    %2295 = vmatpush1.bf16.msra.mxu0 0
    %2296 = vmatprep.subr.bf16.mxu0 0
    %2297 = vmatpush1.bf16.msra.mxu0 0
    %2298 = vmatprep.subr.bf16.mxu0 0
    %2299 = vmatpush1.bf16.msra.mxu0 0
    %2300 = vmatprep.subr.bf16.mxu0 0
    %2301 = vmatpush1.bf16.msra.mxu0 0
    %2302 = vmatprep.subr.bf16.mxu0 0
    %2303 = vmatpush1.bf16.msra.mxu0 0
    %2304 = vmatprep.subr.bf16.mxu0 0
    %2305 = vmatpush1.bf16.msra.mxu0 0
    %2306 = vmatprep.subr.bf16.mxu0 0
    %2307 = vmatpush1.bf16.msra.mxu0 0
    %2308 = vmatprep.subr.bf16.mxu0 0
    %2309 = vmatpush1.bf16.msra.mxu0 0
    %2310 = vmatprep.subr.bf16.mxu0 0
    %2311 = vmatpush1.bf16.msra.mxu0 0
    %2312 = vmatprep.subr.bf16.mxu0 0
    %2313 = vmatpush1.bf16.msra.mxu0 0
    %2314 = vmatprep.subr.bf16.mxu0 0
    %2315 = vmatpush1.bf16.msra.mxu0 0
    %2316 = vmatprep.subr.bf16.mxu0 0
    %2317 = vmatpush1.bf16.msra.mxu0 0
    %2318 = vmatprep.mubr.bf16.mxu0 0
    %2319 = vmatmul.mubr.bf16.gmra.mrb[0].mxu0 %v2278
    %v2320 = vpop.f32.mrb[0].mxu0
    %v2321 = vadd.f32 %v2230, %v2320
    %v2322 = vpop.f32.mrb[0].mxu0
    %v2323 = vadd.f32 %v2234, %v2322
    %v2324 = vpop.f32.mrb[0].mxu0
    %v2325 = vadd.f32 %v2230, %v2324
    %v2326 = vpop.f32.mrb[0].mxu0
    %v2327 = vadd.f32 %v2234, %v2326
    %2328 = vmatprep.mubr.bf16.mxu0 0
    %2329 = vmatmul.mubr.bf16.gmra.mrb[0].mxu0 %v2281
    %v2330 = vpop.f32.mrb[0].mxu0
    %v2331 = vadd.f32 %v2230, %v2330
    %v2332 = vpop.f32.mrb[0].mxu0
    %v2333 = vadd.f32 %v2234, %v2332
    %v2334 = vpop.f32.mrb[0].mxu0
    %v2335 = vadd.f32 %v2230, %v2334
    %v2336 = vpop.f32.mrb[0].mxu0
    %v2337 = vadd.f32 %v2234, %v2336
    %2338 = vmatprep.mubr.bf16.mxu0 0
    %2339 = vmatmul.mubr.bf16.gmra.mrb[0].mxu0 %v2284
    %v2340 = vpop.f32.mrb[0].mxu0
    %v2341 = vadd.f32 %v2230, %v2340
    %v2342 = vpop.f32.mrb[0].mxu0
    %v2343 = vadd.f32 %v2234, %v2342
    %v2344 = vpop.f32.mrb[0].mxu0
    %v2345 = vpop.f32.mrb[0].mxu0
    %2346 = vdwg.mxu0
    %v2347 = vpack.c.bf16 %v2325, %v2321
    %v2348 = vpack.c.bf16 %v2335, %v2331
    %v2349 = vpack.c.bf16 %v2341, %v2341
    %v2350 = vpack.c.bf16 %v2327, %v2323
    %v2351 = vpack.c.bf16 %v2337, %v2333
    %v2352 = vpack.c.bf16 %v2343, %v2343
    %v2354 = vsel %vm593, %v2349, 0
    %2356 = vmatprep.subr.bf16.mxu0 0
    %2357 = vmatpush1.bf16.msra.mxu0 %v2347
    %2358 = vmatprep.subr.bf16.mxu0 0
    %2359 = vmatpush1.bf16.msra.mxu0 %v2348
    %2360 = vmatprep.subr.bf16.mxu0 0
    %2361 = vmatpush1.bf16.msra.mxu0 %v2354
    %2362 = vmatprep.subr.bf16.mxu0 0
    %2363 = vmatpush1.bf16.msra.mxu0 0
    %2364 = vmatprep.subr.bf16.mxu0 0
    %2365 = vmatpush1.bf16.msra.mxu0 0
    %2366 = vmatprep.subr.bf16.mxu0 0
    %2367 = vmatpush1.bf16.msra.mxu0 0
    %2368 = vmatprep.subr.bf16.mxu0 0
    %2369 = vmatpush1.bf16.msra.mxu0 0
    %2370 = vmatprep.subr.bf16.mxu0 0
    %2371 = vmatpush1.bf16.msra.mxu0 0
    %2372 = vmatprep.subr.bf16.mxu0 0
    %2373 = vmatpush1.bf16.msra.mxu0 0
    %2374 = vmatprep.subr.bf16.mxu0 0
    %2375 = vmatpush1.bf16.msra.mxu0 0
    %2376 = vmatprep.subr.bf16.mxu0 0
    %2377 = vmatpush1.bf16.msra.mxu0 0
    %2378 = vmatprep.subr.bf16.mxu0 0
    %2379 = vmatpush1.bf16.msra.mxu0 0
    %2380 = vmatprep.subr.bf16.mxu0 0
    %2381 = vmatpush1.bf16.msra.mxu0 0
    %2382 = vmatprep.subr.bf16.mxu0 0
    %2383 = vmatpush1.bf16.msra.mxu0 0
    %2384 = vmatprep.subr.bf16.mxu0 0
    %2385 = vmatpush1.bf16.msra.mxu0 0
    %2386 = vmatprep.subr.bf16.mxu0 0
    %2387 = vmatpush1.bf16.msra.mxu0 0
    %2388 = vmatprep.mubr.bf16.mxu0 0
    %2389 = vmatmul.mubr.bf16.gmra.mrb[0].mxu0 %v567
    %v2390 = vpop.f32.mrb[0].mxu0
    %v2391 = vadd.f32 0.0, %v2390
    %v2392 = vpop.f32.mrb[0].mxu0
    %v2393 = vpop.f32.mrb[0].mxu0
    %v2394 = vadd.f32 0.0, %v2393
    %v2395 = vpop.f32.mrb[0].mxu0
    %2396 = vmatprep.mubr.bf16.mxu0 0
    %2397 = vmatmul.mubr.bf16.gmra.mrb[0].mxu0 %v570
    %v2398 = vpop.f32.mrb[0].mxu0
    %v2399 = vadd.f32 0.0, %v2398
    %v2400 = vpop.f32.mrb[0].mxu0
    %v2401 = vpop.f32.mrb[0].mxu0
    %v2402 = vadd.f32 0.0, %v2401
    %v2403 = vpop.f32.mrb[0].mxu0
    %2404 = vmatprep.mubr.bf16.mxu0 0
    %2405 = vmatmul.mubr.bf16.gmra.mrb[0].mxu0 %v573
    %v2406 = vpop.f32.mrb[0].mxu0
    %v2407 = vadd.f32 0.0, %v2406
    %v2408 = vpop.f32.mrb[0].mxu0
    %v2409 = vpop.f32.mrb[0].mxu0
    %v2410 = vadd.f32 0.0, %v2409
    %v2411 = vpop.f32.mrb[0].mxu0
    %2412 = vmatprep.mubr.bf16.mxu0 0
    %2413 = vmatmul.mubr.bf16.gmra.mrb[0].mxu0 %v576
    %v2414 = vpop.f32.mrb[0].mxu0
    %v2415 = vadd.f32 0.0, %v2414
    %v2416 = vpop.f32.mrb[0].mxu0
    %v2417 = vpop.f32.mrb[0].mxu0
    %v2418 = vadd.f32 0.0, %v2417
    %v2419 = vpop.f32.mrb[0].mxu0
    %2420 = vmatprep.mubr.bf16.mxu0 0
    %2421 = vmatmul.mubr.bf16.gmra.mrb[0].mxu0 %v579
    %v2422 = vpop.f32.mrb[0].mxu0
    %v2423 = vadd.f32 0.0, %v2422
    %v2424 = vpop.f32.mrb[0].mxu0
    %v2425 = vpop.f32.mrb[0].mxu0
    %v2426 = vadd.f32 0.0, %v2425
    %v2427 = vpop.f32.mrb[0].mxu0
    %2428 = vmatprep.mubr.bf16.mxu0 0
    %2429 = vmatmul.mubr.bf16.gmra.mrb[0].mxu0 %v582
    %v2430 = vpop.f32.mrb[0].mxu0
    %v2431 = vadd.f32 0.0, %v2430
    %v2432 = vpop.f32.mrb[0].mxu0
    %v2433 = vpop.f32.mrb[0].mxu0
    %v2434 = vadd.f32 0.0, %v2433
    %v2435 = vpop.f32.mrb[0].mxu0
    %2436 = vmatprep.mubr.bf16.mxu0 0
    %2437 = vmatmul.mubr.bf16.gmra.mrb[0].mxu0 %v585
    %v2438 = vpop.f32.mrb[0].mxu0
    %v2439 = vadd.f32 0.0, %v2438
    %v2440 = vpop.f32.mrb[0].mxu0
    %v2441 = vpop.f32.mrb[0].mxu0
    %v2442 = vadd.f32 0.0, %v2441
    %v2443 = vpop.f32.mrb[0].mxu0
    %2444 = vmatprep.mubr.bf16.mxu0 0
    %2445 = vmatmul.mubr.bf16.gmra.mrb[0].mxu0 %v588
    %v2446 = vpop.f32.mrb[0].mxu0
    %v2447 = vadd.f32 0.0, %v2446
    %v2448 = vpop.f32.mrb[0].mxu0
    %v2449 = vpop.f32.mrb[0].mxu0
    %v2450 = vadd.f32 0.0, %v2449
    %v2451 = vpop.f32.mrb[0].mxu0
    %2452 = vmatprep.mubr.bf16.mxu0 0
    %2453 = vmatmul.mubr.bf16.gmra.mrb[0].mxu0 %v591
    %v2454 = vpop.f32.mrb[0].mxu0
    %v2455 = vadd.f32 0.0, %v2454
    %v2456 = vpop.f32.mrb[0].mxu0
    %v2457 = vpop.f32.mrb[0].mxu0
    %v2458 = vpop.f32.mrb[0].mxu0
    %2459 = vdwg.mxu0
    %v2460 = vmul.f32 %v2391, %v61
    %v2461 = vmul.f32 %v2394, %v62
    %v2462 = vmul.f32 %v2399, %v63
    %v2463 = vmul.f32 %v2402, %v64
    %v2464 = vmul.f32 %v2407, %v65
    %v2465 = vmul.f32 %v2410, %v66
    %v2466 = vmul.f32 %v2415, %v67
    %v2467 = vmul.f32 %v2418, %v68
    %v2468 = vmul.f32 %v2423, %v69
    %v2469 = vmul.f32 %v2426, %v70
    %v2470 = vmul.f32 %v2431, %v71
    %v2471 = vmul.f32 %v2434, %v72
    %v2472 = vmul.f32 %v2439, %v73
    %v2473 = vmul.f32 %v2442, %v74
    %v2474 = vmul.f32 %v2447, %v75
    %v2475 = vmul.f32 %v2450, %v76
    %v2476 = vmul.f32 %v2455, %v77
    %v2477 = vpack.c.bf16 %v2461, %v2460
    %v2478 = vpack.c.bf16 %v2463, %v2462
    %v2479 = vpack.c.bf16 %v2465, %v2464
    %v2480 = vpack.c.bf16 %v2467, %v2466
    %v2481 = vpack.c.bf16 %v2469, %v2468
    %v2482 = vpack.c.bf16 %v2471, %v2470
    %v2483 = vpack.c.bf16 %v2473, %v2472
    %v2484 = vpack.c.bf16 %v2475, %v2474
    %v2485 = vpack.c.bf16 %v2476, %v2476
    %s2486 = scalar_lea.vmem %s10, 136
    %v2487 = vld [vmem:[%s2486] sm:$0xff]
    %v2488 = vld [vmem:[%s2486 + $0x8] sm:$0xff]
    %v2489 = vld [vmem:[%s2486 + $0x10] sm:$0xff]
    %v2490 = vld [vmem:[%s2486 + $0x18] sm:$0xff]
    %v2491 = vld [vmem:[%s2486 + $0x20] sm:$0xff]
    %v2492 = vld [vmem:[%s2486 + $0x28] sm:$0xff]
    %v2493 = vld [vmem:[%s2486 + $0x30] sm:$0xff]
    %v2494 = vld [vmem:[%s2486 + $0x38] sm:$0xff]
    %v2495 = vld [vmem:[%s2486 + $0x40] sm:$0xff]
    %v2496 = vld [vmem:[%s2486 + $0x48] sm:$0xff]
    %v2497 = vld [vmem:[%s2486 + $0x50] sm:$0xff]
    %v2498 = vld [vmem:[%s2486 + $0x58] sm:$0xff]
    %v2499 = vld [vmem:[%s2486 + $0x60] sm:$0xff]
    %v2500 = vld [vmem:[%s2486 + $0x68] sm:$0xff]
    %v2501 = vld [vmem:[%s2486 + $0x70] sm:$0xff]
    %v2502 = vld [vmem:[%s2486 + $0x78] sm:$0xff]
    %v2503 = vld [vmem:[%s2486 + $0x80] sm:$0xff]
    %2507 = vrot.lane.b32.xlu0 %v2347, 64
    %v2508 = vpop.permute.xlu0 %2507
    %2509 = vrot.lane.b32.xlu0 %v2348, 64
    %v2510 = vpop.permute.xlu0 %2509
    %2511 = vrot.lane.b32.xlu0 %v2349, 64
    %v2512 = vpop.permute.xlu0 %2511
    %v2514 = vsel %vm231, %v2477, 0
    %v2517 = vsel %vm231, %v2478, 0
    %v2520 = vsel %vm231, %v2479, 0
    %v2523 = vsel %vm231, %v2480, 0
    %v2526 = vsel %vm231, %v2481, 0
    %v2529 = vsel %vm231, %v2482, 0
    %v2532 = vsel %vm231, %v2483, 0
    %v2535 = vsel %vm231, %v2484, 0
    %v2538 = vsel %vm231, %v2485, 0
    %v2541 = vsel %vm231, %v2508, 0
    %v2544 = vsel %vm231, %v2510, 0
    %v2547 = vsel %vm231, %v2512, 0
    %2549 = vmatprep.subr.bf16.mxu0 0
    %2550 = vmatpush1.bf16.xpose.msra.mxu0 %v2541
    %2551 = vmatprep.subr.bf16.mxu0 0
    %2552 = vmatpush1.bf16.xpose.msra.mxu0 %v2544
    %2553 = vmatprep.subr.bf16.mxu0 0
    %2554 = vmatpush1.bf16.xpose.msra.mxu0 %v2547
    %2555 = vmatprep.subr.bf16.mxu0 0
    %2556 = vmatpush1.bf16.xpose.msra.mxu0 0
    %2557 = vmatprep.subr.bf16.mxu0 0
    %2558 = vmatpush1.bf16.xpose.msra.mxu0 0
    %2559 = vmatprep.subr.bf16.mxu0 0
    %2560 = vmatpush1.bf16.xpose.msra.mxu0 0
    %2561 = vmatprep.subr.bf16.mxu0 0
    %2562 = vmatpush1.bf16.xpose.msra.mxu0 0
    %2563 = vmatprep.subr.bf16.mxu0 0
    %2564 = vmatpush1.bf16.xpose.msra.mxu0 0
    %2565 = vmatprep.subr.bf16.mxu0 0
    %2566 = vmatpush1.bf16.xpose.msra.mxu0 0
    %2567 = vmatprep.subr.bf16.mxu0 0
    %2568 = vmatpush1.bf16.xpose.msra.mxu0 0
    %2569 = vmatprep.subr.bf16.mxu0 0
    %2570 = vmatpush1.bf16.xpose.msra.mxu0 0
    %2571 = vmatprep.subr.bf16.mxu0 0
    %2572 = vmatpush1.bf16.xpose.msra.mxu0 0
    %2573 = vmatprep.subr.bf16.mxu0 0
    %2574 = vmatpush1.bf16.xpose.msra.mxu0 0
    %2575 = vmatprep.subr.bf16.mxu0 0
    %2576 = vmatpush1.bf16.xpose.msra.mxu0 0
    %2577 = vmatprep.subr.bf16.mxu0 0
    %2578 = vmatpush1.bf16.xpose.msra.mxu0 0
    %2579 = vmatprep.subr.bf16.mxu0 0
    %2580 = vmatpush1.bf16.xpose.msra.mxu0 0
    %2581 = vmatprep.mubr.bf16.mxu0 0
    %2582 = vmatmul.mubr.bf16.gmra.mrb[0].mxu0 %v2514
    %v2583 = vpop.f32.mrb[0].mxu0
    %v2584 = vadd.f32 %v2487, %v2583
    %v2585 = vpop.f32.mrb[0].mxu0
    %v2586 = vpop.f32.mrb[0].mxu0
    %v2587 = vadd.f32 %v2488, %v2586
    %v2588 = vpop.f32.mrb[0].mxu0
    %2589 = vmatprep.mubr.bf16.mxu0 0
    %2590 = vmatmul.mubr.bf16.gmra.mrb[0].mxu0 %v2517
    %v2591 = vpop.f32.mrb[0].mxu0
    %v2592 = vadd.f32 %v2489, %v2591
    %v2593 = vpop.f32.mrb[0].mxu0
    %v2594 = vpop.f32.mrb[0].mxu0
    %v2595 = vadd.f32 %v2490, %v2594
    %v2596 = vpop.f32.mrb[0].mxu0
    %2597 = vmatprep.mubr.bf16.mxu0 0
    %2598 = vmatmul.mubr.bf16.gmra.mrb[0].mxu0 %v2520
    %v2599 = vpop.f32.mrb[0].mxu0
    %v2600 = vadd.f32 %v2491, %v2599
    %v2601 = vpop.f32.mrb[0].mxu0
    %v2602 = vpop.f32.mrb[0].mxu0
    %v2603 = vadd.f32 %v2492, %v2602
    %v2604 = vpop.f32.mrb[0].mxu0
    %2605 = vmatprep.mubr.bf16.mxu0 0
    %2606 = vmatmul.mubr.bf16.gmra.mrb[0].mxu0 %v2523
    %v2607 = vpop.f32.mrb[0].mxu0
    %v2608 = vadd.f32 %v2493, %v2607
    %v2609 = vpop.f32.mrb[0].mxu0
    %v2610 = vpop.f32.mrb[0].mxu0
    %v2611 = vadd.f32 %v2494, %v2610
    %v2612 = vpop.f32.mrb[0].mxu0
    %2613 = vmatprep.mubr.bf16.mxu0 0
    %2614 = vmatmul.mubr.bf16.gmra.mrb[0].mxu0 %v2526
    %v2615 = vpop.f32.mrb[0].mxu0
    %v2616 = vadd.f32 %v2495, %v2615
    %v2617 = vpop.f32.mrb[0].mxu0
    %v2618 = vpop.f32.mrb[0].mxu0
    %v2619 = vadd.f32 %v2496, %v2618
    %v2620 = vpop.f32.mrb[0].mxu0
    %2621 = vmatprep.mubr.bf16.mxu0 0
    %2622 = vmatmul.mubr.bf16.gmra.mrb[0].mxu0 %v2529
    %v2623 = vpop.f32.mrb[0].mxu0
    %v2624 = vadd.f32 %v2497, %v2623
    %v2625 = vpop.f32.mrb[0].mxu0
    %v2626 = vpop.f32.mrb[0].mxu0
    %v2627 = vadd.f32 %v2498, %v2626
    %v2628 = vpop.f32.mrb[0].mxu0
    %2629 = vmatprep.mubr.bf16.mxu0 0
    %2630 = vmatmul.mubr.bf16.gmra.mrb[0].mxu0 %v2532
    %v2631 = vpop.f32.mrb[0].mxu0
    %v2632 = vadd.f32 %v2499, %v2631
    %v2633 = vpop.f32.mrb[0].mxu0
    %v2634 = vpop.f32.mrb[0].mxu0
    %v2635 = vadd.f32 %v2500, %v2634
    %v2636 = vpop.f32.mrb[0].mxu0
    %2637 = vmatprep.mubr.bf16.mxu0 0
    %2638 = vmatmul.mubr.bf16.gmra.mrb[0].mxu0 %v2535
    %v2639 = vpop.f32.mrb[0].mxu0
    %v2640 = vadd.f32 %v2501, %v2639
    %v2641 = vpop.f32.mrb[0].mxu0
    %v2642 = vpop.f32.mrb[0].mxu0
    %v2643 = vadd.f32 %v2502, %v2642
    %v2644 = vpop.f32.mrb[0].mxu0
    %2645 = vmatprep.mubr.bf16.mxu0 0
    %2646 = vmatmul.mubr.bf16.gmra.mrb[0].mxu0 %v2538
    %v2647 = vpop.f32.mrb[0].mxu0
    %v2648 = vadd.f32 %v2503, %v2647
    %v2649 = vpop.f32.mrb[0].mxu0
    %v2650 = vpop.f32.mrb[0].mxu0
    %v2651 = vpop.f32.mrb[0].mxu0
    %2652 = vdwg.mxu0
    %v2653 = vsel %vm565, %v2584, -inf
    %2654 = vmax.xlane.f32.xlu0 %v2653
    %v2655 = vpop.xlane.xlu0 %2654
    %v2656 = vsel %vm565, %v2587, -inf
    %2657 = vmax.xlane.f32.xlu0 %v2656
    %v2658 = vpop.xlane.xlu0 %2657
    %v2659 = vsel %vm565, %v2592, -inf
    %2660 = vmax.xlane.f32.xlu0 %v2659
    %v2661 = vpop.xlane.xlu0 %2660
    %v2662 = vsel %vm565, %v2595, -inf
    %2663 = vmax.xlane.f32.xlu0 %v2662
    %v2664 = vpop.xlane.xlu0 %2663
    %v2665 = vsel %vm565, %v2600, -inf
    %2666 = vmax.xlane.f32.xlu0 %v2665
    %v2667 = vpop.xlane.xlu0 %2666
    %v2668 = vsel %vm565, %v2603, -inf
    %2669 = vmax.xlane.f32.xlu0 %v2668
    %v2670 = vpop.xlane.xlu0 %2669
    %v2671 = vsel %vm565, %v2608, -inf
    %2672 = vmax.xlane.f32.xlu0 %v2671
    %v2673 = vpop.xlane.xlu0 %2672
    %v2674 = vsel %vm565, %v2611, -inf
    %2675 = vmax.xlane.f32.xlu0 %v2674
    %v2676 = vpop.xlane.xlu0 %2675
    %v2677 = vsel %vm565, %v2616, -inf
    %2678 = vmax.xlane.f32.xlu0 %v2677
    %v2679 = vpop.xlane.xlu0 %2678
    %v2680 = vsel %vm565, %v2619, -inf
    %2681 = vmax.xlane.f32.xlu0 %v2680
    %v2682 = vpop.xlane.xlu0 %2681
    %v2683 = vsel %vm565, %v2624, -inf
    %2684 = vmax.xlane.f32.xlu0 %v2683
    %v2685 = vpop.xlane.xlu0 %2684
    %v2686 = vsel %vm565, %v2627, -inf
    %2687 = vmax.xlane.f32.xlu0 %v2686
    %v2688 = vpop.xlane.xlu0 %2687
    %v2689 = vsel %vm565, %v2632, -inf
    %2690 = vmax.xlane.f32.xlu0 %v2689
    %v2691 = vpop.xlane.xlu0 %2690
    %v2692 = vsel %vm565, %v2635, -inf
    %2693 = vmax.xlane.f32.xlu0 %v2692
    %v2694 = vpop.xlane.xlu0 %2693
    %v2695 = vsel %vm565, %v2640, -inf
    %2696 = vmax.xlane.f32.xlu0 %v2695
    %v2697 = vpop.xlane.xlu0 %2696
    %v2698 = vsel %vm565, %v2643, -inf
    %2699 = vmax.xlane.f32.xlu0 %v2698
    %v2700 = vpop.xlane.xlu0 %2699
    %v2701 = vsel %vm565, %v2648, -inf
    %2702 = vmax.xlane.f32.xlu0 %v2701
    %v2703 = vpop.xlane.xlu0 %2702
    %v2704 = vsub.f32 %v2584, %v2655
    %v2705 = vsub.f32 %v2587, %v2658
    %v2706 = vsub.f32 %v2592, %v2661
    %v2707 = vsub.f32 %v2595, %v2664
    %v2708 = vsub.f32 %v2600, %v2667
    %v2709 = vsub.f32 %v2603, %v2670
    %v2710 = vsub.f32 %v2608, %v2673
    %v2711 = vsub.f32 %v2611, %v2676
    %v2712 = vsub.f32 %v2616, %v2679
    %v2713 = vsub.f32 %v2619, %v2682
    %v2714 = vsub.f32 %v2624, %v2685
    %v2715 = vsub.f32 %v2627, %v2688
    %v2716 = vsub.f32 %v2632, %v2691
    %v2717 = vsub.f32 %v2635, %v2694
    %v2718 = vsub.f32 %v2640, %v2697
    %v2719 = vsub.f32 %v2643, %v2700
    %v2720 = vsub.f32 %v2648, %v2703
    %v2721 = vmul.f32 %v2704, 1.442695
    %v2722 = vpow.pop %v2721
    %v2723 = vmul.f32 %v2705, 1.442695
    %v2724 = vpow.pop %v2723
    %v2725 = vmul.f32 %v2706, 1.442695
    %v2726 = vpow.pop %v2725
    %v2727 = vmul.f32 %v2707, 1.442695
    %v2728 = vpow.pop %v2727
    %v2729 = vmul.f32 %v2708, 1.442695
    %v2730 = vpow.pop %v2729
    %v2731 = vmul.f32 %v2709, 1.442695
    %v2732 = vpow.pop %v2731
    %v2733 = vmul.f32 %v2710, 1.442695
    %v2734 = vpow.pop %v2733
    %v2735 = vmul.f32 %v2711, 1.442695
    %v2736 = vpow.pop %v2735
    %v2737 = vmul.f32 %v2712, 1.442695
    %v2738 = vpow.pop %v2737
    %v2739 = vmul.f32 %v2713, 1.442695
    %v2740 = vpow.pop %v2739
    %v2741 = vmul.f32 %v2714, 1.442695
    %v2742 = vpow.pop %v2741
    %v2743 = vmul.f32 %v2715, 1.442695
    %v2744 = vpow.pop %v2743
    %v2745 = vmul.f32 %v2716, 1.442695
    %v2746 = vpow.pop %v2745
    %v2747 = vmul.f32 %v2717, 1.442695
    %v2748 = vpow.pop %v2747
    %v2749 = vmul.f32 %v2718, 1.442695
    %v2750 = vpow.pop %v2749
    %v2751 = vmul.f32 %v2719, 1.442695
    %v2752 = vpow.pop %v2751
    %v2753 = vmul.f32 %v2720, 1.442695
    %v2754 = vpow.pop %v2753
    %v2755 = vsel %vm565, %v2722, 0.0
    %2756 = vadd.xlane.f32.xlu0 %v2755
    %v2757 = vpop.xlane.xlu0 %2756
    %v2758 = vsel %vm565, %v2724, 0.0
    %2759 = vadd.xlane.f32.xlu0 %v2758
    %v2760 = vpop.xlane.xlu0 %2759
    %v2761 = vsel %vm565, %v2726, 0.0
    %2762 = vadd.xlane.f32.xlu0 %v2761
    %v2763 = vpop.xlane.xlu0 %2762
    %v2764 = vsel %vm565, %v2728, 0.0
    %2765 = vadd.xlane.f32.xlu0 %v2764
    %v2766 = vpop.xlane.xlu0 %2765
    %v2767 = vsel %vm565, %v2730, 0.0
    %2768 = vadd.xlane.f32.xlu0 %v2767
    %v2769 = vpop.xlane.xlu0 %2768
    %v2770 = vsel %vm565, %v2732, 0.0
    %2771 = vadd.xlane.f32.xlu0 %v2770
    %v2772 = vpop.xlane.xlu0 %2771
    %v2773 = vsel %vm565, %v2734, 0.0
    %2774 = vadd.xlane.f32.xlu0 %v2773
    %v2775 = vpop.xlane.xlu0 %2774
    %v2776 = vsel %vm565, %v2736, 0.0
    %2777 = vadd.xlane.f32.xlu0 %v2776
    %v2778 = vpop.xlane.xlu0 %2777
    %v2779 = vsel %vm565, %v2738, 0.0
    %2780 = vadd.xlane.f32.xlu0 %v2779
    %v2781 = vpop.xlane.xlu0 %2780
    %v2782 = vsel %vm565, %v2740, 0.0
    %2783 = vadd.xlane.f32.xlu0 %v2782
    %v2784 = vpop.xlane.xlu0 %2783
    %v2785 = vsel %vm565, %v2742, 0.0
    %2786 = vadd.xlane.f32.xlu0 %v2785
    %v2787 = vpop.xlane.xlu0 %2786
    %v2788 = vsel %vm565, %v2744, 0.0
    %2789 = vadd.xlane.f32.xlu0 %v2788
    %v2790 = vpop.xlane.xlu0 %2789
    %v2791 = vsel %vm565, %v2746, 0.0
    %2792 = vadd.xlane.f32.xlu0 %v2791
    %v2793 = vpop.xlane.xlu0 %2792
    %v2794 = vsel %vm565, %v2748, 0.0
    %2795 = vadd.xlane.f32.xlu0 %v2794
    %v2796 = vpop.xlane.xlu0 %2795
    %v2797 = vsel %vm565, %v2750, 0.0
    %2798 = vadd.xlane.f32.xlu0 %v2797
    %v2799 = vpop.xlane.xlu0 %2798
    %v2800 = vsel %vm565, %v2752, 0.0
    %2801 = vadd.xlane.f32.xlu0 %v2800
    %v2802 = vpop.xlane.xlu0 %2801
    %v2803 = vsel %vm565, %v2754, 0.0
    %2804 = vadd.xlane.f32.xlu0 %v2803
    %v2805 = vpop.xlane.xlu0 %2804
    %v2806 = vrcp.pop %v2757
    %v2807 = vrcp.pop %v2760
    %v2808 = vrcp.pop %v2763
    %v2809 = vrcp.pop %v2766
    %v2810 = vrcp.pop %v2769
    %v2811 = vrcp.pop %v2772
    %v2812 = vrcp.pop %v2775
    %v2813 = vrcp.pop %v2778
    %v2814 = vrcp.pop %v2781
    %v2815 = vrcp.pop %v2784
    %v2816 = vrcp.pop %v2787
    %v2817 = vrcp.pop %v2790
    %v2818 = vrcp.pop %v2793
    %v2819 = vrcp.pop %v2796
    %v2820 = vrcp.pop %v2799
    %v2821 = vrcp.pop %v2802
    %v2822 = vrcp.pop %v2805
    %v2823 = vmul.f32 %v2722, %v2806
    %v2824 = vmul.f32 %v2724, %v2807
    %v2825 = vmul.f32 %v2726, %v2808
    %v2826 = vmul.f32 %v2728, %v2809
    %v2827 = vmul.f32 %v2730, %v2810
    %v2828 = vmul.f32 %v2732, %v2811
    %v2829 = vmul.f32 %v2734, %v2812
    %v2830 = vmul.f32 %v2736, %v2813
    %v2831 = vmul.f32 %v2738, %v2814
    %v2832 = vmul.f32 %v2740, %v2815
    %v2833 = vmul.f32 %v2742, %v2816
    %v2834 = vmul.f32 %v2744, %v2817
    %v2835 = vmul.f32 %v2746, %v2818
    %v2836 = vmul.f32 %v2748, %v2819
    %v2837 = vmul.f32 %v2750, %v2820
    %v2838 = vmul.f32 %v2752, %v2821
    %v2839 = vmul.f32 %v2754, %v2822
    %v2840 = vpack.c.bf16 %v2824, %v2823
    %v2841 = vpack.c.bf16 %v2826, %v2825
    %v2842 = vpack.c.bf16 %v2828, %v2827
    %v2843 = vpack.c.bf16 %v2830, %v2829
    %v2844 = vpack.c.bf16 %v2832, %v2831
    %v2845 = vpack.c.bf16 %v2834, %v2833
    %v2846 = vpack.c.bf16 %v2836, %v2835
    %v2847 = vpack.c.bf16 %v2838, %v2837
    %v2848 = vpack.c.bf16 %v2839, %v2839
    %v2850 = vsel %vm565, %v2840, 0
    %v2853 = vsel %vm565, %v2841, 0
    %v2856 = vsel %vm565, %v2842, 0
    %v2859 = vsel %vm565, %v2843, 0
    %v2862 = vsel %vm565, %v2844, 0
    %v2865 = vsel %vm565, %v2845, 0
    %v2868 = vsel %vm565, %v2846, 0
    %v2871 = vsel %vm565, %v2847, 0
    %v2874 = vsel %vm565, %v2848, 0
    %v2877 = vsel %vm593, %v2352, 0
    %2879 = vmatprep.subr.bf16.mxu0 0
    %2880 = vmatpush1.bf16.msra.mxu0 %v2350
    %2881 = vmatprep.subr.bf16.mxu0 0
    %2882 = vmatpush1.bf16.msra.mxu0 %v2351
    %2883 = vmatprep.subr.bf16.mxu0 0
    %2884 = vmatpush1.bf16.msra.mxu0 %v2877
    %2885 = vmatprep.subr.bf16.mxu0 0
    %2886 = vmatpush1.bf16.msra.mxu0 0
    %2887 = vmatprep.subr.bf16.mxu0 0
    %2888 = vmatpush1.bf16.msra.mxu0 0
    %2889 = vmatprep.subr.bf16.mxu0 0
    %2890 = vmatpush1.bf16.msra.mxu0 0
    %2891 = vmatprep.subr.bf16.mxu0 0
    %2892 = vmatpush1.bf16.msra.mxu0 0
    %2893 = vmatprep.subr.bf16.mxu0 0
    %2894 = vmatpush1.bf16.msra.mxu0 0
    %2895 = vmatprep.subr.bf16.mxu0 0
    %2896 = vmatpush1.bf16.msra.mxu0 0
    %2897 = vmatprep.subr.bf16.mxu0 0
    %2898 = vmatpush1.bf16.msra.mxu0 0
    %2899 = vmatprep.subr.bf16.mxu0 0
    %2900 = vmatpush1.bf16.msra.mxu0 0
    %2901 = vmatprep.subr.bf16.mxu0 0
    %2902 = vmatpush1.bf16.msra.mxu0 0
    %2903 = vmatprep.subr.bf16.mxu0 0
    %2904 = vmatpush1.bf16.msra.mxu0 0
    %2905 = vmatprep.subr.bf16.mxu0 0
    %2906 = vmatpush1.bf16.msra.mxu0 0
    %2907 = vmatprep.subr.bf16.mxu0 0
    %2908 = vmatpush1.bf16.msra.mxu0 0
    %2909 = vmatprep.subr.bf16.mxu0 0
    %2910 = vmatpush1.bf16.msra.mxu0 0
    %2911 = vmatprep.mubr.bf16.mxu0 0
    %2912 = vmatmul.mubr.bf16.gmra.mrb[0].mxu0 %v2850
    %v2913 = vpop.f32.mrb[0].mxu0
    %v2914 = vadd.f32 0.0, %v2913
    %v2915 = vpop.f32.mrb[0].mxu0
    %v2916 = vpop.f32.mrb[0].mxu0
    %v2917 = vadd.f32 0.0, %v2916
    %v2918 = vpop.f32.mrb[0].mxu0
    %2919 = vmatprep.mubr.bf16.mxu0 0
    %2920 = vmatmul.mubr.bf16.gmra.mrb[0].mxu0 %v2853
    %v2921 = vpop.f32.mrb[0].mxu0
    %v2922 = vadd.f32 0.0, %v2921
    %v2923 = vpop.f32.mrb[0].mxu0
    %v2924 = vpop.f32.mrb[0].mxu0
    %v2925 = vadd.f32 0.0, %v2924
    %v2926 = vpop.f32.mrb[0].mxu0
    %2927 = vmatprep.mubr.bf16.mxu0 0
    %2928 = vmatmul.mubr.bf16.gmra.mrb[0].mxu0 %v2856
    %v2929 = vpop.f32.mrb[0].mxu0
    %v2930 = vadd.f32 0.0, %v2929
    %v2931 = vpop.f32.mrb[0].mxu0
    %v2932 = vpop.f32.mrb[0].mxu0
    %v2933 = vadd.f32 0.0, %v2932
    %v2934 = vpop.f32.mrb[0].mxu0
    %2935 = vmatprep.mubr.bf16.mxu0 0
    %2936 = vmatmul.mubr.bf16.gmra.mrb[0].mxu0 %v2859
    %v2937 = vpop.f32.mrb[0].mxu0
    %v2938 = vadd.f32 0.0, %v2937
    %v2939 = vpop.f32.mrb[0].mxu0
    %v2940 = vpop.f32.mrb[0].mxu0
    %v2941 = vadd.f32 0.0, %v2940
    %v2942 = vpop.f32.mrb[0].mxu0
    %2943 = vmatprep.mubr.bf16.mxu0 0
    %2944 = vmatmul.mubr.bf16.gmra.mrb[0].mxu0 %v2862
    %v2945 = vpop.f32.mrb[0].mxu0
    %v2946 = vadd.f32 0.0, %v2945
    %v2947 = vpop.f32.mrb[0].mxu0
    %v2948 = vpop.f32.mrb[0].mxu0
    %v2949 = vadd.f32 0.0, %v2948
    %v2950 = vpop.f32.mrb[0].mxu0
    %2951 = vmatprep.mubr.bf16.mxu0 0
    %2952 = vmatmul.mubr.bf16.gmra.mrb[0].mxu0 %v2865
    %v2953 = vpop.f32.mrb[0].mxu0
    %v2954 = vadd.f32 0.0, %v2953
    %v2955 = vpop.f32.mrb[0].mxu0
    %v2956 = vpop.f32.mrb[0].mxu0
    %v2957 = vadd.f32 0.0, %v2956
    %v2958 = vpop.f32.mrb[0].mxu0
    %2959 = vmatprep.mubr.bf16.mxu0 0
    %2960 = vmatmul.mubr.bf16.gmra.mrb[0].mxu0 %v2868
    %v2961 = vpop.f32.mrb[0].mxu0
    %v2962 = vadd.f32 0.0, %v2961
    %v2963 = vpop.f32.mrb[0].mxu0
    %v2964 = vpop.f32.mrb[0].mxu0
    %v2965 = vadd.f32 0.0, %v2964
    %v2966 = vpop.f32.mrb[0].mxu0
    %2967 = vmatprep.mubr.bf16.mxu0 0
    %2968 = vmatmul.mubr.bf16.gmra.mrb[0].mxu0 %v2871
    %v2969 = vpop.f32.mrb[0].mxu0
    %v2970 = vadd.f32 0.0, %v2969
    %v2971 = vpop.f32.mrb[0].mxu0
    %v2972 = vpop.f32.mrb[0].mxu0
    %v2973 = vadd.f32 0.0, %v2972
    %v2974 = vpop.f32.mrb[0].mxu0
    %2975 = vmatprep.mubr.bf16.mxu0 0
    %2976 = vmatmul.mubr.bf16.gmra.mrb[0].mxu0 %v2874
    %v2977 = vpop.f32.mrb[0].mxu0
    %v2978 = vadd.f32 0.0, %v2977
    %v2979 = vpop.f32.mrb[0].mxu0
    %v2980 = vpop.f32.mrb[0].mxu0
    %v2981 = vpop.f32.mrb[0].mxu0
    %2982 = vdwg.mxu0
    %v2983 = vmul.f32 %v2914, %v61
    %v2984 = vmul.f32 %v2917, %v62
    %v2985 = vmul.f32 %v2922, %v63
    %v2986 = vmul.f32 %v2925, %v64
    %v2987 = vmul.f32 %v2930, %v65
    %v2988 = vmul.f32 %v2933, %v66
    %v2989 = vmul.f32 %v2938, %v67
    %v2990 = vmul.f32 %v2941, %v68
    %v2991 = vmul.f32 %v2946, %v69
    %v2992 = vmul.f32 %v2949, %v70
    %v2993 = vmul.f32 %v2954, %v71
    %v2994 = vmul.f32 %v2957, %v72
    %v2995 = vmul.f32 %v2962, %v73
    %v2996 = vmul.f32 %v2965, %v74
    %v2997 = vmul.f32 %v2970, %v75
    %v2998 = vmul.f32 %v2973, %v76
    %v2999 = vmul.f32 %v2978, %v77
    %v3000 = vpack.c.bf16 %v2984, %v2983
    %v3001 = vpack.c.bf16 %v2986, %v2985
    %v3002 = vpack.c.bf16 %v2988, %v2987
    %v3003 = vpack.c.bf16 %v2990, %v2989
    %v3004 = vpack.c.bf16 %v2992, %v2991
    %v3005 = vpack.c.bf16 %v2994, %v2993
    %v3006 = vpack.c.bf16 %v2996, %v2995
    %v3007 = vpack.c.bf16 %v2998, %v2997
    %v3008 = vpack.c.bf16 %v2999, %v2999
    %v3010 = vsel %vm1283, %v3008, 0
    %3012 = vmatprep.subr.bf16.mxu0 0
    %3013 = vmatpush1.bf16.msra.mxu0 %v3000
    %3014 = vmatprep.subr.bf16.mxu0 0
    %3015 = vmatpush1.bf16.msra.mxu0 %v3001
    %3016 = vmatprep.subr.bf16.mxu0 0
    %3017 = vmatpush1.bf16.msra.mxu0 %v3002
    %3018 = vmatprep.subr.bf16.mxu0 0
    %3019 = vmatpush1.bf16.msra.mxu0 %v3003
    %3020 = vmatprep.subr.bf16.mxu0 0
    %3021 = vmatpush1.bf16.msra.mxu0 %v3004
    %3022 = vmatprep.subr.bf16.mxu0 0
    %3023 = vmatpush1.bf16.msra.mxu0 %v3005
    %3024 = vmatprep.subr.bf16.mxu0 0
    %3025 = vmatpush1.bf16.msra.mxu0 %v3006
    %3026 = vmatprep.subr.bf16.mxu0 0
    %3027 = vmatpush1.bf16.msra.mxu0 %v3007
    %3028 = vmatprep.subr.bf16.mxu0 0
    %3029 = vmatpush1.bf16.msra.mxu0 %v3010
    %3030 = vmatprep.subr.bf16.mxu0 0
    %3031 = vmatpush1.bf16.msra.mxu0 0
    %3032 = vmatprep.subr.bf16.mxu0 0
    %3033 = vmatpush1.bf16.msra.mxu0 0
    %3034 = vmatprep.subr.bf16.mxu0 0
    %3035 = vmatpush1.bf16.msra.mxu0 0
    %3036 = vmatprep.subr.bf16.mxu0 0
    %3037 = vmatpush1.bf16.msra.mxu0 0
    %3038 = vmatprep.subr.bf16.mxu0 0
    %3039 = vmatpush1.bf16.msra.mxu0 0
    %3040 = vmatprep.subr.bf16.mxu0 0
    %3041 = vmatpush1.bf16.msra.mxu0 0
    %3042 = vmatprep.subr.bf16.mxu0 0
    %3043 = vmatpush1.bf16.msra.mxu0 0
    %3044 = vmatprep.mubr.bf16.mxu0 %v1275
    %3045 = vmatmul.mubr.bf16.gmra.mrb[0].mxu0 %v1264
    %v3046 = vpop.f32.mrb[0].mxu0
    %v3047 = vadd.f32 0.0, %v3046
    %v3048 = vpop.f32.mrb[0].mxu0
    %v3049 = vpop.f32.mrb[0].mxu0
    %v3050 = vadd.f32 0.0, %v3049
    %v3051 = vpop.f32.mrb[0].mxu0
    %3052 = vmatprep.mubr.bf16.mxu0 %v1278
    %3053 = vmatmul.mubr.bf16.gmra.mrb[0].mxu0 %v1266
    %v3054 = vpop.f32.mrb[0].mxu0
    %v3055 = vadd.f32 0.0, %v3054
    %v3056 = vpop.f32.mrb[0].mxu0
    %v3057 = vpop.f32.mrb[0].mxu0
    %v3058 = vadd.f32 0.0, %v3057
    %v3059 = vpop.f32.mrb[0].mxu0
    %3060 = vmatprep.mubr.bf16.mxu0 %v1281
    %3061 = vmatmul.mubr.bf16.gmra.mrb[0].mxu0 %v1268
    %v3062 = vpop.f32.mrb[0].mxu0
    %v3063 = vadd.f32 0.0, %v3062
    %v3064 = vpop.f32.mrb[0].mxu0
    %v3065 = vpop.f32.mrb[0].mxu0
    %v3066 = vpop.f32.mrb[0].mxu0
    %3067 = vdwg.mxu0
    %v3068 = vpack.c.bf16 %v3050, %v3047
    %v3069 = vpack.c.bf16 %v3058, %v3055
    %v3070 = vpack.c.bf16 %v3063, %v3063
    %s3071 = scalar_lea.vmem %s6, 32
    %v3072 = vld [vmem:[%s3071] sm:$0xf]
    %v3073 = vld [vmem:[%s3071 + $0x4] sm:$0xf]
    %v3074 = vld [vmem:[%s3071 + $0x8] sm:$0xf]
    %v3075 = vld [vmem:[%s3071 + $0xc] sm:$0xf]
    %v3076 = vld [vmem:[%s3071 + $0x10] sm:$0xf]
    %v3077 = vld [vmem:[%s3071 + $0x14] sm:$0xf]
    %v3078 = vld [vmem:[%s3071 + $0x18] sm:$0xf]
    %v3079 = vld [vmem:[%s3071 + $0x1c] sm:$0xf]
    %v3080 = vlaneseq
    %v3081 = vshrl.u32 %v3080, 7
    %v3082 = vsub.s32 2, %v3081
    %v3083 = vrot.slane %v2128, %v3082
    %v3092 = vunpack.c.l.b16 %v3072
    %v3093 = vunpack.c.l.b16 %v3073
    %v3094 = vunpack.c.l.b16 %v3074
    %v3095 = vunpack.c.l.b16 %v3075
    %v3096 = vunpack.c.l.b16 %v3076
    %v3097 = vunpack.c.l.b16 %v3077
    %v3098 = vunpack.c.l.b16 %v3078
    %v3099 = vunpack.c.l.b16 %v3079
    %v3100 = vpack.c.b16 %v3093, %v3092
    %v3101 = vpack.c.b16 %v3095, %v3094
    %v3102 = vpack.c.b16 %v3097, %v3096
    %v3103 = vpack.c.b16 %v3099, %v3098
    %v3109 = vsel %vm231, %v3068, 0
    %v3112 = vsel %vm231, %v3069, 0
    %v3115 = vsel %vm231, %v3070, 0
    %3117 = vmatprep.subr.bf16.mxu0 0
    %3118 = vmatpush1.bf16.msra.mxu0 %v3100
    %3119 = vmatprep.subr.bf16.mxu0 0
    %3120 = vmatpush1.bf16.msra.mxu0 %v3101
    %3121 = vmatprep.subr.bf16.mxu0 0
    %3122 = vmatpush1.bf16.msra.mxu0 %v3102
    %3123 = vmatprep.subr.bf16.mxu0 0
    %3124 = vmatpush1.bf16.msra.mxu0 %v3103
    %3125 = vmatprep.subr.bf16.mxu0 0
    %3126 = vmatpush1.bf16.msra.mxu0 0
    %3127 = vmatprep.subr.bf16.mxu0 0
    %3128 = vmatpush1.bf16.msra.mxu0 0
    %3129 = vmatprep.subr.bf16.mxu0 0
    %3130 = vmatpush1.bf16.msra.mxu0 0
    %3131 = vmatprep.subr.bf16.mxu0 0
    %3132 = vmatpush1.bf16.msra.mxu0 0
    %3133 = vmatprep.subr.bf16.mxu0 0
    %3134 = vmatpush1.bf16.msra.mxu0 0
    %3135 = vmatprep.subr.bf16.mxu0 0
    %3136 = vmatpush1.bf16.msra.mxu0 0
    %3137 = vmatprep.subr.bf16.mxu0 0
    %3138 = vmatpush1.bf16.msra.mxu0 0
    %3139 = vmatprep.subr.bf16.mxu0 0
    %3140 = vmatpush1.bf16.msra.mxu0 0
    %3141 = vmatprep.subr.bf16.mxu0 0
    %3142 = vmatpush1.bf16.msra.mxu0 0
    %3143 = vmatprep.subr.bf16.mxu0 0
    %3144 = vmatpush1.bf16.msra.mxu0 0
    %3145 = vmatprep.subr.bf16.mxu0 0
    %3146 = vmatpush1.bf16.msra.mxu0 0
    %3147 = vmatprep.subr.bf16.mxu0 0
    %3148 = vmatpush1.bf16.msra.mxu0 0
    %3149 = vmatprep.mubr.bf16.mxu0 0
    %3150 = vmatmul.mubr.bf16.gmra.mrb[0].mxu0 %v3109
    %v3151 = vpop.f32.mrb[0].mxu0
    %v3152 = vadd.f32 %v3083, %v3151
    %v3153 = vpop.f32.mrb[0].mxu0
    %v3154 = vpop.f32.mrb[0].mxu0
    %v3155 = vadd.f32 %v3083, %v3154
    %v3156 = vpop.f32.mrb[0].mxu0
    %3157 = vmatprep.mubr.bf16.mxu0 0
    %3158 = vmatmul.mubr.bf16.gmra.mrb[0].mxu0 %v3112
    %v3159 = vpop.f32.mrb[0].mxu0
    %v3160 = vadd.f32 %v3083, %v3159
    %v3161 = vpop.f32.mrb[0].mxu0
    %v3162 = vpop.f32.mrb[0].mxu0
    %v3163 = vadd.f32 %v3083, %v3162
    %v3164 = vpop.f32.mrb[0].mxu0
    %3165 = vmatprep.mubr.bf16.mxu0 0
    %3166 = vmatmul.mubr.bf16.gmra.mrb[0].mxu0 %v3115
    %v3167 = vpop.f32.mrb[0].mxu0
    %v3168 = vadd.f32 %v3083, %v3167
    %v3169 = vpop.f32.mrb[0].mxu0
    %v3170 = vpop.f32.mrb[0].mxu0
    %v3171 = vpop.f32.mrb[0].mxu0
    %3172 = vdwg.mxu0
    %v3173 = vadd.f32 %v2122, %v3152
    %v3174 = vadd.f32 %v2123, %v3155
    %v3175 = vadd.f32 %v2124, %v3160
    %v3176 = vadd.f32 %v2125, %v3163
    %v3177 = vadd.f32 %v2126, %v3168
    %v3178 = vsel %vm231, %v3173, 0.0
    %3179 = vadd.xlane.f32.xlu0 %v3178
    %v3180 = vpop.xlane.xlu0 %3179
    %v3181 = vsel %vm231, %v3174, 0.0
    %3182 = vadd.xlane.f32.xlu0 %v3181
    %v3183 = vpop.xlane.xlu0 %3182
    %v3184 = vsel %vm231, %v3175, 0.0
    %3185 = vadd.xlane.f32.xlu0 %v3184
    %v3186 = vpop.xlane.xlu0 %3185
    %v3187 = vsel %vm231, %v3176, 0.0
    %3188 = vadd.xlane.f32.xlu0 %v3187
    %v3189 = vpop.xlane.xlu0 %3188
    %v3190 = vsel %vm310, %v3177, 0.0
    %3191 = vadd.xlane.f32.xlu0 %v3190
    %v3192 = vpop.xlane.xlu0 %3191
    %v3193 = vmul.f32 %v3180, %v314
    %v3194 = vmul.f32 %v3183, %v314
    %v3195 = vmul.f32 %v3186, %v314
    %v3196 = vmul.f32 %v3189, %v314
    %v3197 = vmul.f32 %v3192, %v314
    %v3198 = vsub.f32 %v3173, %v3193
    %v3199 = vsub.f32 %v3174, %v3194
    %v3200 = vsub.f32 %v3175, %v3195
    %v3201 = vsub.f32 %v3176, %v3196
    %v3202 = vsub.f32 %v3177, %v3197
    %v3203 = vmul.f32 %v3198, %v3198
    %v3204 = vmul.f32 %v3199, %v3199
    %v3205 = vmul.f32 %v3200, %v3200
    %v3206 = vmul.f32 %v3201, %v3201
    %v3207 = vmul.f32 %v3202, %v3202
    %v3208 = vsel %vm231, %v3203, 0.0
    %3209 = vadd.xlane.f32.xlu0 %v3208
    %v3210 = vpop.xlane.xlu0 %3209
    %v3211 = vsel %vm231, %v3204, 0.0
    %3212 = vadd.xlane.f32.xlu0 %v3211
    %v3213 = vpop.xlane.xlu0 %3212
    %v3214 = vsel %vm231, %v3205, 0.0
    %3215 = vadd.xlane.f32.xlu0 %v3214
    %v3216 = vpop.xlane.xlu0 %3215
    %v3217 = vsel %vm231, %v3206, 0.0
    %3218 = vadd.xlane.f32.xlu0 %v3217
    %v3219 = vpop.xlane.xlu0 %3218
    %v3220 = vsel %vm310, %v3207, 0.0
    %3221 = vadd.xlane.f32.xlu0 %v3220
    %v3222 = vpop.xlane.xlu0 %3221
    %v3223 = vmul.f32 %v3210, %v314
    %v3224 = vmul.f32 %v3213, %v314
    %v3225 = vmul.f32 %v3216, %v314
    %v3226 = vmul.f32 %v3219, %v314
    %v3227 = vmul.f32 %v3222, %v314
    %v3228 = vadd.f32 %v3223, 1e-06
    %v3229 = vadd.f32 %v3224, 1e-06
    %v3230 = vadd.f32 %v3225, 1e-06
    %v3231 = vadd.f32 %v3226, 1e-06
    %v3232 = vadd.f32 %v3227, 1e-06
    %v3233 = vrsqrt.pop %v3228
    %v3234 = vrsqrt.pop %v3229
    %v3235 = vrsqrt.pop %v3230
    %v3236 = vrsqrt.pop %v3231
    %v3237 = vrsqrt.pop %v3232
    %v3238 = vmul.f32 %v3198, %v3233
    %v3239 = vmul.f32 %v3199, %v3234
    %v3240 = vmul.f32 %v3200, %v3235
    %v3241 = vmul.f32 %v3201, %v3236
    %v3242 = vmul.f32 %v3202, %v3237
    %v3243 = vlaneseq
    %v3244 = vshrl.u32 %v3243, 7
    %v3245 = vsub.s32 3, %v3244
    %v3246 = vrot.slane %v2128, %v3245
    %v3247 = vmul.f32 %v3238, %v3246
    %v3248 = vmul.f32 %v3239, %v3246
    %v3249 = vmul.f32 %v3240, %v3246
    %v3250 = vmul.f32 %v3241, %v3246
    %v3251 = vmul.f32 %v3242, %v3246
    %v3252 = vlaneseq
    %v3253 = vshrl.u32 %v3252, 7
    %v3254 = vsub.s32 4, %v3253
    %v3255 = vrot.slane %v2128, %v3254
    %v3256 = vadd.f32 %v3247, %v3255
    %v3257 = vadd.f32 %v3248, %v3255
    %v3258 = vadd.f32 %v3249, %v3255
    %v3259 = vadd.f32 %v3250, %v3255
    %v3260 = vadd.f32 %v3251, %v3255
    %v3261 = vpack.c.bf16 %v3257, %v3256
    %v3262 = vpack.c.bf16 %v3259, %v3258
    %v3263 = vpack.c.bf16 %v3260, %v3260
    %s3264 = scalar_lea.vmem %s7, 64
    %v3265 = vld [vmem:[%s3264] sm:$0xff]
    %v3266 = vld [vmem:[%s3264 + $0x8] sm:$0xff]
    %v3267 = vld [vmem:[%s3264 + $0x10] sm:$0xff]
    %v3268 = vld [vmem:[%s3264 + $0x18] sm:$0xff]
    %v3269 = vld [vmem:[%s3264 + $0x20] sm:$0xff]
    %v3270 = vld [vmem:[%s3264 + $0x28] sm:$0xff]
    %v3271 = vld [vmem:[%s3264 + $0x30] sm:$0xff]
    %v3272 = vld [vmem:[%s3264 + $0x38] sm:$0xff]
    %s3273 = scalar_lea.vmem %s8, 2
    %v3274 = vld [vmem:[%s3273] sm:$0x3]
    %v3276 = vlaneseq
    %v3277 = vshrl.u32 %v3276, 7
    %v3278 = vsub.s32 0, %v3277
    %v3279 = vrot.slane %v3274, %v3278
    %v3280 = vlaneseq
    %v3281 = vshrl.u32 %v3280, 7
    %v3282 = vsub.s32 1, %v3281
    %v3283 = vrot.slane %v3274, %v3282
    %v3294 = vunpack.c.l.b16 %v3265
    %v3295 = vunpack.c.h.b16 %v3265
    %v3296 = vunpack.c.l.b16 %v3266
    %v3297 = vunpack.c.h.b16 %v3266
    %v3298 = vunpack.c.l.b16 %v3267
    %v3299 = vunpack.c.h.b16 %v3267
    %v3300 = vunpack.c.l.b16 %v3268
    %v3301 = vunpack.c.h.b16 %v3268
    %v3302 = vunpack.c.l.b16 %v3269
    %v3303 = vunpack.c.h.b16 %v3269
    %v3304 = vunpack.c.l.b16 %v3270
    %v3305 = vunpack.c.h.b16 %v3270
    %v3306 = vunpack.c.l.b16 %v3271
    %v3307 = vunpack.c.h.b16 %v3271
    %v3308 = vunpack.c.l.b16 %v3272
    %v3309 = vunpack.c.h.b16 %v3272
    %v3310 = vpack.c.b16 %v3296, %v3294
    %v3311 = vpack.c.b16 %v3297, %v3295
    %v3312 = vpack.c.b16 %v3300, %v3298
    %v3313 = vpack.c.b16 %v3301, %v3299
    %v3314 = vpack.c.b16 %v3304, %v3302
    %v3315 = vpack.c.b16 %v3305, %v3303
    %v3316 = vpack.c.b16 %v3308, %v3306
    %v3317 = vpack.c.b16 %v3309, %v3307
    %v3327 = vsel %vm231, %v3261, 0
    %v3330 = vsel %vm231, %v3262, 0
    %v3333 = vsel %vm231, %v3263, 0
    %3335 = vmatprep.subr.bf16.mxu0 %v3311
    %3336 = vmatpush1.bf16.msra.mxu0 %v3310
    %3337 = vmatprep.subr.bf16.mxu0 %v3313
    %3338 = vmatpush1.bf16.msra.mxu0 %v3312
    %3339 = vmatprep.subr.bf16.mxu0 %v3315
    %3340 = vmatpush1.bf16.msra.mxu0 %v3314
    %3341 = vmatprep.subr.bf16.mxu0 %v3317
    %3342 = vmatpush1.bf16.msra.mxu0 %v3316
    %3343 = vmatprep.subr.bf16.mxu0 0
    %3344 = vmatpush1.bf16.msra.mxu0 0
    %3345 = vmatprep.subr.bf16.mxu0 0
    %3346 = vmatpush1.bf16.msra.mxu0 0
    %3347 = vmatprep.subr.bf16.mxu0 0
    %3348 = vmatpush1.bf16.msra.mxu0 0
    %3349 = vmatprep.subr.bf16.mxu0 0
    %3350 = vmatpush1.bf16.msra.mxu0 0
    %3351 = vmatprep.subr.bf16.mxu0 0
    %3352 = vmatpush1.bf16.msra.mxu0 0
    %3353 = vmatprep.subr.bf16.mxu0 0
    %3354 = vmatpush1.bf16.msra.mxu0 0
    %3355 = vmatprep.subr.bf16.mxu0 0
    %3356 = vmatpush1.bf16.msra.mxu0 0
    %3357 = vmatprep.subr.bf16.mxu0 0
    %3358 = vmatpush1.bf16.msra.mxu0 0
    %3359 = vmatprep.subr.bf16.mxu0 0
    %3360 = vmatpush1.bf16.msra.mxu0 0
    %3361 = vmatprep.subr.bf16.mxu0 0
    %3362 = vmatpush1.bf16.msra.mxu0 0
    %3363 = vmatprep.subr.bf16.mxu0 0
    %3364 = vmatpush1.bf16.msra.mxu0 0
    %3365 = vmatprep.subr.bf16.mxu0 0
    %3366 = vmatpush1.bf16.msra.mxu0 0
    %3367 = vmatprep.mubr.bf16.mxu0 0
    %3368 = vmatmul.mubr.bf16.gmra.mrb[0].mxu0 %v3327
    %v3369 = vpop.f32.mrb[0].mxu0
    %v3370 = vadd.f32 %v3279, %v3369
    %v3371 = vpop.f32.mrb[0].mxu0
    %v3372 = vadd.f32 %v3283, %v3371
    %v3373 = vpop.f32.mrb[0].mxu0
    %v3374 = vadd.f32 %v3279, %v3373
    %v3375 = vpop.f32.mrb[0].mxu0
    %v3376 = vadd.f32 %v3283, %v3375
    %3377 = vmatprep.mubr.bf16.mxu0 0
    %3378 = vmatmul.mubr.bf16.gmra.mrb[0].mxu0 %v3330
    %v3379 = vpop.f32.mrb[0].mxu0
    %v3380 = vadd.f32 %v3279, %v3379
    %v3381 = vpop.f32.mrb[0].mxu0
    %v3382 = vadd.f32 %v3283, %v3381
    %v3383 = vpop.f32.mrb[0].mxu0
    %v3384 = vadd.f32 %v3279, %v3383
    %v3385 = vpop.f32.mrb[0].mxu0
    %v3386 = vadd.f32 %v3283, %v3385
    %3387 = vmatprep.mubr.bf16.mxu0 0
    %3388 = vmatmul.mubr.bf16.gmra.mrb[0].mxu0 %v3333
    %v3389 = vpop.f32.mrb[0].mxu0
    %v3390 = vadd.f32 %v3279, %v3389
    %v3391 = vpop.f32.mrb[0].mxu0
    %v3392 = vadd.f32 %v3283, %v3391
    %v3393 = vpop.f32.mrb[0].mxu0
    %v3394 = vpop.f32.mrb[0].mxu0
    %3395 = vdwg.mxu0
    %v3396 = vmul.f32 %v3370, 0.70710677
    %v3397 = vmul.f32 %v3372, 0.70710677
    %v3398 = vmul.f32 %v3374, 0.70710677
    %v3399 = vmul.f32 %v3376, 0.70710677
    %v3400 = vmul.f32 %v3380, 0.70710677
    %v3401 = vmul.f32 %v3382, 0.70710677
    %v3402 = vmul.f32 %v3384, 0.70710677
    %v3403 = vmul.f32 %v3386, 0.70710677
    %v3404 = vmul.f32 %v3390, 0.70710677
    %v3405 = vmul.f32 %v3392, 0.70710677
    %v3406 = vand.u32 2147483647, %v3396
    %v3407 = vand.u32 2147483647, %v3397
    %v3408 = vand.u32 2147483647, %v3398
    %v3409 = vand.u32 2147483647, %v3399
    %v3410 = vand.u32 2147483647, %v3400
    %v3411 = vand.u32 2147483647, %v3401
    %v3412 = vand.u32 2147483647, %v3402
    %v3413 = vand.u32 2147483647, %v3403
    %v3414 = vand.u32 2147483647, %v3404
    %v3415 = vand.u32 2147483647, %v3405
    %v3416 = vmul.f32 %v3406, 0.3275911
    %v3417 = vmul.f32 %v3407, 0.3275911
    %v3418 = vmul.f32 %v3408, 0.3275911
    %v3419 = vmul.f32 %v3409, 0.3275911
    %v3420 = vmul.f32 %v3410, 0.3275911
    %v3421 = vmul.f32 %v3411, 0.3275911
    %v3422 = vmul.f32 %v3412, 0.3275911
    %v3423 = vmul.f32 %v3413, 0.3275911
    %v3424 = vmul.f32 %v3414, 0.3275911
    %v3425 = vmul.f32 %v3415, 0.3275911
    %v3426 = vadd.f32 %v3416, 1.0
    %v3427 = vadd.f32 %v3417, 1.0
    %v3428 = vadd.f32 %v3418, 1.0
    %v3429 = vadd.f32 %v3419, 1.0
    %v3430 = vadd.f32 %v3420, 1.0
    %v3431 = vadd.f32 %v3421, 1.0
    %v3432 = vadd.f32 %v3422, 1.0
    %v3433 = vadd.f32 %v3423, 1.0
    %v3434 = vadd.f32 %v3424, 1.0
    %v3435 = vadd.f32 %v3425, 1.0
    %v3436 = vrcp.pop %v3426
    %v3437 = vrcp.pop %v3427
    %v3438 = vrcp.pop %v3428
    %v3439 = vrcp.pop %v3429
    %v3440 = vrcp.pop %v3430
    %v3441 = vrcp.pop %v3431
    %v3442 = vrcp.pop %v3432
    %v3443 = vrcp.pop %v3433
    %v3444 = vrcp.pop %v3434
    %v3445 = vrcp.pop %v3435
    %v3446 = vmul.f32 %v3436, 1.0614054
    %v3447 = vmul.f32 %v3437, 1.0614054
    %v3448 = vmul.f32 %v3438, 1.0614054
    %v3449 = vmul.f32 %v3439, 1.0614054
    %v3450 = vmul.f32 %v3440, 1.0614054
    %v3451 = vmul.f32 %v3441, 1.0614054
    %v3452 = vmul.f32 %v3442, 1.0614054
    %v3453 = vmul.f32 %v3443, 1.0614054
    %v3454 = vmul.f32 %v3444, 1.0614054
    %v3455 = vmul.f32 %v3445, 1.0614054
    %v3456 = vadd.f32 %v3446, -1.4531521
    %v3457 = vadd.f32 %v3447, -1.4531521
    %v3458 = vadd.f32 %v3448, -1.4531521
    %v3459 = vadd.f32 %v3449, -1.4531521
    %v3460 = vadd.f32 %v3450, -1.4531521
    %v3461 = vadd.f32 %v3451, -1.4531521
    %v3462 = vadd.f32 %v3452, -1.4531521
    %v3463 = vadd.f32 %v3453, -1.4531521
    %v3464 = vadd.f32 %v3454, -1.4531521
    %v3465 = vadd.f32 %v3455, -1.4531521
    %v3466 = vmul.f32 %v3436, %v3456
    %v3467 = vmul.f32 %v3437, %v3457
    %v3468 = vmul.f32 %v3438, %v3458
    %v3469 = vmul.f32 %v3439, %v3459
    %v3470 = vmul.f32 %v3440, %v3460
    %v3471 = vmul.f32 %v3441, %v3461
    %v3472 = vmul.f32 %v3442, %v3462
    %v3473 = vmul.f32 %v3443, %v3463
    %v3474 = vmul.f32 %v3444, %v3464
    %v3475 = vmul.f32 %v3445, %v3465
    %v3476 = vadd.f32 %v3466, 1.4214138
    %v3477 = vadd.f32 %v3467, 1.4214138
    %v3478 = vadd.f32 %v3468, 1.4214138
    %v3479 = vadd.f32 %v3469, 1.4214138
    %v3480 = vadd.f32 %v3470, 1.4214138
    %v3481 = vadd.f32 %v3471, 1.4214138
    %v3482 = vadd.f32 %v3472, 1.4214138
    %v3483 = vadd.f32 %v3473, 1.4214138
    %v3484 = vadd.f32 %v3474, 1.4214138
    %v3485 = vadd.f32 %v3475, 1.4214138
    %v3486 = vmul.f32 %v3436, %v3476
    %v3487 = vmul.f32 %v3437, %v3477
    %v3488 = vmul.f32 %v3438, %v3478
    %v3489 = vmul.f32 %v3439, %v3479
    %v3490 = vmul.f32 %v3440, %v3480
    %v3491 = vmul.f32 %v3441, %v3481
    %v3492 = vmul.f32 %v3442, %v3482
    %v3493 = vmul.f32 %v3443, %v3483
    %v3494 = vmul.f32 %v3444, %v3484
    %v3495 = vmul.f32 %v3445, %v3485
    %v3496 = vadd.f32 %v3486, -0.28449672
    %v3497 = vadd.f32 %v3487, -0.28449672
    %v3498 = vadd.f32 %v3488, -0.28449672
    %v3499 = vadd.f32 %v3489, -0.28449672
    %v3500 = vadd.f32 %v3490, -0.28449672
    %v3501 = vadd.f32 %v3491, -0.28449672
    %v3502 = vadd.f32 %v3492, -0.28449672
    %v3503 = vadd.f32 %v3493, -0.28449672
    %v3504 = vadd.f32 %v3494, -0.28449672
    %v3505 = vadd.f32 %v3495, -0.28449672
    %v3506 = vmul.f32 %v3436, %v3496
    %v3507 = vmul.f32 %v3437, %v3497
    %v3508 = vmul.f32 %v3438, %v3498
    %v3509 = vmul.f32 %v3439, %v3499
    %v3510 = vmul.f32 %v3440, %v3500
    %v3511 = vmul.f32 %v3441, %v3501
    %v3512 = vmul.f32 %v3442, %v3502
    %v3513 = vmul.f32 %v3443, %v3503
    %v3514 = vmul.f32 %v3444, %v3504
    %v3515 = vmul.f32 %v3445, %v3505
    %v3516 = vadd.f32 %v3506, 0.2548296
    %v3517 = vadd.f32 %v3507, 0.2548296
    %v3518 = vadd.f32 %v3508, 0.2548296
    %v3519 = vadd.f32 %v3509, 0.2548296
    %v3520 = vadd.f32 %v3510, 0.2548296
    %v3521 = vadd.f32 %v3511, 0.2548296
    %v3522 = vadd.f32 %v3512, 0.2548296
    %v3523 = vadd.f32 %v3513, 0.2548296
    %v3524 = vadd.f32 %v3514, 0.2548296
    %v3525 = vadd.f32 %v3515, 0.2548296
    %v3526 = vmul.f32 %v3436, %v3516
    %v3527 = vmul.f32 %v3437, %v3517
    %v3528 = vmul.f32 %v3438, %v3518
    %v3529 = vmul.f32 %v3439, %v3519
    %v3530 = vmul.f32 %v3440, %v3520
    %v3531 = vmul.f32 %v3441, %v3521
    %v3532 = vmul.f32 %v3442, %v3522
    %v3533 = vmul.f32 %v3443, %v3523
    %v3534 = vmul.f32 %v3444, %v3524
    %v3535 = vmul.f32 %v3445, %v3525
    %v3536 = vsub.f32 0.0, %v3406
    %v3537 = vsub.f32 0.0, %v3407
    %v3538 = vsub.f32 0.0, %v3408
    %v3539 = vsub.f32 0.0, %v3409
    %v3540 = vsub.f32 0.0, %v3410
    %v3541 = vsub.f32 0.0, %v3411
    %v3542 = vsub.f32 0.0, %v3412
    %v3543 = vsub.f32 0.0, %v3413
    %v3544 = vsub.f32 0.0, %v3414
    %v3545 = vsub.f32 0.0, %v3415
    %v3546 = vmul.f32 %v3536, %v3406
    %v3547 = vmul.f32 %v3537, %v3407
    %v3548 = vmul.f32 %v3538, %v3408
    %v3549 = vmul.f32 %v3539, %v3409
    %v3550 = vmul.f32 %v3540, %v3410
    %v3551 = vmul.f32 %v3541, %v3411
    %v3552 = vmul.f32 %v3542, %v3412
    %v3553 = vmul.f32 %v3543, %v3413
    %v3554 = vmul.f32 %v3544, %v3414
    %v3555 = vmul.f32 %v3545, %v3415
    %v3556 = vmul.f32 %v3546, 1.442695
    %v3557 = vpow.pop %v3556
    %v3558 = vmul.f32 %v3547, 1.442695
    %v3559 = vpow.pop %v3558
    %v3560 = vmul.f32 %v3548, 1.442695
    %v3561 = vpow.pop %v3560
    %v3562 = vmul.f32 %v3549, 1.442695
    %v3563 = vpow.pop %v3562
    %v3564 = vmul.f32 %v3550, 1.442695
    %v3565 = vpow.pop %v3564
    %v3566 = vmul.f32 %v3551, 1.442695
    %v3567 = vpow.pop %v3566
    %v3568 = vmul.f32 %v3552, 1.442695
    %v3569 = vpow.pop %v3568
    %v3570 = vmul.f32 %v3553, 1.442695
    %v3571 = vpow.pop %v3570
    %v3572 = vmul.f32 %v3554, 1.442695
    %v3573 = vpow.pop %v3572
    %v3574 = vmul.f32 %v3555, 1.442695
    %v3575 = vpow.pop %v3574
    %v3576 = vmul.f32 %v3526, %v3557
    %v3577 = vmul.f32 %v3527, %v3559
    %v3578 = vmul.f32 %v3528, %v3561
    %v3579 = vmul.f32 %v3529, %v3563
    %v3580 = vmul.f32 %v3530, %v3565
    %v3581 = vmul.f32 %v3531, %v3567
    %v3582 = vmul.f32 %v3532, %v3569
    %v3583 = vmul.f32 %v3533, %v3571
    %v3584 = vmul.f32 %v3534, %v3573
    %v3585 = vmul.f32 %v3535, %v3575
    %v3586 = vsub.f32 1.0, %v3576
    %v3587 = vsub.f32 1.0, %v3577
    %v3588 = vsub.f32 1.0, %v3578
    %v3589 = vsub.f32 1.0, %v3579
    %v3590 = vsub.f32 1.0, %v3580
    %v3591 = vsub.f32 1.0, %v3581
    %v3592 = vsub.f32 1.0, %v3582
    %v3593 = vsub.f32 1.0, %v3583
    %v3594 = vsub.f32 1.0, %v3584
    %v3595 = vsub.f32 1.0, %v3585
    %vm3596 = vcmp.ge.f32.partialorder %v3396, 0.0
    %vm3597 = vcmp.ge.f32.partialorder %v3397, 0.0
    %vm3598 = vcmp.ge.f32.partialorder %v3398, 0.0
    %vm3599 = vcmp.ge.f32.partialorder %v3399, 0.0
    %vm3600 = vcmp.ge.f32.partialorder %v3400, 0.0
    %vm3601 = vcmp.ge.f32.partialorder %v3401, 0.0
    %vm3602 = vcmp.ge.f32.partialorder %v3402, 0.0
    %vm3603 = vcmp.ge.f32.partialorder %v3403, 0.0
    %vm3604 = vcmp.ge.f32.partialorder %v3404, 0.0
    %vm3605 = vcmp.ge.f32.partialorder %v3405, 0.0
    %v3606 = vsub.f32 0.0, %v3586
    %v3607 = vsub.f32 0.0, %v3587
    %v3608 = vsub.f32 0.0, %v3588
    %v3609 = vsub.f32 0.0, %v3589
    %v3610 = vsub.f32 0.0, %v3590
    %v3611 = vsub.f32 0.0, %v3591
    %v3612 = vsub.f32 0.0, %v3592
    %v3613 = vsub.f32 0.0, %v3593
    %v3614 = vsub.f32 0.0, %v3594
    %v3615 = vsub.f32 0.0, %v3595
    %v3616 = vsel %vm3596, %v3586, %v3606
    %v3617 = vsel %vm3597, %v3587, %v3607
    %v3618 = vsel %vm3598, %v3588, %v3608
    %v3619 = vsel %vm3599, %v3589, %v3609
    %v3620 = vsel %vm3600, %v3590, %v3610
    %v3621 = vsel %vm3601, %v3591, %v3611
    %v3622 = vsel %vm3602, %v3592, %v3612
    %v3623 = vsel %vm3603, %v3593, %v3613
    %v3624 = vsel %vm3604, %v3594, %v3614
    %v3625 = vsel %vm3605, %v3595, %v3615
    %v3626 = vmul.f32 %v3370, 0.5
    %v3627 = vmul.f32 %v3372, 0.5
    %v3628 = vmul.f32 %v3374, 0.5
    %v3629 = vmul.f32 %v3376, 0.5
    %v3630 = vmul.f32 %v3380, 0.5
    %v3631 = vmul.f32 %v3382, 0.5
    %v3632 = vmul.f32 %v3384, 0.5
    %v3633 = vmul.f32 %v3386, 0.5
    %v3634 = vmul.f32 %v3390, 0.5
    %v3635 = vmul.f32 %v3392, 0.5
    %v3636 = vadd.f32 %v3616, 1.0
    %v3637 = vadd.f32 %v3617, 1.0
    %v3638 = vadd.f32 %v3618, 1.0
    %v3639 = vadd.f32 %v3619, 1.0
    %v3640 = vadd.f32 %v3620, 1.0
    %v3641 = vadd.f32 %v3621, 1.0
    %v3642 = vadd.f32 %v3622, 1.0
    %v3643 = vadd.f32 %v3623, 1.0
    %v3644 = vadd.f32 %v3624, 1.0
    %v3645 = vadd.f32 %v3625, 1.0
    %v3646 = vmul.f32 %v3626, %v3636
    %v3647 = vmul.f32 %v3627, %v3637
    %v3648 = vmul.f32 %v3628, %v3638
    %v3649 = vmul.f32 %v3629, %v3639
    %v3650 = vmul.f32 %v3630, %v3640
    %v3651 = vmul.f32 %v3631, %v3641
    %v3652 = vmul.f32 %v3632, %v3642
    %v3653 = vmul.f32 %v3633, %v3643
    %v3654 = vmul.f32 %v3634, %v3644
    %v3655 = vmul.f32 %v3635, %v3645
    %v3656 = vpack.c.bf16 %v3648, %v3646
    %v3657 = vpack.c.bf16 %v3649, %v3647
    %v3658 = vpack.c.bf16 %v3652, %v3650
    %v3659 = vpack.c.bf16 %v3653, %v3651
    %v3660 = vpack.c.bf16 %v3654, %v3654
    %v3661 = vpack.c.bf16 %v3655, %v3655
    %s3662 = scalar_lea.vmem %s9, 128
    %v3663 = vld [vmem:[%s3662] sm:$0xf]
    %v3664 = vld [vmem:[%s3662 + $0x4] sm:$0xf]
    %v3665 = vld [vmem:[%s3662 + $0x8] sm:$0xf]
    %v3666 = vld [vmem:[%s3662 + $0xc] sm:$0xf]
    %v3667 = vld [vmem:[%s3662 + $0x10] sm:$0xf]
    %v3668 = vld [vmem:[%s3662 + $0x14] sm:$0xf]
    %v3669 = vld [vmem:[%s3662 + $0x18] sm:$0xf]
    %v3670 = vld [vmem:[%s3662 + $0x1c] sm:$0xf]
    %v3671 = vld [vmem:[%s3662 + $0x20] sm:$0xf]
    %v3672 = vld [vmem:[%s3662 + $0x24] sm:$0xf]
    %v3673 = vld [vmem:[%s3662 + $0x28] sm:$0xf]
    %v3674 = vld [vmem:[%s3662 + $0x2c] sm:$0xf]
    %v3675 = vld [vmem:[%s3662 + $0x30] sm:$0xf]
    %v3676 = vld [vmem:[%s3662 + $0x34] sm:$0xf]
    %v3677 = vld [vmem:[%s3662 + $0x38] sm:$0xf]
    %v3678 = vld [vmem:[%s3662 + $0x3c] sm:$0xf]
    %v3679 = vld [vmem:[%s3662 + $0x40] sm:$0xf]
    %v3680 = vld [vmem:[%s3662 + $0x44] sm:$0xf]
    %v3681 = vld [vmem:[%s3662 + $0x48] sm:$0xf]
    %v3682 = vld [vmem:[%s3662 + $0x4c] sm:$0xf]
    %v3683 = vld [vmem:[%s3662 + $0x50] sm:$0xf]
    %v3684 = vld [vmem:[%s3662 + $0x54] sm:$0xf]
    %v3685 = vld [vmem:[%s3662 + $0x58] sm:$0xf]
    %v3686 = vld [vmem:[%s3662 + $0x5c] sm:$0xf]
    %v3687 = vld [vmem:[%s3662 + $0x60] sm:$0xf]
    %v3688 = vld [vmem:[%s3662 + $0x64] sm:$0xf]
    %v3689 = vld [vmem:[%s3662 + $0x68] sm:$0xf]
    %v3690 = vld [vmem:[%s3662 + $0x6c] sm:$0xf]
    %v3691 = vld [vmem:[%s3662 + $0x70] sm:$0xf]
    %v3692 = vld [vmem:[%s3662 + $0x74] sm:$0xf]
    %v3693 = vld [vmem:[%s3662 + $0x78] sm:$0xf]
    %v3694 = vld [vmem:[%s3662 + $0x7c] sm:$0xf]
    %v3695 = vlaneseq
    %v3696 = vshrl.u32 %v3695, 7
    %v3697 = vsub.s32 5, %v3696
    %v3698 = vrot.slane %v2128, %v3697
    %v3731 = vunpack.c.l.b16 %v3663
    %v3732 = vunpack.c.l.b16 %v3664
    %v3733 = vunpack.c.l.b16 %v3665
    %v3734 = vunpack.c.l.b16 %v3666
    %v3735 = vunpack.c.l.b16 %v3667
    %v3736 = vunpack.c.l.b16 %v3668
    %v3737 = vunpack.c.l.b16 %v3669
    %v3738 = vunpack.c.l.b16 %v3670
    %v3739 = vunpack.c.l.b16 %v3671
    %v3740 = vunpack.c.l.b16 %v3672
    %v3741 = vunpack.c.l.b16 %v3673
    %v3742 = vunpack.c.l.b16 %v3674
    %v3743 = vunpack.c.l.b16 %v3675
    %v3744 = vunpack.c.l.b16 %v3676
    %v3745 = vunpack.c.l.b16 %v3677
    %v3746 = vunpack.c.l.b16 %v3678
    %v3747 = vunpack.c.l.b16 %v3679
    %v3748 = vunpack.c.l.b16 %v3680
    %v3749 = vunpack.c.l.b16 %v3681
    %v3750 = vunpack.c.l.b16 %v3682
    %v3751 = vunpack.c.l.b16 %v3683
    %v3752 = vunpack.c.l.b16 %v3684
    %v3753 = vunpack.c.l.b16 %v3685
    %v3754 = vunpack.c.l.b16 %v3686
    %v3755 = vunpack.c.l.b16 %v3687
    %v3756 = vunpack.c.l.b16 %v3688
    %v3757 = vunpack.c.l.b16 %v3689
    %v3758 = vunpack.c.l.b16 %v3690
    %v3759 = vunpack.c.l.b16 %v3691
    %v3760 = vunpack.c.l.b16 %v3692
    %v3761 = vunpack.c.l.b16 %v3693
    %v3762 = vunpack.c.l.b16 %v3694
    %v3763 = vpack.c.b16 %v3732, %v3731
    %v3764 = vpack.c.b16 %v3734, %v3733
    %v3765 = vpack.c.b16 %v3736, %v3735
    %v3766 = vpack.c.b16 %v3738, %v3737
    %v3767 = vpack.c.b16 %v3740, %v3739
    %v3768 = vpack.c.b16 %v3742, %v3741
    %v3769 = vpack.c.b16 %v3744, %v3743
    %v3770 = vpack.c.b16 %v3746, %v3745
    %v3771 = vpack.c.b16 %v3748, %v3747
    %v3772 = vpack.c.b16 %v3750, %v3749
    %v3773 = vpack.c.b16 %v3752, %v3751
    %v3774 = vpack.c.b16 %v3754, %v3753
    %v3775 = vpack.c.b16 %v3756, %v3755
    %v3776 = vpack.c.b16 %v3758, %v3757
    %v3777 = vpack.c.b16 %v3760, %v3759
    %v3778 = vpack.c.b16 %v3762, %v3761
    %3795 = vmatprep.subr.bf16.mxu0 0
    %3796 = vmatpush1.bf16.msra.mxu0 %v3763
    %3797 = vmatprep.subr.bf16.mxu0 0
    %3798 = vmatpush1.bf16.msra.mxu0 %v3764
    %3799 = vmatprep.subr.bf16.mxu0 0
    %3800 = vmatpush1.bf16.msra.mxu0 %v3765
    %3801 = vmatprep.subr.bf16.mxu0 0
    %3802 = vmatpush1.bf16.msra.mxu0 %v3766
    %3803 = vmatprep.subr.bf16.mxu0 0
    %3804 = vmatpush1.bf16.msra.mxu0 %v3767
    %3805 = vmatprep.subr.bf16.mxu0 0
    %3806 = vmatpush1.bf16.msra.mxu0 %v3768
    %3807 = vmatprep.subr.bf16.mxu0 0
    %3808 = vmatpush1.bf16.msra.mxu0 %v3769
    %3809 = vmatprep.subr.bf16.mxu0 0
    %3810 = vmatpush1.bf16.msra.mxu0 %v3770
    %3811 = vmatprep.subr.bf16.mxu0 0
    %3812 = vmatpush1.bf16.msra.mxu0 %v3771
    %3813 = vmatprep.subr.bf16.mxu0 0
    %3814 = vmatpush1.bf16.msra.mxu0 %v3772
    %3815 = vmatprep.subr.bf16.mxu0 0
    %3816 = vmatpush1.bf16.msra.mxu0 %v3773
    %3817 = vmatprep.subr.bf16.mxu0 0
    %3818 = vmatpush1.bf16.msra.mxu0 %v3774
    %3819 = vmatprep.subr.bf16.mxu0 0
    %3820 = vmatpush1.bf16.msra.mxu0 %v3775
    %3821 = vmatprep.subr.bf16.mxu0 0
    %3822 = vmatpush1.bf16.msra.mxu0 %v3776
    %3823 = vmatprep.subr.bf16.mxu0 0
    %3824 = vmatpush1.bf16.msra.mxu0 %v3777
    %3825 = vmatprep.subr.bf16.mxu0 0
    %3826 = vmatpush1.bf16.msra.mxu0 %v3778
    %3827 = vmatprep.mubr.bf16.mxu0 %v3657
    %3828 = vmatmul.mubr.bf16.gmra.mrb[0].mxu0 %v3656
    %v3829 = vpop.f32.mrb[0].mxu0
    %v3830 = vadd.f32 %v3698, %v3829
    %v3831 = vpop.f32.mrb[0].mxu0
    %v3832 = vpop.f32.mrb[0].mxu0
    %v3833 = vadd.f32 %v3698, %v3832
    %v3834 = vpop.f32.mrb[0].mxu0
    %3835 = vmatprep.mubr.bf16.mxu0 %v3659
    %3836 = vmatmul.mubr.bf16.gmra.mrb[0].mxu0 %v3658
    %v3837 = vpop.f32.mrb[0].mxu0
    %v3838 = vadd.f32 %v3698, %v3837
    %v3839 = vpop.f32.mrb[0].mxu0
    %v3840 = vpop.f32.mrb[0].mxu0
    %v3841 = vadd.f32 %v3698, %v3840
    %v3842 = vpop.f32.mrb[0].mxu0
    %3843 = vmatprep.mubr.bf16.mxu0 %v3661
    %3844 = vmatmul.mubr.bf16.gmra.mrb[0].mxu0 %v3660
    %v3845 = vpop.f32.mrb[0].mxu0
    %v3846 = vadd.f32 %v3698, %v3845
    %v3847 = vpop.f32.mrb[0].mxu0
    %v3848 = vpop.f32.mrb[0].mxu0
    %v3849 = vpop.f32.mrb[0].mxu0
    %3850 = vdwg.mxu0
    %v3851 = vadd.f32 %v3173, %v3830
    %v3852 = vadd.f32 %v3174, %v3833
    %v3853 = vadd.f32 %v3175, %v3838
    %v3854 = vadd.f32 %v3176, %v3841
    %v3855 = vadd.f32 %v3177, %v3846
    %v3856 = vld [vmem:[%s14] sm:$0x3]
    %v3858 = vsel %vm565, %v3856, 0
    %vm3860 = vcmask 1041408
    %v3862 = vsel %vm3860, %v3855, 0
    %3864 = vmatprep.subr.mxu0 0.0
    %3865 = vmatpush1.msra.mxu0 %v3851
    %3866 = vmatprep.subr.mxu0 0.0
    %3867 = vmatpush1.msra.mxu0 %v3852
    %3868 = vmatprep.subr.mxu0 0.0
    %3869 = vmatpush1.msra.mxu0 %v3853
    %3870 = vmatprep.subr.mxu0 0.0
    %3871 = vmatpush1.msra.mxu0 %v3854
    %3872 = vmatprep.subr.mxu0 0.0
    %3873 = vmatpush1.msra.mxu0 %v3862
    %3874 = vmatprep.subr.mxu0 0.0
    %3875 = vmatpush1.msra.mxu0 0.0
    %3876 = vmatprep.subr.mxu0 0.0
    %3877 = vmatpush1.msra.mxu0 0.0
    %3878 = vmatprep.subr.mxu0 0.0
    %3879 = vmatpush1.msra.mxu0 0.0
    %3880 = vmatprep.subr.mxu0 0.0
    %3881 = vmatpush1.msra.mxu0 0.0
    %3882 = vmatprep.subr.mxu0 0.0
    %3883 = vmatpush1.msra.mxu0 0.0
    %3884 = vmatprep.subr.mxu0 0.0
    %3885 = vmatpush1.msra.mxu0 0.0
    %3886 = vmatprep.subr.mxu0 0.0
    %3887 = vmatpush1.msra.mxu0 0.0
    %3888 = vmatprep.subr.mxu0 0.0
    %3889 = vmatpush1.msra.mxu0 0.0
    %3890 = vmatprep.subr.mxu0 0.0
    %3891 = vmatpush1.msra.mxu0 0.0
    %3892 = vmatprep.subr.mxu0 0.0
    %3893 = vmatpush1.msra.mxu0 0.0
    %3894 = vmatprep.subr.mxu0 0.0
    %3895 = vmatpush1.msra.mxu0 0.0
    %3896 = vmatprep.subr.mxu0 0.0
    %3897 = vmatpush1.msra.mxu0 0.0
    %3898 = vmatprep.subr.mxu0 0.0
    %3899 = vmatpush1.msra.mxu0 0.0
    %3900 = vmatprep.subr.mxu0 0.0
    %3901 = vmatpush1.msra.mxu0 0.0
    %3902 = vmatprep.subr.mxu0 0.0
    %3903 = vmatpush1.msra.mxu0 0.0
    %3904 = vmatprep.subr.mxu0 0.0
    %3905 = vmatpush1.msra.mxu0 0.0
    %3906 = vmatprep.subr.mxu0 0.0
    %3907 = vmatpush1.msra.mxu0 0.0
    %3908 = vmatprep.subr.mxu0 0.0
    %3909 = vmatpush1.msra.mxu0 0.0
    %3910 = vmatprep.subr.mxu0 0.0
    %3911 = vmatpush1.msra.mxu0 0.0
    %3912 = vmatprep.subr.mxu0 0.0
    %3913 = vmatpush1.msra.mxu0 0.0
    %3914 = vmatprep.subr.mxu0 0.0
    %3915 = vmatpush1.msra.mxu0 0.0
    %3916 = vmatprep.subr.mxu0 0.0
    %3917 = vmatpush1.msra.mxu0 0.0
    %3918 = vmatprep.subr.mxu0 0.0
    %3919 = vmatpush1.msra.mxu0 0.0
    %3920 = vmatprep.subr.mxu0 0.0
    %3921 = vmatpush1.msra.mxu0 0.0
    %3922 = vmatprep.subr.mxu0 0.0
    %3923 = vmatpush1.msra.mxu0 0.0
    %3924 = vmatprep.subr.mxu0 0.0
    %3925 = vmatpush1.msra.mxu0 0.0
    %3926 = vmatprep.subr.mxu0 0.0
    %3927 = vmatpush1.msra.mxu0 0.0
    %3928 = vmatprep.mubr.f32.mxu0 0.0
    %3929 = vmatmul.mubr.f32.gmra.mrb[0].mxu0 %v3858
    %v3930 = vpop.f32.mrb[0].mxu0
    %v3931 = vadd.f32 0.0, %v3930
    %v3932 = vpop.f32.mrb[0].mxu0
    %3933 = vdwg.mxu0
    %v3934 = vsel %vm310, %v3931, 0.0
    %3935 = vadd.xlane.f32.xlu0 %v3934
    %v3936 = vpop.xlane.xlu0 %3935
    %v3937 = vmul.f32 %v3936, %v314
    %v3938 = vsub.f32 %v3931, %v3937
    %v3939 = vmul.f32 %v3938, %v3938
    %v3940 = vsel %vm310, %v3939, 0.0
    %3941 = vadd.xlane.f32.xlu0 %v3940
    %v3942 = vpop.xlane.xlu0 %3941
    %v3943 = vmul.f32 %v3942, %v314
    %v3944 = vadd.f32 %v3943, 1e-06
    %v3945 = vrsqrt.pop %v3944
    %v3946 = vmul.f32 %v3938, %v3945
    %v3947 = vlaneseq
    %v3948 = vshrl.u32 %v3947, 7
    %v3949 = vsub.s32 0, %v3948
    %v3950 = vrot.slane %v100, %v3949
    %v3951 = vmul.f32 %v3946, %v3950
    %v3952 = vlaneseq
    %v3953 = vshrl.u32 %v3952, 7
    %v3954 = vsub.s32 1, %v3953
    %v3955 = vrot.slane %v100, %v3954
    %v3956 = vadd.f32 %v3951, %v3955
    %v3957 = vld [vmem:[%s16] sm:$0xff]
    %v3958 = vld [vmem:[%s16 + $0x8] sm:$0xff]
    %v3959 = vld [vmem:[%s16 + $0x10] sm:$0xff]
    %v3960 = vld [vmem:[%s16 + $0x18] sm:$0xff]
    %v3961 = vld [vmem:[%s16 + $0x20] sm:$0xff]
    %v3962 = vld [vmem:[%s16 + $0x28] sm:$0xff]
    %v3963 = vld [vmem:[%s16 + $0x30] sm:$0xff]
    %v3964 = vld [vmem:[%s16 + $0x38] sm:$0xff]
    %v3965 = vld [vmem:[%s17] sm:$0x1]
    %v3967 = vlaneseq
    %v3968 = vshrl.u32 %v3967, 7
    %v3969 = vsub.s32 0, %v3968
    %v3970 = vrot.slane %v3965, %v3969
    %v3973 = vsel %vm231, %v3956, 0
    %3975 = vmatprep.subr.mxu0 0.0
    %3976 = vmatpush1.msra.mxu0 %v3957
    %3977 = vmatprep.subr.mxu0 0.0
    %3978 = vmatpush1.msra.mxu0 %v3958
    %3979 = vmatprep.subr.mxu0 0.0
    %3980 = vmatpush1.msra.mxu0 %v3959
    %3981 = vmatprep.subr.mxu0 0.0
    %3982 = vmatpush1.msra.mxu0 %v3960
    %3983 = vmatprep.subr.mxu0 0.0
    %3984 = vmatpush1.msra.mxu0 %v3961
    %3985 = vmatprep.subr.mxu0 0.0
    %3986 = vmatpush1.msra.mxu0 %v3962
    %3987 = vmatprep.subr.mxu0 0.0
    %3988 = vmatpush1.msra.mxu0 %v3963
    %3989 = vmatprep.subr.mxu0 0.0
    %3990 = vmatpush1.msra.mxu0 %v3964
    %3991 = vmatprep.subr.mxu0 0.0
    %3992 = vmatpush1.msra.mxu0 0.0
    %3993 = vmatprep.subr.mxu0 0.0
    %3994 = vmatpush1.msra.mxu0 0.0
    %3995 = vmatprep.subr.mxu0 0.0
    %3996 = vmatpush1.msra.mxu0 0.0
    %3997 = vmatprep.subr.mxu0 0.0
    %3998 = vmatpush1.msra.mxu0 0.0
    %3999 = vmatprep.subr.mxu0 0.0
    %4000 = vmatpush1.msra.mxu0 0.0
    %4001 = vmatprep.subr.mxu0 0.0
    %4002 = vmatpush1.msra.mxu0 0.0
    %4003 = vmatprep.subr.mxu0 0.0
    %4004 = vmatpush1.msra.mxu0 0.0
    %4005 = vmatprep.subr.mxu0 0.0
    %4006 = vmatpush1.msra.mxu0 0.0
    %4007 = vmatprep.subr.mxu0 0.0
    %4008 = vmatpush1.msra.mxu0 0.0
    %4009 = vmatprep.subr.mxu0 0.0
    %4010 = vmatpush1.msra.mxu0 0.0
    %4011 = vmatprep.subr.mxu0 0.0
    %4012 = vmatpush1.msra.mxu0 0.0
    %4013 = vmatprep.subr.mxu0 0.0
    %4014 = vmatpush1.msra.mxu0 0.0
    %4015 = vmatprep.subr.mxu0 0.0
    %4016 = vmatpush1.msra.mxu0 0.0
    %4017 = vmatprep.subr.mxu0 0.0
    %4018 = vmatpush1.msra.mxu0 0.0
    %4019 = vmatprep.subr.mxu0 0.0
    %4020 = vmatpush1.msra.mxu0 0.0
    %4021 = vmatprep.subr.mxu0 0.0
    %4022 = vmatpush1.msra.mxu0 0.0
    %4023 = vmatprep.subr.mxu0 0.0
    %4024 = vmatpush1.msra.mxu0 0.0
    %4025 = vmatprep.subr.mxu0 0.0
    %4026 = vmatpush1.msra.mxu0 0.0
    %4027 = vmatprep.subr.mxu0 0.0
    %4028 = vmatpush1.msra.mxu0 0.0
    %4029 = vmatprep.subr.mxu0 0.0
    %4030 = vmatpush1.msra.mxu0 0.0
    %4031 = vmatprep.subr.mxu0 0.0
    %4032 = vmatpush1.msra.mxu0 0.0
    %4033 = vmatprep.subr.mxu0 0.0
    %4034 = vmatpush1.msra.mxu0 0.0
    %4035 = vmatprep.subr.mxu0 0.0
    %4036 = vmatpush1.msra.mxu0 0.0
    %4037 = vmatprep.subr.mxu0 0.0
    %4038 = vmatpush1.msra.mxu0 0.0
    %4039 = vmatprep.mubr.f32.mxu0 0.0
    %4040 = vmatmul.mubr.f32.gmra.mrb[0].mxu0 %v3973
    %v4041 = vpop.f32.mrb[0].mxu0
    %v4042 = vadd.f32 %v3970, %v4041
    %v4043 = vpop.f32.mrb[0].mxu0
    %4044 = vdwg.mxu0
    %4045 = vst [vmem:[#allocation2] sm:$0x3] %v4042
    // Predicated region
    $region74: #{beit_forward.1} parent=1 // pred_check
      _
    $region75: #{beit_forward.1} parent=1 // pred_check_branch
      %4047 = sbr.rel (0) target = $region77
    $region76: #{beit_forward.1} parent=1 // pred_region
      %s4049 = ssub.s32 32, 32
      %4050 = vsyncadd [#allocation3], %s4049
      %s4052 = sshll.u32 [#allocation2], 4
      %s4053 = int_to_ptr.vmem [resolvable:$true] %s4052
      %4055 = dma.vmem_to_hbm [thread:$0]  %s4053, 32, %s18, [#allocation3]
    $region77: #{beit_forward.1} parent=1 // pred_fallthru
      _
    // Predicated region
    $region78: #{beit_forward.1} parent=1 // pred_check
      _
    $region79: #{beit_forward.1} parent=1 // pred_check_branch
      %4057 = sbr.rel (0) target = $region81
    $region80: #{beit_forward.1} parent=1 // pred_region
      %4058 = dma.done [#allocation3], 32
    $region81: #{beit_forward.1} parent=1 // pred_fallthru
      _
    %4059 = vsyncpa [#allocation3], 1

</llo_original>
